<compile_context>
chip_gen: v7x
topology: tpu7x:2x2x1
jax: 0.10.0
libtpu: 0.0.40
codegen_flags: <defaults>
</compile_context>

<pallas_src>
import functools

import jax
import jax.numpy as jnp
import numpy as np
from jax import lax
from jax.experimental import pallas as pl
from jax.experimental.pallas import tpu as pltpu

_BN_EPS = 1e-5


def _round_up(x, m):
    return ((x + m - 1) // m) * m


# ------------------------------ parameters --------------------------------- #
def make_params(key, input_channel, output_channel, num_class):
    """PyTorch-equivalent init of VGGFeatureExtractor + CTC Linear head."""
    oc = [output_channel // 8, output_channel // 4, output_channel // 2, output_channel]
    #            cin           cout   k  pad  kind    pool-after
    conv_defs = [
        (input_channel, oc[0], 3, 1, "bias", (2, 2)),
        (oc[0],         oc[1], 3, 1, "bias", (2, 2)),
        (oc[1],         oc[2], 3, 1, "bias", None),
        (oc[2],         oc[2], 3, 1, "bias", (2, 1)),
        (oc[2],         oc[3], 3, 1, "bn",   None),
        (oc[3],         oc[3], 3, 1, "bn",   (2, 1)),
        (oc[3],         oc[3], 2, 0, "bias", None),
    ]
    layers = []
    for (cin, cout, k, pad, kind, pool) in conv_defs:
        key, k_w, k_b = jax.random.split(key, 3)
        fan_in = cin * k * k
        bound = 1.0 / np.sqrt(fan_in)
        layer = dict(kind=kind, k=k, pad=pad, cin=cin, cout=cout, pool=pool,
                     w=jax.random.uniform(k_w, (cout, cin, k, k), jnp.float32,
                                          -bound, bound))
        if kind == "bias":
            layer["b"] = jax.random.uniform(k_b, (1, cout), jnp.float32, -bound, bound)
        else:  # conv(bias=False) + BatchNorm2d (PyTorch default init: gamma=1, beta=0)
            layer["gamma"] = jnp.ones((1, cout), jnp.float32)
            layer["beta"] = jnp.zeros((1, cout), jnp.float32)
        layers.append(layer)
    key, k1, k2 = jax.random.split(key, 3)
    bound = 1.0 / np.sqrt(output_channel)
    w_pred = jax.random.uniform(k1, (output_channel, num_class), jnp.float32, -bound, bound)
    b_pred = jax.random.uniform(k2, (1, num_class), jnp.float32, -bound, bound)
    return layers, w_pred, b_pred


def _plan_geometry(layers, imgH, imgW):
    """Static per-layer geometry (input/output H, W before and after pooling)."""
    h, w = imgH, imgW
    plan = []
    for L in layers:
        k, pad = L["k"], L["pad"]
        ho, wo = h + 2 * pad - k + 1, w + 2 * pad - k + 1
        plan.append(dict(kind=L["kind"], k=k, pad=pad, cin=L["cin"], cout=L["cout"],
                         hin=h, win=w, hout=ho, wout=wo, pool=L["pool"]))
        h, w = ho, wo
        if L["pool"] is not None:
            ph, pw = L["pool"]
            assert h % ph == 0 and w % pw == 0, (h, w, L["pool"])
            h, w = h // ph, w // pw
    return plan, h, w


# ---------------------- host-side weight preparation ------------------------ #
def _banded_taps(w_oihw, win, wout, pad, dtype):
    """(Cout,Cin,kh,kw) -> (kh, win*Cin, wout*Cout) dx-folded banded slabs.

    Output column group j gathers input column groups j+dx-pad for dx in [0,kw);
    horizontal zero padding is folded in by omitting out-of-range taps, so the
    kernel only needs a vertically padded activation buffer and one un-shifted,
    full-width dot per vertical tap dy.
    """
    w_np = np.asarray(w_oihw, np.float32)
    cout, cin, kh, kw = w_np.shape
    taps = np.zeros((kh, win * cin, wout * cout), np.float32)
    for dy in range(kh):
        for dx in range(kw):
            blk = w_np[:, :, dy, dx].T                        # (cin, cout)
            for j in range(wout):
                src = j + dx - pad
                if 0 <= src < win:
                    taps[dy, src * cin:(src + 1) * cin, j * cout:(j + 1) * cout] = blk
    return jnp.asarray(taps, dtype)


def _row_pool_mats(rows):
    """0/1 left-multiplication matrices selecting even / odd rows (rows//2, rows)."""
    me = np.zeros((rows // 2, rows), np.float32)
    mo = np.zeros((rows // 2, rows), np.float32)
    for i in range(rows // 2):
        me[i, 2 * i] = 1.0
        mo[i, 2 * i + 1] = 1.0
    return jnp.asarray(me), jnp.asarray(mo)


def _col_pool_mats(wo, cout):
    """0/1 right-mult matrices selecting even / odd width groups of `cout` lanes."""
    s_e = np.zeros((wo, wo // 2), np.float32)
    s_o = np.zeros((wo, wo // 2), np.float32)
    for j in range(wo // 2):
        s_e[2 * j, j] = 1.0
        s_o[2 * j + 1, j] = 1.0
    eye = np.eye(cout, dtype=np.float32)
    return jnp.asarray(np.kron(s_e, eye)), jnp.asarray(np.kron(s_o, eye))


def _prepare_kernel_inputs(layers, plan, w_pred, b_pred, batch, wf, hf, out_pad):
    """Host-side (once): dx-folded bf16 conv weights, biases/BN params, pool
    selection matrices, and the 128-lane-padded CTC head."""
    flat = []
    for L, P in zip(layers, plan):
        flat.append(_banded_taps(L["w"], P["win"], P["wout"], P["pad"], jnp.bfloat16))
        if L["kind"] == "bias":
            flat.append(jnp.tile(L["b"], (1, P["wout"])))            # (1, wout*cout)
        else:
            flat.append(L["gamma"])                                  # (1, cout)
            flat.append(L["beta"])                                   # (1, cout)
        if P["pool"] is not None:
            ph, pw = P["pool"]
            if ph == 2:
                flat.extend(_row_pool_mats(batch * P["hout"]))
            if pw == 2:
                flat.extend(_col_pool_mats(P["wout"], P["cout"]))
    if hf > 1:
        avg = np.zeros((batch, batch * hf), np.float32)
        for b in range(batch):
            avg[b, b * hf:(b + 1) * hf] = 1.0 / hf
        flat.append(jnp.asarray(avg))
    out_ch, num_class = w_pred.shape
    wp = np.kron(np.eye(wf, dtype=np.float32), np.asarray(w_pred, np.float32))
    bp = np.tile(np.asarray(b_pred, np.float32), (1, wf))
    wp_pad = np.zeros((wf * out_ch, out_pad), np.float32)
    wp_pad[:, :wf * num_class] = wp
    bp_pad = np.zeros((1, out_pad), np.float32)
    bp_pad[:, :wf * num_class] = bp
    flat.append(jnp.asarray(wp_pad))
    flat.append(jnp.asarray(bp_pad))
    return flat


# ------------------------------ fused kernel -------------------------------- #
def _sera_q_fused_kernel(*refs, plan, batch, hf, eps):
    x_ref = refs[0]
    out_ref, pad_ref = refs[-2], refs[-1]
    params = refs[1:-2]

    # One-time scrub of the staging scratch (keeps never-valid rows finite; the
    # rows/columns that matter are always overwritten per layer).
    pad_ref[...] = jnp.zeros(pad_ref.shape, pad_ref.dtype)

    idx = 0
    act = x_ref[...]                       # (B*H0, W0*C0) f32, batch stacked on sublanes
    for P in plan:
        k, pad = P["k"], P["pad"]
        cin, cout = P["cin"], P["cout"]
        h, w, ho, wo = P["hin"], P["win"], P["hout"], P["wout"]
        hp = h + 2 * pad                   # per-image vertically padded height
        hp8 = _round_up(hp, 8)             # image-block stride (sublane-aligned slices)
        wc_in, wc_out = w * cin, wo * cout
        w_ref = params[idx]; idx += 1

        # -- stage into the vertically-padded-only scratch; zero ONLY the border --
        # TODO(synk): switch to a bf16 staging scratch with 16-row-aligned blocks
        #             at production shapes (halves staging store bytes).
        if pad > 0:
            zr = jnp.zeros((pad, wc_in), jnp.float32)
        for b in range(batch):
            base = b * hp8
            if pad > 0:
                pad_ref[base:base + pad, :wc_in] = zr
                pad_ref[base + pad + h:base + hp, :wc_in] = zr
            pad_ref[base + pad:base + pad + h, :wc_in] = act[b * h:(b + 1) * h, :]

        # -- conv: k un-shifted, full-width, whole-batch bf16 MXU dots ------------
        #    (horizontal taps + horizontal zero padding folded into banded weights)
        nrows = (batch - 1) * hp8 + ho
        acc = jnp.dot(pad_ref[0:nrows, :wc_in].astype(jnp.bfloat16), w_ref[0],
                      preferred_element_type=jnp.float32)
        for dy in range(1, k):
            acc = acc + jnp.dot(pad_ref[dy:dy + nrows, :wc_in].astype(jnp.bfloat16),
                                w_ref[dy], preferred_element_type=jnp.float32)
        # keep only each image's valid output rows (drop inter-image junk rows)
        if batch == 1:
            y = acc
        else:
            y = jnp.concatenate(
                [acc[b * hp8:b * hp8 + ho, :] for b in range(batch)], axis=0)

        # -- fused epilogue: bias+ReLU or train-mode BatchNorm+ReLU (f32 stats) ---
        if P["kind"] == "bias":
            b_ref = params[idx]; idx += 1
            y = jnp.maximum(y + b_ref[...], 0.0)
        else:
            g_ref, be_ref = params[idx], params[idx + 1]; idx += 2
            n = float(batch * ho * wo)
            colsum = jnp.sum(y, axis=0, keepdims=True)               # (1, wo*cout)
            colsq = jnp.sum(y * y, axis=0, keepdims=True)
            s = colsum[:, 0:cout]
            ss = colsq[:, 0:cout]
            for j in range(1, wo):                                   # fold lane groups
                s = s + colsum[:, j * cout:(j + 1) * cout]
                ss = ss + colsq[:, j * cout:(j + 1) * cout]
            mu = s / n
            var = jnp.maximum(ss / n - mu * mu, 0.0)                 # cancellation guard
            scale = g_ref[...] * lax.rsqrt(var + eps)
            shift = be_ref[...] - mu * scale
            scale_t = jnp.concatenate([scale] * wo, axis=1)
            shift_t = jnp.concatenate([shift] * wo, axis=1)
            y = jnp.maximum(y * scale_t + shift_t, 0.0)

        # -- fused MaxPool2d via 0/1 selection matmuls (MXU has plenty of slack) --
        if P["pool"] is not None:
            ph, pw = P["pool"]
            if ph == 2:
                re_ref, ro_ref = params[idx], params[idx + 1]; idx += 2
                y = jnp.maximum(
                    jnp.dot(re_ref[...], y, preferred_element_type=jnp.float32),
                    jnp.dot(ro_ref[...], y, preferred_element_type=jnp.float32))
            if pw == 2:
                ce_ref, co_ref = params[idx], params[idx + 1]; idx += 2
                y = jnp.maximum(
                    jnp.dot(y, ce_ref[...], preferred_element_type=jnp.float32),
                    jnp.dot(y, co_ref[...], preferred_element_type=jnp.float32))
        act = y

    # -- AdaptiveAvgPool2d((None,1)) == per-image mean over H, then CTC head ------
    if hf > 1:
        avg_ref = params[idx]; idx += 1
        act = jnp.dot(avg_ref[...], act, preferred_element_type=jnp.float32)
    wp_ref, bp_ref = params[idx], params[idx + 1]
    logits = jnp.dot(act, wp_ref[...], preferred_element_type=jnp.float32) + bp_ref[...]
    out_ref[...] = logits                  # one lane-dense (128-padded) store


def build_sera_q_forward(layers, w_pred, b_pred, batch, imgH, imgW, num_class):
    plan, hf, wf = _plan_geometry(layers, imgH, imgW)
    out_pad = _round_up(wf * num_class, 128)
    flat_params = _prepare_kernel_inputs(layers, plan, w_pred, b_pred,
                                         batch, wf, hf, out_pad)

    # staging scratch: vertically padded, batch-stacked image blocks
    pad_rows = max((batch - 1) * _round_up(p["hin"] + 2 * p["pad"], 8)
                   + p["hin"] + 2 * p["pad"] for p in plan)
    pad_rows = _round_up(pad_rows, 8)
    pad_cols = _round_up(max(p["win"] * p["cin"] for p in plan), 128)

    kernel = functools.partial(_sera_q_fused_kernel, plan=plan, batch=batch,
                               hf=hf, eps=_BN_EPS)
    n_in = 1 + len(flat_params)
    vmem = pltpu.MemorySpace.VMEM
    fused = pl.pallas_call(
        kernel,
        out_shape=jax.ShapeDtypeStruct((batch, out_pad), jnp.float32),
        in_specs=[pl.BlockSpec(memory_space=vmem)] * n_in,
        out_specs=pl.BlockSpec(memory_space=vmem),
        scratch_shapes=[pltpu.VMEM((pad_rows, pad_cols), jnp.float32)],
    )

    T = wf

    @jax.jit
    def _forward_jit(x_nhwc):
        b, h, w, c = x_nhwc.shape
        x2d = x_nhwc.reshape(b * h, w * c)   # batch stacked on rows, channels fastest
        out = fused(x2d, *flat_params)
        return out[:, :T * num_class].reshape(b, T, num_class)

    def forward(inputs_nhwc, text=None, is_train=True):
        # `text` / `is_train` do not affect the CTC prediction head.
        del text, is_train
        return _forward_jit(inputs_nhwc)

    return forward


# ------------------------- pure-JAX reference ------------------------------- #
def _im2col(x, kh, kw, ph, pw):
    B, H, W, C = x.shape
    xp = jnp.pad(x, ((0, 0), (ph, ph), (pw, pw), (0, 0)))
    Ho = H + 2 * ph - kh + 1
    Wo = W + 2 * pw - kw + 1
    cols = [xp[:, dy:dy + Ho, dx:dx + Wo, :] for dy in range(kh) for dx in range(kw)]
    patches = jnp.concatenate(cols, axis=-1)
    return patches.reshape(B, Ho * Wo, kh * kw * C), Ho, Wo


def reference_forward(layers, w_pred, b_pred, x_nhwc, eps=_BN_EPS):
    """Pure-JAX/XLA reference of the same forward (mirrors the bf16 GEMM inputs)."""
    x = x_nhwc
    for L in layers:
        k, pad, cin, cout = L["k"], L["pad"], L["cin"], L["cout"]
        B = x.shape[0]
        patches, Ho, Wo = _im2col(x, k, k, pad, pad)
        w_gemm = jnp.transpose(L["w"], (2, 3, 1, 0)).reshape(k * k * cin, cout)
        y = jnp.einsum("bmk,kn->bmn",
                       patches.astype(jnp.bfloat16), w_gemm.astype(jnp.bfloat16),
                       preferred_element_type=jnp.float32)
        if L["kind"] == "bias":
            y = jnp.maximum(y + L["b"][None], 0.0)
        else:
            yf = y.reshape(B * Ho * Wo, cout)
            mu = yf.mean(0, keepdims=True)
            var = ((yf - mu) ** 2).mean(0, keepdims=True)
            yf = jnp.maximum(L["gamma"] * (yf - mu) / jnp.sqrt(var + eps) + L["beta"], 0.0)
            y = yf.reshape(B, Ho * Wo, cout)
        x = y.reshape(B, Ho, Wo, cout)
        if L["pool"] is not None:
            ph, pw = L["pool"]
            x = lax.reduce_window(x, -jnp.inf, lax.max,
                                  (1, ph, pw, 1), (1, ph, pw, 1), "VALID")
    vf = x.mean(axis=1)                                            # (B, Wf, C)
    return jnp.einsum("bwc,cn->bwn", vf, w_pred) + b_pred[None]


if __name__ == "__main__":
    # opt: Transformation='None', FeatureExtraction='VGG', SequenceModeling='None',
    #      Prediction='CTC', input_channel=1, output_channel=32, num_class=12
    B, input_channel, imgH, imgW = 2, 1, 32, 16
    output_channel, num_class = 32, 12

    kx, _ = jax.random.split(jax.random.PRNGKey(0))
    x_nchw = jax.random.normal(kx, (B, input_channel, imgH, imgW), jnp.float32)
    x_nhwc = jnp.transpose(x_nchw, (0, 2, 3, 1))
    text = jnp.zeros((B, 8), jnp.int32)          # unused by the CTC head

    layers, w_pred, b_pred = make_params(jax.random.PRNGKey(42),
                                         input_channel, output_channel, num_class)

    forward = build_sera_q_forward(layers, w_pred, b_pred, B, imgH, imgW, num_class)
    pred = jax.block_until_ready(forward(x_nhwc, text, is_train=True))

    expected_T = imgW // 4 - 1                   # VGG width reduction: /2, /2, 2x2-valid conv
    assert pred.shape == (B, expected_T, num_class), pred.shape

    ref = reference_forward(layers, w_pred, b_pred, x_nhwc)
    np.testing.assert_allclose(np.asarray(pred), np.asarray(ref), rtol=2e-2, atol=2e-2)

    print("KERNEL_OK")
</pallas_src>

<mosaic_0001>
module attributes {stable_mosaic.version = 11 : i64} {
  func.func @_sera_q_fused_kernel(%arg0: memref<64x16xf32, #tpu.memory_space<vmem>>, %arg1: memref<3x16x64xbf16, #tpu.memory_space<vmem>>, %arg2: memref<1x64xf32, #tpu.memory_space<vmem>>, %arg3: memref<32x64xf32, #tpu.memory_space<vmem>>, %arg4: memref<32x64xf32, #tpu.memory_space<vmem>>, %arg5: memref<64x32xf32, #tpu.memory_space<vmem>>, %arg6: memref<64x32xf32, #tpu.memory_space<vmem>>, %arg7: memref<3x32x64xbf16, #tpu.memory_space<vmem>>, %arg8: memref<1x64xf32, #tpu.memory_space<vmem>>, %arg9: memref<16x32xf32, #tpu.memory_space<vmem>>, %arg10: memref<16x32xf32, #tpu.memory_space<vmem>>, %arg11: memref<64x32xf32, #tpu.memory_space<vmem>>, %arg12: memref<64x32xf32, #tpu.memory_space<vmem>>, %arg13: memref<3x32x64xbf16, #tpu.memory_space<vmem>>, %arg14: memref<1x64xf32, #tpu.memory_space<vmem>>, %arg15: memref<3x64x64xbf16, #tpu.memory_space<vmem>>, %arg16: memref<1x64xf32, #tpu.memory_space<vmem>>, %arg17: memref<8x16xf32, #tpu.memory_space<vmem>>, %arg18: memref<8x16xf32, #tpu.memory_space<vmem>>, %arg19: memref<3x64x128xbf16, #tpu.memory_space<vmem>>, %arg20: memref<1x32xf32, #tpu.memory_space<vmem>>, %arg21: memref<1x32xf32, #tpu.memory_space<vmem>>, %arg22: memref<3x128x128xbf16, #tpu.memory_space<vmem>>, %arg23: memref<1x32xf32, #tpu.memory_space<vmem>>, %arg24: memref<1x32xf32, #tpu.memory_space<vmem>>, %arg25: memref<4x8xf32, #tpu.memory_space<vmem>>, %arg26: memref<4x8xf32, #tpu.memory_space<vmem>>, %arg27: memref<2x128x96xbf16, #tpu.memory_space<vmem>>, %arg28: memref<1x96xf32, #tpu.memory_space<vmem>>, %arg29: memref<96x128xf32, #tpu.memory_space<vmem>>, %arg30: memref<1x128xf32, #tpu.memory_space<vmem>>, %arg31: memref<2x128xf32, #tpu.memory_space<vmem>>, %arg32: memref<80x128xf32, #tpu.memory_space<vmem>>) attributes {dimension_semantics = [], scalar_prefetch = 0 : i64, scratch_operands = 1 : i64, tpu.core_type = #tpu.core_type<tc>} {
    %cst = arith.constant 0.000000e+00 : f32
    %0 = vector.broadcast %cst : f32 to vector<80x128xf32>
    %c0 = arith.constant 0 : index
    %c0_0 = arith.constant 0 : index
    %1 = vector.load %arg32[%c0, %c0_0] : memref<80x128xf32, #tpu.memory_space<vmem>>, vector<80x128xf32>
    tpu.vector_store %arg32[%c0, %c0_0], %0 {strides = array<i32>} : memref<80x128xf32, #tpu.memory_space<vmem>>, vector<80x128xf32>,
    %c0_1 = arith.constant 0 : index
    %c0_2 = arith.constant 0 : index
    %2 = vector.load %arg0[%c0_1, %c0_2] : memref<64x16xf32, #tpu.memory_space<vmem>>, vector<64x16xf32>
    %cst_3 = arith.constant 0.000000e+00 : f32
    %3 = vector.broadcast %cst_3 : f32 to vector<1x16xf32>
    %c0_4 = arith.constant 0 : index
    %c0_5 = arith.constant 0 : index
    %4 = vector.load %arg32[%c0_4, %c0_5] : memref<80x128xf32, #tpu.memory_space<vmem>>, vector<1x16xf32>
    tpu.vector_store %arg32[%c0_4, %c0_5], %3 {strides = array<i32>} : memref<80x128xf32, #tpu.memory_space<vmem>>, vector<1x16xf32>,
    %c33 = arith.constant 33 : index
    %c0_6 = arith.constant 0 : index
    %5 = vector.load %arg32[%c33, %c0_6] : memref<80x128xf32, #tpu.memory_space<vmem>>, vector<1x16xf32>
    tpu.vector_store %arg32[%c33, %c0_6], %3 {strides = array<i32>} : memref<80x128xf32, #tpu.memory_space<vmem>>, vector<1x16xf32>,
    %6 = vector.extract_strided_slice %2 {offsets = [0, 0], sizes = [32, 16], strides = [1, 1]} : vector<64x16xf32> to vector<32x16xf32>
    %c1 = arith.constant 1 : index
    %c0_7 = arith.constant 0 : index
    %7 = vector.load %arg32[%c1, %c0_7] : memref<80x128xf32, #tpu.memory_space<vmem>>, vector<32x16xf32>
    tpu.vector_store %arg32[%c1, %c0_7], %6 {strides = array<i32>} : memref<80x128xf32, #tpu.memory_space<vmem>>, vector<32x16xf32>,
    %c40 = arith.constant 40 : index
    %c0_8 = arith.constant 0 : index
    %8 = vector.load %arg32[%c40, %c0_8] : memref<80x128xf32, #tpu.memory_space<vmem>>, vector<1x16xf32>
    tpu.vector_store %arg32[%c40, %c0_8], %3 {strides = array<i32>} : memref<80x128xf32, #tpu.memory_space<vmem>>, vector<1x16xf32>,
    %c73 = arith.constant 73 : index
    %c0_9 = arith.constant 0 : index
    %9 = vector.load %arg32[%c73, %c0_9] : memref<80x128xf32, #tpu.memory_space<vmem>>, vector<1x16xf32>
    tpu.vector_store %arg32[%c73, %c0_9], %3 {strides = array<i32>} : memref<80x128xf32, #tpu.memory_space<vmem>>, vector<1x16xf32>,
    %10 = vector.extract_strided_slice %2 {offsets = [32, 0], sizes = [32, 16], strides = [1, 1]} : vector<64x16xf32> to vector<32x16xf32>
    %c41 = arith.constant 41 : index
    %c0_10 = arith.constant 0 : index
    %11 = vector.load %arg32[%c41, %c0_10] : memref<80x128xf32, #tpu.memory_space<vmem>>, vector<32x16xf32>
    tpu.vector_store %arg32[%c41, %c0_10], %10 {strides = array<i32>} : memref<80x128xf32, #tpu.memory_space<vmem>>, vector<32x16xf32>,
    %c0_11 = arith.constant 0 : index
    %c0_12 = arith.constant 0 : index
    %12 = vector.load %arg32[%c0_11, %c0_12] : memref<80x128xf32, #tpu.memory_space<vmem>>, vector<72x16xf32>
    %13 = arith.truncf %12 : vector<72x16xf32> to vector<72x16xbf16>
    %c0_13 = arith.constant 0 : index
    %c0_14 = arith.constant 0 : index
    %c0_15 = arith.constant 0 : index
    %14 = vector.load %arg1[%c0_13, %c0_14, %c0_15] : memref<3x16x64xbf16, #tpu.memory_space<vmem>>, vector<1x16x64xbf16>
    %15 = vector.shape_cast %14 : vector<1x16x64xbf16> to vector<16x64xbf16>
    %cst_16 = arith.constant dense<0.000000e+00> : vector<72x64xf32>
    %16 = tpu.matmul %13, %15, %cst_16 {dimension_numbers = #tpu.dot_dimension_numbers<[1], [0], [0], [1], [0, 0, 1, 1], [], []>} : vector<72x16xbf16>, vector<16x64xbf16>, vector<72x64xf32> -> vector<72x64xf32>
    %c1_17 = arith.constant 1 : index
    %c0_18 = arith.constant 0 : index
    %17 = vector.load %arg32[%c1_17, %c0_18] : memref<80x128xf32, #tpu.memory_space<vmem>>, vector<72x16xf32>
    %18 = arith.truncf %17 : vector<72x16xf32> to vector<72x16xbf16>
    %c1_19 = arith.constant 1 : index
    %c0_20 = arith.constant 0 : index
    %c0_21 = arith.constant 0 : index
    %19 = vector.load %arg1[%c1_19, %c0_20, %c0_21] : memref<3x16x64xbf16, #tpu.memory_space<vmem>>, vector<1x16x64xbf16>
    %20 = vector.shape_cast %19 : vector<1x16x64xbf16> to vector<16x64xbf16>
    %cst_22 = arith.constant dense<0.000000e+00> : vector<72x64xf32>
    %21 = tpu.matmul %18, %20, %cst_22 {dimension_numbers = #tpu.dot_dimension_numbers<[1], [0], [0], [1], [0, 0, 1, 1], [], []>} : vector<72x16xbf16>, vector<16x64xbf16>, vector<72x64xf32> -> vector<72x64xf32>
    %22 = arith.addf %16, %21 : vector<72x64xf32>
    %c2 = arith.constant 2 : index
    %c0_23 = arith.constant 0 : index
    %23 = vector.load %arg32[%c2, %c0_23] : memref<80x128xf32, #tpu.memory_space<vmem>>, vector<72x16xf32>
    %24 = arith.truncf %23 : vector<72x16xf32> to vector<72x16xbf16>
    %c2_24 = arith.constant 2 : index
    %c0_25 = arith.constant 0 : index
    %c0_26 = arith.constant 0 : index
    %25 = vector.load %arg1[%c2_24, %c0_25, %c0_26] : memref<3x16x64xbf16, #tpu.memory_space<vmem>>, vector<1x16x64xbf16>
    %26 = vector.shape_cast %25 : vector<1x16x64xbf16> to vector<16x64xbf16>
    %cst_27 = arith.constant dense<0.000000e+00> : vector<72x64xf32>
    %27 = tpu.matmul %24, %26, %cst_27 {dimension_numbers = #tpu.dot_dimension_numbers<[1], [0], [0], [1], [0, 0, 1, 1], [], []>} : vector<72x16xbf16>, vector<16x64xbf16>, vector<72x64xf32> -> vector<72x64xf32>
    %28 = arith.addf %22, %27 : vector<72x64xf32>
    %29 = vector.extract_strided_slice %28 {offsets = [0, 0], sizes = [32, 64], strides = [1, 1]} : vector<72x64xf32> to vector<32x64xf32>
    %30 = vector.extract_strided_slice %28 {offsets = [40, 0], sizes = [32, 64], strides = [1, 1]} : vector<72x64xf32> to vector<32x64xf32>
    %31 = tpu.concatenate %29, %30 in 0 : vector<32x64xf32>, vector<32x64xf32> -> vector<64x64xf32>
    %c0_28 = arith.constant 0 : index
    %c0_29 = arith.constant 0 : index
    %32 = vector.load %arg2[%c0_28, %c0_29] : memref<1x64xf32, #tpu.memory_space<vmem>>, vector<1x64xf32>
    %33 = vector.broadcast %32 : vector<1x64xf32> to vector<64x64xf32>
    %34 = arith.addf %31, %33 : vector<64x64xf32>
    %cst_30 = arith.constant 0.000000e+00 : f32
    %35 = vector.broadcast %cst_30 : f32 to vector<64x64xf32>
    %36 = arith.maximumf %34, %35 : vector<64x64xf32>
    %c0_31 = arith.constant 0 : index
    %c0_32 = arith.constant 0 : index
    %37 = vector.load %arg3[%c0_31, %c0_32] : memref<32x64xf32, #tpu.memory_space<vmem>>, vector<32x64xf32>
    %cst_33 = arith.constant dense<0.000000e+00> : vector<32x64xf32>
    %38 = tpu.matmul %37, %36, %cst_33 {dimension_numbers = #tpu.dot_dimension_numbers<[1], [0], [0], [1], [0, 0, 1, 1], [], []>} : vector<32x64xf32>, vector<64x64xf32>, vector<32x64xf32> -> vector<32x64xf32>
    %c0_34 = arith.constant 0 : index
    %c0_35 = arith.constant 0 : index
    %39 = vector.load %arg4[%c0_34, %c0_35] : memref<32x64xf32, #tpu.memory_space<vmem>>, vector<32x64xf32>
    %cst_36 = arith.constant dense<0.000000e+00> : vector<32x64xf32>
    %40 = tpu.matmul %39, %36, %cst_36 {dimension_numbers = #tpu.dot_dimension_numbers<[1], [0], [0], [1], [0, 0, 1, 1], [], []>} : vector<32x64xf32>, vector<64x64xf32>, vector<32x64xf32> -> vector<32x64xf32>
    %41 = arith.maximumf %38, %40 : vector<32x64xf32>
    %c0_37 = arith.constant 0 : index
    %c0_38 = arith.constant 0 : index
    %42 = vector.load %arg5[%c0_37, %c0_38] : memref<64x32xf32, #tpu.memory_space<vmem>>, vector<64x32xf32>
    %cst_39 = arith.constant dense<0.000000e+00> : vector<32x32xf32>
    %43 = tpu.matmul %41, %42, %cst_39 {dimension_numbers = #tpu.dot_dimension_numbers<[1], [0], [0], [1], [0, 0, 1, 1], [], []>} : vector<32x64xf32>, vector<64x32xf32>, vector<32x32xf32> -> vector<32x32xf32>
    %c0_40 = arith.constant 0 : index
    %c0_41 = arith.constant 0 : index
    %44 = vector.load %arg6[%c0_40, %c0_41] : memref<64x32xf32, #tpu.memory_space<vmem>>, vector<64x32xf32>
    %cst_42 = arith.constant dense<0.000000e+00> : vector<32x32xf32>
    %45 = tpu.matmul %41, %44, %cst_42 {dimension_numbers = #tpu.dot_dimension_numbers<[1], [0], [0], [1], [0, 0, 1, 1], [], []>} : vector<32x64xf32>, vector<64x32xf32>, vector<32x32xf32> -> vector<32x32xf32>
    %46 = arith.maximumf %43, %45 : vector<32x32xf32>
    %cst_43 = arith.constant 0.000000e+00 : f32
    %47 = vector.broadcast %cst_43 : f32 to vector<1x32xf32>
    %c0_44 = arith.constant 0 : index
    %c0_45 = arith.constant 0 : index
    %48 = vector.load %arg32[%c0_44, %c0_45] : memref<80x128xf32, #tpu.memory_space<vmem>>, vector<1x32xf32>
    tpu.vector_store %arg32[%c0_44, %c0_45], %47 {strides = array<i32>} : memref<80x128xf32, #tpu.memory_space<vmem>>, vector<1x32xf32>,
    %c17 = arith.constant 17 : index
    %c0_46 = arith.constant 0 : index
    %49 = vector.load %arg32[%c17, %c0_46] : memref<80x128xf32, #tpu.memory_space<vmem>>, vector<1x32xf32>
    tpu.vector_store %arg32[%c17, %c0_46], %47 {strides = array<i32>} : memref<80x128xf32, #tpu.memory_space<vmem>>, vector<1x32xf32>,
    %50 = vector.extract_strided_slice %46 {offsets = [0, 0], sizes = [16, 32], strides = [1, 1]} : vector<32x32xf32> to vector<16x32xf32>
    %c1_47 = arith.constant 1 : index
    %c0_48 = arith.constant 0 : index
    %51 = vector.load %arg32[%c1_47, %c0_48] : memref<80x128xf32, #tpu.memory_space<vmem>>, vector<16x32xf32>
    tpu.vector_store %arg32[%c1_47, %c0_48], %50 {strides = array<i32>} : memref<80x128xf32, #tpu.memory_space<vmem>>, vector<16x32xf32>,
    %c24 = arith.constant 24 : index
    %c0_49 = arith.constant 0 : index
    %52 = vector.load %arg32[%c24, %c0_49] : memref<80x128xf32, #tpu.memory_space<vmem>>, vector<1x32xf32>
    tpu.vector_store %arg32[%c24, %c0_49], %47 {strides = array<i32>} : memref<80x128xf32, #tpu.memory_space<vmem>>, vector<1x32xf32>,
    %c41_50 = arith.constant 41 : index
    %c0_51 = arith.constant 0 : index
    %53 = vector.load %arg32[%c41_50, %c0_51] : memref<80x128xf32, #tpu.memory_space<vmem>>, vector<1x32xf32>
    tpu.vector_store %arg32[%c41_50, %c0_51], %47 {strides = array<i32>} : memref<80x128xf32, #tpu.memory_space<vmem>>, vector<1x32xf32>,
    %54 = vector.extract_strided_slice %46 {offsets = [16, 0], sizes = [16, 32], strides = [1, 1]} : vector<32x32xf32> to vector<16x32xf32>
    %c25 = arith.constant 25 : index
    %c0_52 = arith.constant 0 : index
    %55 = vector.load %arg32[%c25, %c0_52] : memref<80x128xf32, #tpu.memory_space<vmem>>, vector<16x32xf32>
    tpu.vector_store %arg32[%c25, %c0_52], %54 {strides = array<i32>} : memref<80x128xf32, #tpu.memory_space<vmem>>, vector<16x32xf32>,
    %c0_53 = arith.constant 0 : index
    %c0_54 = arith.constant 0 : index
    %56 = vector.load %arg32[%c0_53, %c0_54] : memref<80x128xf32, #tpu.memory_space<vmem>>, vector<40x32xf32>
    %57 = arith.truncf %56 : vector<40x32xf32> to vector<40x32xbf16>
    %c0_55 = arith.constant 0 : index
    %c0_56 = arith.constant 0 : index
    %c0_57 = arith.constant 0 : index
    %58 = vector.load %arg7[%c0_55, %c0_56, %c0_57] : memref<3x32x64xbf16, #tpu.memory_space<vmem>>, vector<1x32x64xbf16>
    %59 = vector.shape_cast %58 : vector<1x32x64xbf16> to vector<32x64xbf16>
    %cst_58 = arith.constant dense<0.000000e+00> : vector<40x64xf32>
    %60 = tpu.matmul %57, %59, %cst_58 {dimension_numbers = #tpu.dot_dimension_numbers<[1], [0], [0], [1], [0, 0, 1, 1], [], []>} : vector<40x32xbf16>, vector<32x64xbf16>, vector<40x64xf32> -> vector<40x64xf32>
    %c1_59 = arith.constant 1 : index
    %c0_60 = arith.constant 0 : index
    %61 = vector.load %arg32[%c1_59, %c0_60] : memref<80x128xf32, #tpu.memory_space<vmem>>, vector<40x32xf32>
    %62 = arith.truncf %61 : vector<40x32xf32> to vector<40x32xbf16>
    %c1_61 = arith.constant 1 : index
    %c0_62 = arith.constant 0 : index
    %c0_63 = arith.constant 0 : index
    %63 = vector.load %arg7[%c1_61, %c0_62, %c0_63] : memref<3x32x64xbf16, #tpu.memory_space<vmem>>, vector<1x32x64xbf16>
    %64 = vector.shape_cast %63 : vector<1x32x64xbf16> to vector<32x64xbf16>
    %cst_64 = arith.constant dense<0.000000e+00> : vector<40x64xf32>
    %65 = tpu.matmul %62, %64, %cst_64 {dimension_numbers = #tpu.dot_dimension_numbers<[1], [0], [0], [1], [0, 0, 1, 1], [], []>} : vector<40x32xbf16>, vector<32x64xbf16>, vector<40x64xf32> -> vector<40x64xf32>
    %66 = arith.addf %60, %65 : vector<40x64xf32>
    %c2_65 = arith.constant 2 : index
    %c0_66 = arith.constant 0 : index
    %67 = vector.load %arg32[%c2_65, %c0_66] : memref<80x128xf32, #tpu.memory_space<vmem>>, vector<40x32xf32>
    %68 = arith.truncf %67 : vector<40x32xf32> to vector<40x32xbf16>
    %c2_67 = arith.constant 2 : index
    %c0_68 = arith.constant 0 : index
    %c0_69 = arith.constant 0 : index
    %69 = vector.load %arg7[%c2_67, %c0_68, %c0_69] : memref<3x32x64xbf16, #tpu.memory_space<vmem>>, vector<1x32x64xbf16>
    %70 = vector.shape_cast %69 : vector<1x32x64xbf16> to vector<32x64xbf16>
    %cst_70 = arith.constant dense<0.000000e+00> : vector<40x64xf32>
    %71 = tpu.matmul %68, %70, %cst_70 {dimension_numbers = #tpu.dot_dimension_numbers<[1], [0], [0], [1], [0, 0, 1, 1], [], []>} : vector<40x32xbf16>, vector<32x64xbf16>, vector<40x64xf32> -> vector<40x64xf32>
    %72 = arith.addf %66, %71 : vector<40x64xf32>
    %73 = vector.extract_strided_slice %72 {offsets = [0, 0], sizes = [16, 64], strides = [1, 1]} : vector<40x64xf32> to vector<16x64xf32>
    %74 = vector.extract_strided_slice %72 {offsets = [24, 0], sizes = [16, 64], strides = [1, 1]} : vector<40x64xf32> to vector<16x64xf32>
    %75 = tpu.concatenate %73, %74 in 0 : vector<16x64xf32>, vector<16x64xf32> -> vector<32x64xf32>
    %c0_71 = arith.constant 0 : index
    %c0_72 = arith.constant 0 : index
    %76 = vector.load %arg8[%c0_71, %c0_72] : memref<1x64xf32, #tpu.memory_space<vmem>>, vector<1x64xf32>
    %77 = vector.broadcast %76 : vector<1x64xf32> to vector<32x64xf32>
    %78 = arith.addf %75, %77 : vector<32x64xf32>
    %cst_73 = arith.constant 0.000000e+00 : f32
    %79 = vector.broadcast %cst_73 : f32 to vector<32x64xf32>
    %80 = arith.maximumf %78, %79 : vector<32x64xf32>
    %c0_74 = arith.constant 0 : index
    %c0_75 = arith.constant 0 : index
    %81 = vector.load %arg9[%c0_74, %c0_75] : memref<16x32xf32, #tpu.memory_space<vmem>>, vector<16x32xf32>
    %cst_76 = arith.constant dense<0.000000e+00> : vector<16x64xf32>
    %82 = tpu.matmul %81, %80, %cst_76 {dimension_numbers = #tpu.dot_dimension_numbers<[1], [0], [0], [1], [0, 0, 1, 1], [], []>} : vector<16x32xf32>, vector<32x64xf32>, vector<16x64xf32> -> vector<16x64xf32>
    %c0_77 = arith.constant 0 : index
    %c0_78 = arith.constant 0 : index
    %83 = vector.load %arg10[%c0_77, %c0_78] : memref<16x32xf32, #tpu.memory_space<vmem>>, vector<16x32xf32>
    %cst_79 = arith.constant dense<0.000000e+00> : vector<16x64xf32>
    %84 = tpu.matmul %83, %80, %cst_79 {dimension_numbers = #tpu.dot_dimension_numbers<[1], [0], [0], [1], [0, 0, 1, 1], [], []>} : vector<16x32xf32>, vector<32x64xf32>, vector<16x64xf32> -> vector<16x64xf32>
    %85 = arith.maximumf %82, %84 : vector<16x64xf32>
    %c0_80 = arith.constant 0 : index
    %c0_81 = arith.constant 0 : index
    %86 = vector.load %arg11[%c0_80, %c0_81] : memref<64x32xf32, #tpu.memory_space<vmem>>, vector<64x32xf32>
    %cst_82 = arith.constant dense<0.000000e+00> : vector<16x32xf32>
    %87 = tpu.matmul %85, %86, %cst_82 {dimension_numbers = #tpu.dot_dimension_numbers<[1], [0], [0], [1], [0, 0, 1, 1], [], []>} : vector<16x64xf32>, vector<64x32xf32>, vector<16x32xf32> -> vector<16x32xf32>
    %c0_83 = arith.constant 0 : index
    %c0_84 = arith.constant 0 : index
    %88 = vector.load %arg12[%c0_83, %c0_84] : memref<64x32xf32, #tpu.memory_space<vmem>>, vector<64x32xf32>
    %cst_85 = arith.constant dense<0.000000e+00> : vector<16x32xf32>
    %89 = tpu.matmul %85, %88, %cst_85 {dimension_numbers = #tpu.dot_dimension_numbers<[1], [0], [0], [1], [0, 0, 1, 1], [], []>} : vector<16x64xf32>, vector<64x32xf32>, vector<16x32xf32> -> vector<16x32xf32>
    %90 = arith.maximumf %87, %89 : vector<16x32xf32>
    %cst_86 = arith.constant 0.000000e+00 : f32
    %91 = vector.broadcast %cst_86 : f32 to vector<1x32xf32>
    %c0_87 = arith.constant 0 : index
    %c0_88 = arith.constant 0 : index
    %92 = vector.load %arg32[%c0_87, %c0_88] : memref<80x128xf32, #tpu.memory_space<vmem>>, vector<1x32xf32>
    tpu.vector_store %arg32[%c0_87, %c0_88], %91 {strides = array<i32>} : memref<80x128xf32, #tpu.memory_space<vmem>>, vector<1x32xf32>,
    %c9 = arith.constant 9 : index
    %c0_89 = arith.constant 0 : index
    %93 = vector.load %arg32[%c9, %c0_89] : memref<80x128xf32, #tpu.memory_space<vmem>>, vector<1x32xf32>
    tpu.vector_store %arg32[%c9, %c0_89], %91 {strides = array<i32>} : memref<80x128xf32, #tpu.memory_space<vmem>>, vector<1x32xf32>,
    %94 = vector.extract_strided_slice %90 {offsets = [0, 0], sizes = [8, 32], strides = [1, 1]} : vector<16x32xf32> to vector<8x32xf32>
    %c1_90 = arith.constant 1 : index
    %c0_91 = arith.constant 0 : index
    %95 = vector.load %arg32[%c1_90, %c0_91] : memref<80x128xf32, #tpu.memory_space<vmem>>, vector<8x32xf32>
    tpu.vector_store %arg32[%c1_90, %c0_91], %94 {strides = array<i32>} : memref<80x128xf32, #tpu.memory_space<vmem>>, vector<8x32xf32>,
    %c16 = arith.constant 16 : index
    %c0_92 = arith.constant 0 : index
    %96 = vector.load %arg32[%c16, %c0_92] : memref<80x128xf32, #tpu.memory_space<vmem>>, vector<1x32xf32>
    tpu.vector_store %arg32[%c16, %c0_92], %91 {strides = array<i32>} : memref<80x128xf32, #tpu.memory_space<vmem>>, vector<1x32xf32>,
    %c25_93 = arith.constant 25 : index
    %c0_94 = arith.constant 0 : index
    %97 = vector.load %arg32[%c25_93, %c0_94] : memref<80x128xf32, #tpu.memory_space<vmem>>, vector<1x32xf32>
    tpu.vector_store %arg32[%c25_93, %c0_94], %91 {strides = array<i32>} : memref<80x128xf32, #tpu.memory_space<vmem>>, vector<1x32xf32>,
    %98 = vector.extract_strided_slice %90 {offsets = [8, 0], sizes = [8, 32], strides = [1, 1]} : vector<16x32xf32> to vector<8x32xf32>
    %c17_95 = arith.constant 17 : index
    %c0_96 = arith.constant 0 : index
    %99 = vector.load %arg32[%c17_95, %c0_96] : memref<80x128xf32, #tpu.memory_space<vmem>>, vector<8x32xf32>
    tpu.vector_store %arg32[%c17_95, %c0_96], %98 {strides = array<i32>} : memref<80x128xf32, #tpu.memory_space<vmem>>, vector<8x32xf32>,
    %c0_97 = arith.constant 0 : index
    %c0_98 = arith.constant 0 : index
    %100 = vector.load %arg32[%c0_97, %c0_98] : memref<80x128xf32, #tpu.memory_space<vmem>>, vector<24x32xf32>
    %101 = arith.truncf %100 : vector<24x32xf32> to vector<24x32xbf16>
    %c0_99 = arith.constant 0 : index
    %c0_100 = arith.constant 0 : index
    %c0_101 = arith.constant 0 : index
    %102 = vector.load %arg13[%c0_99, %c0_100, %c0_101] : memref<3x32x64xbf16, #tpu.memory_space<vmem>>, vector<1x32x64xbf16>
    %103 = vector.shape_cast %102 : vector<1x32x64xbf16> to vector<32x64xbf16>
    %cst_102 = arith.constant dense<0.000000e+00> : vector<24x64xf32>
    %104 = tpu.matmul %101, %103, %cst_102 {dimension_numbers = #tpu.dot_dimension_numbers<[1], [0], [0], [1], [0, 0, 1, 1], [], []>} : vector<24x32xbf16>, vector<32x64xbf16>, vector<24x64xf32> -> vector<24x64xf32>
    %c1_103 = arith.constant 1 : index
    %c0_104 = arith.constant 0 : index
    %105 = vector.load %arg32[%c1_103, %c0_104] : memref<80x128xf32, #tpu.memory_space<vmem>>, vector<24x32xf32>
    %106 = arith.truncf %105 : vector<24x32xf32> to vector<24x32xbf16>
    %c1_105 = arith.constant 1 : index
    %c0_106 = arith.constant 0 : index
    %c0_107 = arith.constant 0 : index
    %107 = vector.load %arg13[%c1_105, %c0_106, %c0_107] : memref<3x32x64xbf16, #tpu.memory_space<vmem>>, vector<1x32x64xbf16>
    %108 = vector.shape_cast %107 : vector<1x32x64xbf16> to vector<32x64xbf16>
    %cst_108 = arith.constant dense<0.000000e+00> : vector<24x64xf32>
    %109 = tpu.matmul %106, %108, %cst_108 {dimension_numbers = #tpu.dot_dimension_numbers<[1], [0], [0], [1], [0, 0, 1, 1], [], []>} : vector<24x32xbf16>, vector<32x64xbf16>, vector<24x64xf32> -> vector<24x64xf32>
    %110 = arith.addf %104, %109 : vector<24x64xf32>
    %c2_109 = arith.constant 2 : index
    %c0_110 = arith.constant 0 : index
    %111 = vector.load %arg32[%c2_109, %c0_110] : memref<80x128xf32, #tpu.memory_space<vmem>>, vector<24x32xf32>
    %112 = arith.truncf %111 : vector<24x32xf32> to vector<24x32xbf16>
    %c2_111 = arith.constant 2 : index
    %c0_112 = arith.constant 0 : index
    %c0_113 = arith.constant 0 : index
    %113 = vector.load %arg13[%c2_111, %c0_112, %c0_113] : memref<3x32x64xbf16, #tpu.memory_space<vmem>>, vector<1x32x64xbf16>
    %114 = vector.shape_cast %113 : vector<1x32x64xbf16> to vector<32x64xbf16>
    %cst_114 = arith.constant dense<0.000000e+00> : vector<24x64xf32>
    %115 = tpu.matmul %112, %114, %cst_114 {dimension_numbers = #tpu.dot_dimension_numbers<[1], [0], [0], [1], [0, 0, 1, 1], [], []>} : vector<24x32xbf16>, vector<32x64xbf16>, vector<24x64xf32> -> vector<24x64xf32>
    %116 = arith.addf %110, %115 : vector<24x64xf32>
    %117 = vector.extract_strided_slice %116 {offsets = [0, 0], sizes = [8, 64], strides = [1, 1]} : vector<24x64xf32> to vector<8x64xf32>
    %118 = vector.extract_strided_slice %116 {offsets = [16, 0], sizes = [8, 64], strides = [1, 1]} : vector<24x64xf32> to vector<8x64xf32>
    %119 = tpu.concatenate %117, %118 in 0 : vector<8x64xf32>, vector<8x64xf32> -> vector<16x64xf32>
    %c0_115 = arith.constant 0 : index
    %c0_116 = arith.constant 0 : index
    %120 = vector.load %arg14[%c0_115, %c0_116] : memref<1x64xf32, #tpu.memory_space<vmem>>, vector<1x64xf32>
    %121 = vector.broadcast %120 : vector<1x64xf32> to vector<16x64xf32>
    %122 = arith.addf %119, %121 : vector<16x64xf32>
    %cst_117 = arith.constant 0.000000e+00 : f32
    %123 = vector.broadcast %cst_117 : f32 to vector<16x64xf32>
    %124 = arith.maximumf %122, %123 : vector<16x64xf32>
    %cst_118 = arith.constant 0.000000e+00 : f32
    %125 = vector.broadcast %cst_118 : f32 to vector<1x64xf32>
    %c0_119 = arith.constant 0 : index
    %c0_120 = arith.constant 0 : index
    %126 = vector.load %arg32[%c0_119, %c0_120] : memref<80x128xf32, #tpu.memory_space<vmem>>, vector<1x64xf32>
    tpu.vector_store %arg32[%c0_119, %c0_120], %125 {strides = array<i32>} : memref<80x128xf32, #tpu.memory_space<vmem>>, vector<1x64xf32>,
    %c9_121 = arith.constant 9 : index
    %c0_122 = arith.constant 0 : index
    %127 = vector.load %arg32[%c9_121, %c0_122] : memref<80x128xf32, #tpu.memory_space<vmem>>, vector<1x64xf32>
    tpu.vector_store %arg32[%c9_121, %c0_122], %125 {strides = array<i32>} : memref<80x128xf32, #tpu.memory_space<vmem>>, vector<1x64xf32>,
    %128 = vector.extract_strided_slice %124 {offsets = [0, 0], sizes = [8, 64], strides = [1, 1]} : vector<16x64xf32> to vector<8x64xf32>
    %c1_123 = arith.constant 1 : index
    %c0_124 = arith.constant 0 : index
    %129 = vector.load %arg32[%c1_123, %c0_124] : memref<80x128xf32, #tpu.memory_space<vmem>>, vector<8x64xf32>
    tpu.vector_store %arg32[%c1_123, %c0_124], %128 {strides = array<i32>} : memref<80x128xf32, #tpu.memory_space<vmem>>, vector<8x64xf32>,
    %c16_125 = arith.constant 16 : index
    %c0_126 = arith.constant 0 : index
    %130 = vector.load %arg32[%c16_125, %c0_126] : memref<80x128xf32, #tpu.memory_space<vmem>>, vector<1x64xf32>
    tpu.vector_store %arg32[%c16_125, %c0_126], %125 {strides = array<i32>} : memref<80x128xf32, #tpu.memory_space<vmem>>, vector<1x64xf32>,
    %c25_127 = arith.constant 25 : index
    %c0_128 = arith.constant 0 : index
    %131 = vector.load %arg32[%c25_127, %c0_128] : memref<80x128xf32, #tpu.memory_space<vmem>>, vector<1x64xf32>
    tpu.vector_store %arg32[%c25_127, %c0_128], %125 {strides = array<i32>} : memref<80x128xf32, #tpu.memory_space<vmem>>, vector<1x64xf32>,
    %132 = vector.extract_strided_slice %124 {offsets = [8, 0], sizes = [8, 64], strides = [1, 1]} : vector<16x64xf32> to vector<8x64xf32>
    %c17_129 = arith.constant 17 : index
    %c0_130 = arith.constant 0 : index
    %133 = vector.load %arg32[%c17_129, %c0_130] : memref<80x128xf32, #tpu.memory_space<vmem>>, vector<8x64xf32>
    tpu.vector_store %arg32[%c17_129, %c0_130], %132 {strides = array<i32>} : memref<80x128xf32, #tpu.memory_space<vmem>>, vector<8x64xf32>,
    %c0_131 = arith.constant 0 : index
    %c0_132 = arith.constant 0 : index
    %134 = vector.load %arg32[%c0_131, %c0_132] : memref<80x128xf32, #tpu.memory_space<vmem>>, vector<24x64xf32>
    %135 = arith.truncf %134 : vector<24x64xf32> to vector<24x64xbf16>
    %c0_133 = arith.constant 0 : index
    %c0_134 = arith.constant 0 : index
    %c0_135 = arith.constant 0 : index
    %136 = vector.load %arg15[%c0_133, %c0_134, %c0_135] : memref<3x64x64xbf16, #tpu.memory_space<vmem>>, vector<1x64x64xbf16>
    %137 = vector.shape_cast %136 : vector<1x64x64xbf16> to vector<64x64xbf16>
    %cst_136 = arith.constant dense<0.000000e+00> : vector<24x64xf32>
    %138 = tpu.matmul %135, %137, %cst_136 {dimension_numbers = #tpu.dot_dimension_numbers<[1], [0], [0], [1], [0, 0, 1, 1], [], []>} : vector<24x64xbf16>, vector<64x64xbf16>, vector<24x64xf32> -> vector<24x64xf32>
    %c1_137 = arith.constant 1 : index
    %c0_138 = arith.constant 0 : index
    %139 = vector.load %arg32[%c1_137, %c0_138] : memref<80x128xf32, #tpu.memory_space<vmem>>, vector<24x64xf32>
    %140 = arith.truncf %139 : vector<24x64xf32> to vector<24x64xbf16>
    %c1_139 = arith.constant 1 : index
    %c0_140 = arith.constant 0 : index
    %c0_141 = arith.constant 0 : index
    %141 = vector.load %arg15[%c1_139, %c0_140, %c0_141] : memref<3x64x64xbf16, #tpu.memory_space<vmem>>, vector<1x64x64xbf16>
    %142 = vector.shape_cast %141 : vector<1x64x64xbf16> to vector<64x64xbf16>
    %cst_142 = arith.constant dense<0.000000e+00> : vector<24x64xf32>
    %143 = tpu.matmul %140, %142, %cst_142 {dimension_numbers = #tpu.dot_dimension_numbers<[1], [0], [0], [1], [0, 0, 1, 1], [], []>} : vector<24x64xbf16>, vector<64x64xbf16>, vector<24x64xf32> -> vector<24x64xf32>
    %144 = arith.addf %138, %143 : vector<24x64xf32>
    %c2_143 = arith.constant 2 : index
    %c0_144 = arith.constant 0 : index
    %145 = vector.load %arg32[%c2_143, %c0_144] : memref<80x128xf32, #tpu.memory_space<vmem>>, vector<24x64xf32>
    %146 = arith.truncf %145 : vector<24x64xf32> to vector<24x64xbf16>
    %c2_145 = arith.constant 2 : index
    %c0_146 = arith.constant 0 : index
    %c0_147 = arith.constant 0 : index
    %147 = vector.load %arg15[%c2_145, %c0_146, %c0_147] : memref<3x64x64xbf16, #tpu.memory_space<vmem>>, vector<1x64x64xbf16>
    %148 = vector.shape_cast %147 : vector<1x64x64xbf16> to vector<64x64xbf16>
    %cst_148 = arith.constant dense<0.000000e+00> : vector<24x64xf32>
    %149 = tpu.matmul %146, %148, %cst_148 {dimension_numbers = #tpu.dot_dimension_numbers<[1], [0], [0], [1], [0, 0, 1, 1], [], []>} : vector<24x64xbf16>, vector<64x64xbf16>, vector<24x64xf32> -> vector<24x64xf32>
    %150 = arith.addf %144, %149 : vector<24x64xf32>
    %151 = vector.extract_strided_slice %150 {offsets = [0, 0], sizes = [8, 64], strides = [1, 1]} : vector<24x64xf32> to vector<8x64xf32>
    %152 = vector.extract_strided_slice %150 {offsets = [16, 0], sizes = [8, 64], strides = [1, 1]} : vector<24x64xf32> to vector<8x64xf32>
    %153 = tpu.concatenate %151, %152 in 0 : vector<8x64xf32>, vector<8x64xf32> -> vector<16x64xf32>
    %c0_149 = arith.constant 0 : index
    %c0_150 = arith.constant 0 : index
    %154 = vector.load %arg16[%c0_149, %c0_150] : memref<1x64xf32, #tpu.memory_space<vmem>>, vector<1x64xf32>
    %155 = vector.broadcast %154 : vector<1x64xf32> to vector<16x64xf32>
    %156 = arith.addf %153, %155 : vector<16x64xf32>
    %cst_151 = arith.constant 0.000000e+00 : f32
    %157 = vector.broadcast %cst_151 : f32 to vector<16x64xf32>
    %158 = arith.maximumf %156, %157 : vector<16x64xf32>
    %c0_152 = arith.constant 0 : index
    %c0_153 = arith.constant 0 : index
    %159 = vector.load %arg17[%c0_152, %c0_153] : memref<8x16xf32, #tpu.memory_space<vmem>>, vector<8x16xf32>
    %cst_154 = arith.constant dense<0.000000e+00> : vector<8x64xf32>
    %160 = tpu.matmul %159, %158, %cst_154 {dimension_numbers = #tpu.dot_dimension_numbers<[1], [0], [0], [1], [0, 0, 1, 1], [], []>} : vector<8x16xf32>, vector<16x64xf32>, vector<8x64xf32> -> vector<8x64xf32>
    %c0_155 = arith.constant 0 : index
    %c0_156 = arith.constant 0 : index
    %161 = vector.load %arg18[%c0_155, %c0_156] : memref<8x16xf32, #tpu.memory_space<vmem>>, vector<8x16xf32>
    %cst_157 = arith.constant dense<0.000000e+00> : vector<8x64xf32>
    %162 = tpu.matmul %161, %158, %cst_157 {dimension_numbers = #tpu.dot_dimension_numbers<[1], [0], [0], [1], [0, 0, 1, 1], [], []>} : vector<8x16xf32>, vector<16x64xf32>, vector<8x64xf32> -> vector<8x64xf32>
    %163 = arith.maximumf %160, %162 : vector<8x64xf32>
    %cst_158 = arith.constant 0.000000e+00 : f32
    %164 = vector.broadcast %cst_158 : f32 to vector<1x64xf32>
    %c0_159 = arith.constant 0 : index
    %c0_160 = arith.constant 0 : index
    %165 = vector.load %arg32[%c0_159, %c0_160] : memref<80x128xf32, #tpu.memory_space<vmem>>, vector<1x64xf32>
    tpu.vector_store %arg32[%c0_159, %c0_160], %164 {strides = array<i32>} : memref<80x128xf32, #tpu.memory_space<vmem>>, vector<1x64xf32>,
    %c5 = arith.constant 5 : index
    %c0_161 = arith.constant 0 : index
    %166 = vector.load %arg32[%c5, %c0_161] : memref<80x128xf32, #tpu.memory_space<vmem>>, vector<1x64xf32>
    tpu.vector_store %arg32[%c5, %c0_161], %164 {strides = array<i32>} : memref<80x128xf32, #tpu.memory_space<vmem>>, vector<1x64xf32>,
    %167 = vector.extract_strided_slice %163 {offsets = [0, 0], sizes = [4, 64], strides = [1, 1]} : vector<8x64xf32> to vector<4x64xf32>
    %c1_162 = arith.constant 1 : index
    %c0_163 = arith.constant 0 : index
    %168 = vector.load %arg32[%c1_162, %c0_163] : memref<80x128xf32, #tpu.memory_space<vmem>>, vector<4x64xf32>
    tpu.vector_store %arg32[%c1_162, %c0_163], %167 {strides = array<i32>} : memref<80x128xf32, #tpu.memory_space<vmem>>, vector<4x64xf32>,
    %c8 = arith.constant 8 : index
    %c0_164 = arith.constant 0 : index
    %169 = vector.load %arg32[%c8, %c0_164] : memref<80x128xf32, #tpu.memory_space<vmem>>, vector<1x64xf32>
    tpu.vector_store %arg32[%c8, %c0_164], %164 {strides = array<i32>} : memref<80x128xf32, #tpu.memory_space<vmem>>, vector<1x64xf32>,
    %c13 = arith.constant 13 : index
    %c0_165 = arith.constant 0 : index
    %170 = vector.load %arg32[%c13, %c0_165] : memref<80x128xf32, #tpu.memory_space<vmem>>, vector<1x64xf32>
    tpu.vector_store %arg32[%c13, %c0_165], %164 {strides = array<i32>} : memref<80x128xf32, #tpu.memory_space<vmem>>, vector<1x64xf32>,
    %171 = vector.extract_strided_slice %163 {offsets = [4, 0], sizes = [4, 64], strides = [1, 1]} : vector<8x64xf32> to vector<4x64xf32>
    %c9_166 = arith.constant 9 : index
    %c0_167 = arith.constant 0 : index
    %172 = vector.load %arg32[%c9_166, %c0_167] : memref<80x128xf32, #tpu.memory_space<vmem>>, vector<4x64xf32>
    tpu.vector_store %arg32[%c9_166, %c0_167], %171 {strides = array<i32>} : memref<80x128xf32, #tpu.memory_space<vmem>>, vector<4x64xf32>,
    %c0_168 = arith.constant 0 : index
    %c0_169 = arith.constant 0 : index
    %173 = vector.load %arg32[%c0_168, %c0_169] : memref<80x128xf32, #tpu.memory_space<vmem>>, vector<12x64xf32>
    %174 = arith.truncf %173 : vector<12x64xf32> to vector<12x64xbf16>
    %c0_170 = arith.constant 0 : index
    %c0_171 = arith.constant 0 : index
    %c0_172 = arith.constant 0 : index
    %175 = vector.load %arg19[%c0_170, %c0_171, %c0_172] : memref<3x64x128xbf16, #tpu.memory_space<vmem>>, vector<1x64x128xbf16>
    %176 = vector.shape_cast %175 : vector<1x64x128xbf16> to vector<64x128xbf16>
    %cst_173 = arith.constant dense<0.000000e+00> : vector<12x128xf32>
    %177 = tpu.matmul %174, %176, %cst_173 {dimension_numbers = #tpu.dot_dimension_numbers<[1], [0], [0], [1], [0, 0, 1, 1], [], []>} : vector<12x64xbf16>, vector<64x128xbf16>, vector<12x128xf32> -> vector<12x128xf32>
    %c1_174 = arith.constant 1 : index
    %c0_175 = arith.constant 0 : index
    %178 = vector.load %arg32[%c1_174, %c0_175] : memref<80x128xf32, #tpu.memory_space<vmem>>, vector<12x64xf32>
    %179 = arith.truncf %178 : vector<12x64xf32> to vector<12x64xbf16>
    %c1_176 = arith.constant 1 : index
    %c0_177 = arith.constant 0 : index
    %c0_178 = arith.constant 0 : index
    %180 = vector.load %arg19[%c1_176, %c0_177, %c0_178] : memref<3x64x128xbf16, #tpu.memory_space<vmem>>, vector<1x64x128xbf16>
    %181 = vector.shape_cast %180 : vector<1x64x128xbf16> to vector<64x128xbf16>
    %cst_179 = arith.constant dense<0.000000e+00> : vector<12x128xf32>
    %182 = tpu.matmul %179, %181, %cst_179 {dimension_numbers = #tpu.dot_dimension_numbers<[1], [0], [0], [1], [0, 0, 1, 1], [], []>} : vector<12x64xbf16>, vector<64x128xbf16>, vector<12x128xf32> -> vector<12x128xf32>
    %183 = arith.addf %177, %182 : vector<12x128xf32>
    %c2_180 = arith.constant 2 : index
    %c0_181 = arith.constant 0 : index
    %184 = vector.load %arg32[%c2_180, %c0_181] : memref<80x128xf32, #tpu.memory_space<vmem>>, vector<12x64xf32>
    %185 = arith.truncf %184 : vector<12x64xf32> to vector<12x64xbf16>
    %c2_182 = arith.constant 2 : index
    %c0_183 = arith.constant 0 : index
    %c0_184 = arith.constant 0 : index
    %186 = vector.load %arg19[%c2_182, %c0_183, %c0_184] : memref<3x64x128xbf16, #tpu.memory_space<vmem>>, vector<1x64x128xbf16>
    %187 = vector.shape_cast %186 : vector<1x64x128xbf16> to vector<64x128xbf16>
    %cst_185 = arith.constant dense<0.000000e+00> : vector<12x128xf32>
    %188 = tpu.matmul %185, %187, %cst_185 {dimension_numbers = #tpu.dot_dimension_numbers<[1], [0], [0], [1], [0, 0, 1, 1], [], []>} : vector<12x64xbf16>, vector<64x128xbf16>, vector<12x128xf32> -> vector<12x128xf32>
    %189 = arith.addf %183, %188 : vector<12x128xf32>
    %190 = vector.extract_strided_slice %189 {offsets = [0, 0], sizes = [4, 128], strides = [1, 1]} : vector<12x128xf32> to vector<4x128xf32>
    %191 = vector.extract_strided_slice %189 {offsets = [8, 0], sizes = [4, 128], strides = [1, 1]} : vector<12x128xf32> to vector<4x128xf32>
    %192 = tpu.concatenate %190, %191 in 0 : vector<4x128xf32>, vector<4x128xf32> -> vector<8x128xf32>
    %cst_186 = arith.constant dense<0.000000e+00> : vector<128xf32>
    %193 = vector.multi_reduction <add>, %192, %cst_186 [0] : vector<8x128xf32> to vector<128xf32>
    %194 = vector.shape_cast %193 : vector<128xf32> to vector<1x128xf32>
    %195 = arith.mulf %192, %192 : vector<8x128xf32>
    %cst_187 = arith.constant dense<0.000000e+00> : vector<128xf32>
    %196 = vector.multi_reduction <add>, %195, %cst_187 [0] : vector<8x128xf32> to vector<128xf32>
    %197 = vector.shape_cast %196 : vector<128xf32> to vector<1x128xf32>
    %198 = vector.extract_strided_slice %194 {offsets = [0, 0], sizes = [1, 32], strides = [1, 1]} : vector<1x128xf32> to vector<1x32xf32>
    %199 = vector.extract_strided_slice %197 {offsets = [0, 0], sizes = [1, 32], strides = [1, 1]} : vector<1x128xf32> to vector<1x32xf32>
    %200 = vector.extract_strided_slice %194 {offsets = [0, 32], sizes = [1, 32], strides = [1, 1]} : vector<1x128xf32> to vector<1x32xf32>
    %201 = arith.addf %198, %200 : vector<1x32xf32>
    %202 = vector.extract_strided_slice %197 {offsets = [0, 32], sizes = [1, 32], strides = [1, 1]} : vector<1x128xf32> to vector<1x32xf32>
    %203 = arith.addf %199, %202 : vector<1x32xf32>
    %204 = vector.extract_strided_slice %194 {offsets = [0, 64], sizes = [1, 32], strides = [1, 1]} : vector<1x128xf32> to vector<1x32xf32>
    %205 = arith.addf %201, %204 : vector<1x32xf32>
    %206 = vector.extract_strided_slice %197 {offsets = [0, 64], sizes = [1, 32], strides = [1, 1]} : vector<1x128xf32> to vector<1x32xf32>
    %207 = arith.addf %203, %206 : vector<1x32xf32>
    %208 = vector.extract_strided_slice %194 {offsets = [0, 96], sizes = [1, 32], strides = [1, 1]} : vector<1x128xf32> to vector<1x32xf32>
    %209 = arith.addf %205, %208 : vector<1x32xf32>
    %210 = vector.extract_strided_slice %197 {offsets = [0, 96], sizes = [1, 32], strides = [1, 1]} : vector<1x128xf32> to vector<1x32xf32>
    %211 = arith.addf %207, %210 : vector<1x32xf32>
    %cst_188 = arith.constant 3.200000e+01 : f32
    %212 = vector.broadcast %cst_188 : f32 to vector<1x32xf32>
    %213 = arith.divf %209, %212 : vector<1x32xf32>
    %cst_189 = arith.constant 3.200000e+01 : f32
    %214 = vector.broadcast %cst_189 : f32 to vector<1x32xf32>
    %215 = arith.divf %211, %214 : vector<1x32xf32>
    %216 = arith.mulf %213, %213 : vector<1x32xf32>
    %217 = arith.subf %215, %216 : vector<1x32xf32>
    %cst_190 = arith.constant 0.000000e+00 : f32
    %218 = vector.broadcast %cst_190 : f32 to vector<1x32xf32>
    %219 = arith.maximumf %217, %218 : vector<1x32xf32>
    %c0_191 = arith.constant 0 : index
    %c0_192 = arith.constant 0 : index
    %220 = vector.load %arg20[%c0_191, %c0_192] : memref<1x32xf32, #tpu.memory_space<vmem>>, vector<1x32xf32>
    %cst_193 = arith.constant 9.99999974E-6 : f32
    %221 = vector.broadcast %cst_193 : f32 to vector<1x32xf32>
    %222 = arith.addf %219, %221 : vector<1x32xf32>
    %223 = math.rsqrt %222 : vector<1x32xf32>
    %224 = arith.mulf %220, %223 : vector<1x32xf32>
    %c0_194 = arith.constant 0 : index
    %c0_195 = arith.constant 0 : index
    %225 = vector.load %arg21[%c0_194, %c0_195] : memref<1x32xf32, #tpu.memory_space<vmem>>, vector<1x32xf32>
    %226 = arith.mulf %213, %224 : vector<1x32xf32>
    %227 = arith.subf %225, %226 : vector<1x32xf32>
    %228 = tpu.concatenate %224, %224, %224, %224 in 1 : vector<1x32xf32>, vector<1x32xf32>, vector<1x32xf32>, vector<1x32xf32> -> vector<1x128xf32>
    %229 = tpu.concatenate %227, %227, %227, %227 in 1 : vector<1x32xf32>, vector<1x32xf32>, vector<1x32xf32>, vector<1x32xf32> -> vector<1x128xf32>
    %230 = vector.broadcast %228 : vector<1x128xf32> to vector<8x128xf32>
    %231 = arith.mulf %192, %230 : vector<8x128xf32>
    %232 = vector.broadcast %229 : vector<1x128xf32> to vector<8x128xf32>
    %233 = arith.addf %231, %232 : vector<8x128xf32>
    %cst_196 = arith.constant 0.000000e+00 : f32
    %234 = vector.broadcast %cst_196 : f32 to vector<8x128xf32>
    %235 = arith.maximumf %233, %234 : vector<8x128xf32>
    %cst_197 = arith.constant 0.000000e+00 : f32
    %236 = vector.broadcast %cst_197 : f32 to vector<1x128xf32>
    %c0_198 = arith.constant 0 : index
    %c0_199 = arith.constant 0 : index
    %237 = vector.load %arg32[%c0_198, %c0_199] : memref<80x128xf32, #tpu.memory_space<vmem>>, vector<1x128xf32>
    tpu.vector_store %arg32[%c0_198, %c0_199], %236 {strides = array<i32>} : memref<80x128xf32, #tpu.memory_space<vmem>>, vector<1x128xf32>,
    %c5_200 = arith.constant 5 : index
    %c0_201 = arith.constant 0 : index
    %238 = vector.load %arg32[%c5_200, %c0_201] : memref<80x128xf32, #tpu.memory_space<vmem>>, vector<1x128xf32>
    tpu.vector_store %arg32[%c5_200, %c0_201], %236 {strides = array<i32>} : memref<80x128xf32, #tpu.memory_space<vmem>>, vector<1x128xf32>,
    %239 = vector.extract_strided_slice %235 {offsets = [0, 0], sizes = [4, 128], strides = [1, 1]} : vector<8x128xf32> to vector<4x128xf32>
    %c1_202 = arith.constant 1 : index
    %c0_203 = arith.constant 0 : index
    %240 = vector.load %arg32[%c1_202, %c0_203] : memref<80x128xf32, #tpu.memory_space<vmem>>, vector<4x128xf32>
    tpu.vector_store %arg32[%c1_202, %c0_203], %239 {strides = array<i32>} : memref<80x128xf32, #tpu.memory_space<vmem>>, vector<4x128xf32>,
    %c8_204 = arith.constant 8 : index
    %c0_205 = arith.constant 0 : index
    %241 = vector.load %arg32[%c8_204, %c0_205] : memref<80x128xf32, #tpu.memory_space<vmem>>, vector<1x128xf32>
    tpu.vector_store %arg32[%c8_204, %c0_205], %236 {strides = array<i32>} : memref<80x128xf32, #tpu.memory_space<vmem>>, vector<1x128xf32>,
    %c13_206 = arith.constant 13 : index
    %c0_207 = arith.constant 0 : index
    %242 = vector.load %arg32[%c13_206, %c0_207] : memref<80x128xf32, #tpu.memory_space<vmem>>, vector<1x128xf32>
    tpu.vector_store %arg32[%c13_206, %c0_207], %236 {strides = array<i32>} : memref<80x128xf32, #tpu.memory_space<vmem>>, vector<1x128xf32>,
    %243 = vector.extract_strided_slice %235 {offsets = [4, 0], sizes = [4, 128], strides = [1, 1]} : vector<8x128xf32> to vector<4x128xf32>
    %c9_208 = arith.constant 9 : index
    %c0_209 = arith.constant 0 : index
    %244 = vector.load %arg32[%c9_208, %c0_209] : memref<80x128xf32, #tpu.memory_space<vmem>>, vector<4x128xf32>
    tpu.vector_store %arg32[%c9_208, %c0_209], %243 {strides = array<i32>} : memref<80x128xf32, #tpu.memory_space<vmem>>, vector<4x128xf32>,
    %c0_210 = arith.constant 0 : index
    %c0_211 = arith.constant 0 : index
    %245 = vector.load %arg32[%c0_210, %c0_211] : memref<80x128xf32, #tpu.memory_space<vmem>>, vector<12x128xf32>
    %246 = arith.truncf %245 : vector<12x128xf32> to vector<12x128xbf16>
    %c0_212 = arith.constant 0 : index
    %c0_213 = arith.constant 0 : index
    %c0_214 = arith.constant 0 : index
    %247 = vector.load %arg22[%c0_212, %c0_213, %c0_214] : memref<3x128x128xbf16, #tpu.memory_space<vmem>>, vector<1x128x128xbf16>
    %248 = vector.shape_cast %247 : vector<1x128x128xbf16> to vector<128x128xbf16>
    %cst_215 = arith.constant dense<0.000000e+00> : vector<12x128xf32>
    %249 = tpu.matmul %246, %248, %cst_215 {dimension_numbers = #tpu.dot_dimension_numbers<[1], [0], [0], [1], [0, 0, 1, 1], [], []>} : vector<12x128xbf16>, vector<128x128xbf16>, vector<12x128xf32> -> vector<12x128xf32>
    %c1_216 = arith.constant 1 : index
    %c0_217 = arith.constant 0 : index
    %250 = vector.load %arg32[%c1_216, %c0_217] : memref<80x128xf32, #tpu.memory_space<vmem>>, vector<12x128xf32>
    %251 = arith.truncf %250 : vector<12x128xf32> to vector<12x128xbf16>
    %c1_218 = arith.constant 1 : index
    %c0_219 = arith.constant 0 : index
    %c0_220 = arith.constant 0 : index
    %252 = vector.load %arg22[%c1_218, %c0_219, %c0_220] : memref<3x128x128xbf16, #tpu.memory_space<vmem>>, vector<1x128x128xbf16>
    %253 = vector.shape_cast %252 : vector<1x128x128xbf16> to vector<128x128xbf16>
    %cst_221 = arith.constant dense<0.000000e+00> : vector<12x128xf32>
    %254 = tpu.matmul %251, %253, %cst_221 {dimension_numbers = #tpu.dot_dimension_numbers<[1], [0], [0], [1], [0, 0, 1, 1], [], []>} : vector<12x128xbf16>, vector<128x128xbf16>, vector<12x128xf32> -> vector<12x128xf32>
    %255 = arith.addf %249, %254 : vector<12x128xf32>
    %c2_222 = arith.constant 2 : index
    %c0_223 = arith.constant 0 : index
    %256 = vector.load %arg32[%c2_222, %c0_223] : memref<80x128xf32, #tpu.memory_space<vmem>>, vector<12x128xf32>
    %257 = arith.truncf %256 : vector<12x128xf32> to vector<12x128xbf16>
    %c2_224 = arith.constant 2 : index
    %c0_225 = arith.constant 0 : index
    %c0_226 = arith.constant 0 : index
    %258 = vector.load %arg22[%c2_224, %c0_225, %c0_226] : memref<3x128x128xbf16, #tpu.memory_space<vmem>>, vector<1x128x128xbf16>
    %259 = vector.shape_cast %258 : vector<1x128x128xbf16> to vector<128x128xbf16>
    %cst_227 = arith.constant dense<0.000000e+00> : vector<12x128xf32>
    %260 = tpu.matmul %257, %259, %cst_227 {dimension_numbers = #tpu.dot_dimension_numbers<[1], [0], [0], [1], [0, 0, 1, 1], [], []>} : vector<12x128xbf16>, vector<128x128xbf16>, vector<12x128xf32> -> vector<12x128xf32>
    %261 = arith.addf %255, %260 : vector<12x128xf32>
    %262 = vector.extract_strided_slice %261 {offsets = [0, 0], sizes = [4, 128], strides = [1, 1]} : vector<12x128xf32> to vector<4x128xf32>
    %263 = vector.extract_strided_slice %261 {offsets = [8, 0], sizes = [4, 128], strides = [1, 1]} : vector<12x128xf32> to vector<4x128xf32>
    %264 = tpu.concatenate %262, %263 in 0 : vector<4x128xf32>, vector<4x128xf32> -> vector<8x128xf32>
    %cst_228 = arith.constant dense<0.000000e+00> : vector<128xf32>
    %265 = vector.multi_reduction <add>, %264, %cst_228 [0] : vector<8x128xf32> to vector<128xf32>
    %266 = vector.shape_cast %265 : vector<128xf32> to vector<1x128xf32>
    %267 = arith.mulf %264, %264 : vector<8x128xf32>
    %cst_229 = arith.constant dense<0.000000e+00> : vector<128xf32>
    %268 = vector.multi_reduction <add>, %267, %cst_229 [0] : vector<8x128xf32> to vector<128xf32>
    %269 = vector.shape_cast %268 : vector<128xf32> to vector<1x128xf32>
    %270 = vector.extract_strided_slice %266 {offsets = [0, 0], sizes = [1, 32], strides = [1, 1]} : vector<1x128xf32> to vector<1x32xf32>
    %271 = vector.extract_strided_slice %269 {offsets = [0, 0], sizes = [1, 32], strides = [1, 1]} : vector<1x128xf32> to vector<1x32xf32>
    %272 = vector.extract_strided_slice %266 {offsets = [0, 32], sizes = [1, 32], strides = [1, 1]} : vector<1x128xf32> to vector<1x32xf32>
    %273 = arith.addf %270, %272 : vector<1x32xf32>
    %274 = vector.extract_strided_slice %269 {offsets = [0, 32], sizes = [1, 32], strides = [1, 1]} : vector<1x128xf32> to vector<1x32xf32>
    %275 = arith.addf %271, %274 : vector<1x32xf32>
    %276 = vector.extract_strided_slice %266 {offsets = [0, 64], sizes = [1, 32], strides = [1, 1]} : vector<1x128xf32> to vector<1x32xf32>
    %277 = arith.addf %273, %276 : vector<1x32xf32>
    %278 = vector.extract_strided_slice %269 {offsets = [0, 64], sizes = [1, 32], strides = [1, 1]} : vector<1x128xf32> to vector<1x32xf32>
    %279 = arith.addf %275, %278 : vector<1x32xf32>
    %280 = vector.extract_strided_slice %266 {offsets = [0, 96], sizes = [1, 32], strides = [1, 1]} : vector<1x128xf32> to vector<1x32xf32>
    %281 = arith.addf %277, %280 : vector<1x32xf32>
    %282 = vector.extract_strided_slice %269 {offsets = [0, 96], sizes = [1, 32], strides = [1, 1]} : vector<1x128xf32> to vector<1x32xf32>
    %283 = arith.addf %279, %282 : vector<1x32xf32>
    %cst_230 = arith.constant 3.200000e+01 : f32
    %284 = vector.broadcast %cst_230 : f32 to vector<1x32xf32>
    %285 = arith.divf %281, %284 : vector<1x32xf32>
    %cst_231 = arith.constant 3.200000e+01 : f32
    %286 = vector.broadcast %cst_231 : f32 to vector<1x32xf32>
    %287 = arith.divf %283, %286 : vector<1x32xf32>
    %288 = arith.mulf %285, %285 : vector<1x32xf32>
    %289 = arith.subf %287, %288 : vector<1x32xf32>
    %cst_232 = arith.constant 0.000000e+00 : f32
    %290 = vector.broadcast %cst_232 : f32 to vector<1x32xf32>
    %291 = arith.maximumf %289, %290 : vector<1x32xf32>
    %c0_233 = arith.constant 0 : index
    %c0_234 = arith.constant 0 : index
    %292 = vector.load %arg23[%c0_233, %c0_234] : memref<1x32xf32, #tpu.memory_space<vmem>>, vector<1x32xf32>
    %cst_235 = arith.constant 9.99999974E-6 : f32
    %293 = vector.broadcast %cst_235 : f32 to vector<1x32xf32>
    %294 = arith.addf %291, %293 : vector<1x32xf32>
    %295 = math.rsqrt %294 : vector<1x32xf32>
    %296 = arith.mulf %292, %295 : vector<1x32xf32>
    %c0_236 = arith.constant 0 : index
    %c0_237 = arith.constant 0 : index
    %297 = vector.load %arg24[%c0_236, %c0_237] : memref<1x32xf32, #tpu.memory_space<vmem>>, vector<1x32xf32>
    %298 = arith.mulf %285, %296 : vector<1x32xf32>
    %299 = arith.subf %297, %298 : vector<1x32xf32>
    %300 = tpu.concatenate %296, %296, %296, %296 in 1 : vector<1x32xf32>, vector<1x32xf32>, vector<1x32xf32>, vector<1x32xf32> -> vector<1x128xf32>
    %301 = tpu.concatenate %299, %299, %299, %299 in 1 : vector<1x32xf32>, vector<1x32xf32>, vector<1x32xf32>, vector<1x32xf32> -> vector<1x128xf32>
    %302 = vector.broadcast %300 : vector<1x128xf32> to vector<8x128xf32>
    %303 = arith.mulf %264, %302 : vector<8x128xf32>
    %304 = vector.broadcast %301 : vector<1x128xf32> to vector<8x128xf32>
    %305 = arith.addf %303, %304 : vector<8x128xf32>
    %cst_238 = arith.constant 0.000000e+00 : f32
    %306 = vector.broadcast %cst_238 : f32 to vector<8x128xf32>
    %307 = arith.maximumf %305, %306 : vector<8x128xf32>
    %c0_239 = arith.constant 0 : index
    %c0_240 = arith.constant 0 : index
    %308 = vector.load %arg25[%c0_239, %c0_240] : memref<4x8xf32, #tpu.memory_space<vmem>>, vector<4x8xf32>
    %cst_241 = arith.constant dense<0.000000e+00> : vector<4x128xf32>
    %309 = tpu.matmul %308, %307, %cst_241 {dimension_numbers = #tpu.dot_dimension_numbers<[1], [0], [0], [1], [0, 0, 1, 1], [], []>} : vector<4x8xf32>, vector<8x128xf32>, vector<4x128xf32> -> vector<4x128xf32>
    %c0_242 = arith.constant 0 : index
    %c0_243 = arith.constant 0 : index
    %310 = vector.load %arg26[%c0_242, %c0_243] : memref<4x8xf32, #tpu.memory_space<vmem>>, vector<4x8xf32>
    %cst_244 = arith.constant dense<0.000000e+00> : vector<4x128xf32>
    %311 = tpu.matmul %310, %307, %cst_244 {dimension_numbers = #tpu.dot_dimension_numbers<[1], [0], [0], [1], [0, 0, 1, 1], [], []>} : vector<4x8xf32>, vector<8x128xf32>, vector<4x128xf32> -> vector<4x128xf32>
    %312 = arith.maximumf %309, %311 : vector<4x128xf32>
    %313 = vector.extract_strided_slice %312 {offsets = [0, 0], sizes = [2, 128], strides = [1, 1]} : vector<4x128xf32> to vector<2x128xf32>
    %c0_245 = arith.constant 0 : index
    %c0_246 = arith.constant 0 : index
    %314 = vector.load %arg32[%c0_245, %c0_246] : memref<80x128xf32, #tpu.memory_space<vmem>>, vector<2x128xf32>
    tpu.vector_store %arg32[%c0_245, %c0_246], %313 {strides = array<i32>} : memref<80x128xf32, #tpu.memory_space<vmem>>, vector<2x128xf32>,
    %315 = vector.extract_strided_slice %312 {offsets = [2, 0], sizes = [2, 128], strides = [1, 1]} : vector<4x128xf32> to vector<2x128xf32>
    %c8_247 = arith.constant 8 : index
    %c0_248 = arith.constant 0 : index
    %316 = vector.load %arg32[%c8_247, %c0_248] : memref<80x128xf32, #tpu.memory_space<vmem>>, vector<2x128xf32>
    tpu.vector_store %arg32[%c8_247, %c0_248], %315 {strides = array<i32>} : memref<80x128xf32, #tpu.memory_space<vmem>>, vector<2x128xf32>,
    %c0_249 = arith.constant 0 : index
    %c0_250 = arith.constant 0 : index
    %317 = vector.load %arg32[%c0_249, %c0_250] : memref<80x128xf32, #tpu.memory_space<vmem>>, vector<9x128xf32>
    %318 = arith.truncf %317 : vector<9x128xf32> to vector<9x128xbf16>
    %c0_251 = arith.constant 0 : index
    %c0_252 = arith.constant 0 : index
    %c0_253 = arith.constant 0 : index
    %319 = vector.load %arg27[%c0_251, %c0_252, %c0_253] : memref<2x128x96xbf16, #tpu.memory_space<vmem>>, vector<1x128x96xbf16>
    %320 = vector.shape_cast %319 : vector<1x128x96xbf16> to vector<128x96xbf16>
    %cst_254 = arith.constant dense<0.000000e+00> : vector<9x96xf32>
    %321 = tpu.matmul %318, %320, %cst_254 {dimension_numbers = #tpu.dot_dimension_numbers<[1], [0], [0], [1], [0, 0, 1, 1], [], []>} : vector<9x128xbf16>, vector<128x96xbf16>, vector<9x96xf32> -> vector<9x96xf32>
    %c1_255 = arith.constant 1 : index
    %c0_256 = arith.constant 0 : index
    %322 = vector.load %arg32[%c1_255, %c0_256] : memref<80x128xf32, #tpu.memory_space<vmem>>, vector<9x128xf32>
    %323 = arith.truncf %322 : vector<9x128xf32> to vector<9x128xbf16>
    %c1_257 = arith.constant 1 : index
    %c0_258 = arith.constant 0 : index
    %c0_259 = arith.constant 0 : index
    %324 = vector.load %arg27[%c1_257, %c0_258, %c0_259] : memref<2x128x96xbf16, #tpu.memory_space<vmem>>, vector<1x128x96xbf16>
    %325 = vector.shape_cast %324 : vector<1x128x96xbf16> to vector<128x96xbf16>
    %cst_260 = arith.constant dense<0.000000e+00> : vector<9x96xf32>
    %326 = tpu.matmul %323, %325, %cst_260 {dimension_numbers = #tpu.dot_dimension_numbers<[1], [0], [0], [1], [0, 0, 1, 1], [], []>} : vector<9x128xbf16>, vector<128x96xbf16>, vector<9x96xf32> -> vector<9x96xf32>
    %327 = arith.addf %321, %326 : vector<9x96xf32>
    %328 = vector.extract_strided_slice %327 {offsets = [0, 0], sizes = [1, 96], strides = [1, 1]} : vector<9x96xf32> to vector<1x96xf32>
    %329 = vector.extract_strided_slice %327 {offsets = [8, 0], sizes = [1, 96], strides = [1, 1]} : vector<9x96xf32> to vector<1x96xf32>
    %330 = tpu.concatenate %328, %329 in 0 : vector<1x96xf32>, vector<1x96xf32> -> vector<2x96xf32>
    %c0_261 = arith.constant 0 : index
    %c0_262 = arith.constant 0 : index
    %331 = vector.load %arg28[%c0_261, %c0_262] : memref<1x96xf32, #tpu.memory_space<vmem>>, vector<1x96xf32>
    %332 = vector.broadcast %331 : vector<1x96xf32> to vector<2x96xf32>
    %333 = arith.addf %330, %332 : vector<2x96xf32>
    %cst_263 = arith.constant 0.000000e+00 : f32
    %334 = vector.broadcast %cst_263 : f32 to vector<2x96xf32>
    %335 = arith.maximumf %333, %334 : vector<2x96xf32>
    %c0_264 = arith.constant 0 : index
    %c0_265 = arith.constant 0 : index
    %336 = vector.load %arg29[%c0_264, %c0_265] : memref<96x128xf32, #tpu.memory_space<vmem>>, vector<96x128xf32>
    %cst_266 = arith.constant dense<0.000000e+00> : vector<2x128xf32>
    %337 = tpu.matmul %335, %336, %cst_266 {dimension_numbers = #tpu.dot_dimension_numbers<[1], [0], [0], [1], [0, 0, 1, 1], [], []>} : vector<2x96xf32>, vector<96x128xf32>, vector<2x128xf32> -> vector<2x128xf32>
    %c0_267 = arith.constant 0 : index
    %c0_268 = arith.constant 0 : index
    %338 = vector.load %arg30[%c0_267, %c0_268] : memref<1x128xf32, #tpu.memory_space<vmem>>, vector<1x128xf32>
    %339 = vector.broadcast %338 : vector<1x128xf32> to vector<2x128xf32>
    %340 = arith.addf %337, %339 : vector<2x128xf32>
    %c0_269 = arith.constant 0 : index
    %c0_270 = arith.constant 0 : index
    %341 = vector.load %arg31[%c0_269, %c0_270] : memref<2x128xf32, #tpu.memory_space<vmem>>, vector<2x128xf32>
    tpu.vector_store %arg31[%c0_269, %c0_270], %340 {strides = array<i32>} : memref<2x128xf32, #tpu.memory_space<vmem>>, vector<2x128xf32>,
    return
  }
}

</mosaic_0001>

<llo_original>
// kernel: _forward_jit.1
$region0: #{_forward_jit.1}
  #allocation0 [shape = 'u32[]', space=smem, size = 0x4, offset = 0x4, fixed_abs, tag = 'smem constant byte address 0x4 - core index']
  #allocation1 [shape = 'u32[144,128]{1,0:T(1,128)}', space=vmem, size = 0x12000, scoped, tag = 'internal scratch']
  #allocation2 [shape = 'f32[80,128]{1,0:T(8,128)}', space=vmem, size = 0xa000, scoped, tag = 'scratch operand']
  %s0 = inlined_call_operand.smem [shape: u32[32], index: -1, kind: input, shape index: {}]
  %s1 = sld [smem:[%s0]]
  %s2 = scalar_lea.smem %s0, 1
  %s3 = sld [smem:[%s2]]
  %s4 = scalar_lea.smem %s0, 2
  %s5 = sld [smem:[%s4]]
  %s6 = scalar_lea.smem %s0, 3
  %s7 = sld [smem:[%s6]]
  %s8 = scalar_lea.smem %s0, 4
  %s9 = sld [smem:[%s8]]
  %s10 = scalar_lea.smem %s0, 5
  %s11 = sld [smem:[%s10]]
  %s12 = scalar_lea.smem %s0, 6
  %s13 = sld [smem:[%s12]]
  %s14 = scalar_lea.smem %s0, 7
  %s15 = sld [smem:[%s14]]
  %s16 = scalar_lea.smem %s0, 8
  %s17 = sld [smem:[%s16]]
  %s18 = scalar_lea.smem %s0, 9
  %s19 = sld [smem:[%s18]]
  %s20 = scalar_lea.smem %s0, 10
  %s21 = sld [smem:[%s20]]
  %s22 = scalar_lea.smem %s0, 11
  %s23 = sld [smem:[%s22]]
  %s24 = scalar_lea.smem %s0, 12
  %s25 = sld [smem:[%s24]]
  %s26 = scalar_lea.smem %s0, 13
  %s27 = sld [smem:[%s26]]
  %s28 = scalar_lea.smem %s0, 14
  %s29 = sld [smem:[%s28]]
  %s30 = scalar_lea.smem %s0, 15
  %s31 = sld [smem:[%s30]]
  %s32 = scalar_lea.smem %s0, 16
  %s33 = sld [smem:[%s32]]
  %s34 = scalar_lea.smem %s0, 17
  %s35 = sld [smem:[%s34]]
  %s36 = scalar_lea.smem %s0, 18
  %s37 = sld [smem:[%s36]]
  %s38 = scalar_lea.smem %s0, 19
  %s39 = sld [smem:[%s38]]
  %s40 = scalar_lea.smem %s0, 20
  %s41 = sld [smem:[%s40]]
  %s42 = scalar_lea.smem %s0, 21
  %s43 = sld [smem:[%s42]]
  %s44 = scalar_lea.smem %s0, 22
  %s45 = sld [smem:[%s44]]
  %s46 = scalar_lea.smem %s0, 23
  %s47 = sld [smem:[%s46]]
  %s48 = scalar_lea.smem %s0, 24
  %s49 = sld [smem:[%s48]]
  %s50 = scalar_lea.smem %s0, 25
  %s51 = sld [smem:[%s50]]
  %s52 = scalar_lea.smem %s0, 26
  %s53 = sld [smem:[%s52]]
  %s54 = scalar_lea.smem %s0, 27
  %s55 = sld [smem:[%s54]]
  %s56 = scalar_lea.smem %s0, 28
  %s57 = sld [smem:[%s56]]
  %s58 = scalar_lea.smem %s0, 29
  %s59 = sld [smem:[%s58]]
  %s60 = scalar_lea.smem %s0, 30
  %s61 = sld [smem:[%s60]]
  %s62 = scalar_lea.smem %s0, 31
  %s63 = sld [smem:[%s62]]
  %s64 = sld [smem:[#allocation0]]
  $region222: #{_forward_jit.1} parent=0
    _
  %s66 = ssub.s32 1, %s64
  %s67 = scalar_select 0, %s66, %s64
  $region1: #{_forward_jit.1} parent=0
    #allocation3 [shape = 'u8[12288]{0}', space=vmem, size = 0x3000, scoped, tag = 'input window, operand 1, single buffered']
    #allocation4 [shape = 's32[1]{0}', space=sflag, size = 0x4, scoped, tag = 'scoped memory for _forward_jit.1']
    #allocation5 [shape = 'u8[512]{0}', space=vmem, size = 0x400, scoped, tag = 'input window, operand 2, single buffered']
    #allocation6 [shape = 's32[1]{0}', space=sflag, size = 0x4, scoped, tag = 'scoped memory for _forward_jit.1']
    #allocation7 [shape = 'u8[16384]{0}', space=vmem, size = 0x4000, scoped, tag = 'input window, operand 3, single buffered']
    #allocation8 [shape = 'u8[32768]{0}', space=vmem, size = 0x8000, scoped, tag = 'input window, operand 5, single buffered']
    #allocation9 [shape = 's32[1]{0}', space=sflag, size = 0x4, scoped, tag = 'scoped memory for _forward_jit.1']
    #allocation10 [shape = 'u8[32768]{0}', space=vmem, size = 0x8000, scoped, tag = 'input window, operand 6, single buffered']
    #allocation11 [shape = 'u8[24576]{0}', space=vmem, size = 0x6000, scoped, tag = 'input window, operand 7, single buffered']
    #allocation12 [shape = 's32[1]{0}', space=sflag, size = 0x4, scoped, tag = 'scoped memory for _forward_jit.1']
    #allocation13 [shape = 'u8[512]{0}', space=vmem, size = 0x400, scoped, tag = 'input window, operand 8, single buffered']
    #allocation14 [shape = 'u8[8192]{0}', space=vmem, size = 0x2000, scoped, tag = 'input window, operand 9, single buffered']
    #allocation15 [shape = 's32[1]{0}', space=sflag, size = 0x4, scoped, tag = 'scoped memory for _forward_jit.1']
    #allocation16 [shape = 'u8[8192]{0}', space=vmem, size = 0x2000, scoped, tag = 'input window, operand 10, single buffered']
    #allocation17 [shape = 'u8[32768]{0}', space=vmem, size = 0x8000, scoped, tag = 'input window, operand 11, single buffered']
    #allocation18 [shape = 's32[1]{0}', space=sflag, size = 0x4, scoped, tag = 'scoped memory for _forward_jit.1']
    #allocation19 [shape = 'u8[32768]{0}', space=vmem, size = 0x8000, scoped, tag = 'input window, operand 12, single buffered']
    #allocation20 [shape = 'u8[24576]{0}', space=vmem, size = 0x6000, scoped, tag = 'input window, operand 13, single buffered']
    #allocation21 [shape = 's32[1]{0}', space=sflag, size = 0x4, scoped, tag = 'scoped memory for _forward_jit.1']
    #allocation22 [shape = 'u8[512]{0}', space=vmem, size = 0x400, scoped, tag = 'input window, operand 14, single buffered']
    #allocation23 [shape = 'u8[49152]{0}', space=vmem, size = 0xc000, scoped, tag = 'input window, operand 15, single buffered']
    #allocation24 [shape = 's32[1]{0}', space=sflag, size = 0x4, scoped, tag = 'scoped memory for _forward_jit.1']
    #allocation25 [shape = 'u8[512]{0}', space=vmem, size = 0x400, scoped, tag = 'input window, operand 16, single buffered']
    #allocation26 [shape = 'u8[4096]{0}', space=vmem, size = 0x1000, scoped, tag = 'input window, operand 17, single buffered']
    #allocation27 [shape = 's32[1]{0}', space=sflag, size = 0x4, scoped, tag = 'scoped memory for _forward_jit.1']
    #allocation28 [shape = 'u8[49152]{0}', space=vmem, size = 0xc000, scoped, tag = 'input window, operand 19, single buffered']
    #allocation29 [shape = 'u8[2048]{0}', space=vmem, size = 0x800, scoped, tag = 'input window, operand 25, single buffered']
    #allocation30 [shape = 's32[1]{0}', space=sflag, size = 0x4, scoped, tag = 'scoped memory for _forward_jit.1']
    #allocation31 [shape = 'u8[65536]{0}', space=vmem, size = 0x10000, scoped, tag = 'input window, operand 27, single buffered']
    #allocation32 [shape = 'u8[512]{0}', space=vmem, size = 0x400, scoped, tag = 'input window, operand 28, single buffered']
    #allocation33 [shape = 's32[1]{0}', space=sflag, size = 0x4, scoped, tag = 'scoped memory for _forward_jit.1']
    #allocation34 [shape = 'u8[49152]{0}', space=vmem, size = 0xc000, scoped, tag = 'input window, operand 29, single buffered']
    #allocation35 [shape = 'u8[512]{0}', space=vmem, size = 0x400, scoped, tag = 'input window, operand 30, single buffered']
    #allocation36 [shape = 's32[1]{0}', space=sflag, size = 0x4, scoped, tag = 'scoped memory for _forward_jit.1']
    %68 = vsyncpa [#allocation4], 0
    %69 = vsyncpa [#allocation6], 0
    %70 = vsyncpa [#allocation9], 0
    %71 = vsyncpa [#allocation12], 0
    %72 = vsyncpa [#allocation15], 0
    %73 = vsyncpa [#allocation18], 0
    %74 = vsyncpa [#allocation21], 0
    %75 = vsyncpa [#allocation24], 0
    %76 = vsyncpa [#allocation27], 0
    %77 = vsyncpa [#allocation30], 0
    %78 = vsyncpa [#allocation33], 0
    %79 = vsyncpa [#allocation36], 0
    // Predicated region
    $region2: #{_forward_jit.1} parent=1 // pred_check
      _
    $region3: #{_forward_jit.1} parent=1 // pred_check_branch
      %81 = sbr.rel (0) target = $region5
    $region4: #{_forward_jit.1} parent=1 // pred_region
      _
    $region5: #{_forward_jit.1} parent=1 // pred_fallthru
      _
    // Predicated region
    $region6: #{_forward_jit.1} parent=1 // pred_check
      _
    $region7: #{_forward_jit.1} parent=1 // pred_check_branch
      %83 = sbr.rel (0) target = $region9
    $region8: #{_forward_jit.1} parent=1 // pred_region
      %s85 = ssub.s32 384, 384
      %86 = vsyncadd [#allocation4], %s85
      %s87 = sshll.u32 [#allocation3], 4
      %s88 = int_to_ptr.vmem [resolvable:$true] %s87
      %93 = dma.hbm_to_vmem [thread:$0]  %s3, 384, %s88, [#allocation4], 64, 64, 4
    $region9: #{_forward_jit.1} parent=1 // pred_fallthru
      _
    // Predicated region
    $region10: #{_forward_jit.1} parent=1 // pred_check
      _
    $region11: #{_forward_jit.1} parent=1 // pred_check_branch
      %95 = sbr.rel (0) target = $region13
    $region12: #{_forward_jit.1} parent=1 // pred_region
      %s97 = ssub.s32 16, 16
      %98 = vsyncadd [#allocation6], %s97
      %s100 = sshll.u32 [#allocation5], 4
      %s101 = int_to_ptr.vmem [resolvable:$true] %s100
      %103 = dma.hbm_to_vmem [thread:$0]  %s5, 16, %s101, [#allocation6]
    $region13: #{_forward_jit.1} parent=1 // pred_fallthru
      _
    // Predicated region
    $region14: #{_forward_jit.1} parent=1 // pred_check
      _
    $region15: #{_forward_jit.1} parent=1 // pred_check_branch
      %105 = sbr.rel (0) target = $region17
    $region16: #{_forward_jit.1} parent=1 // pred_region
      %s107 = ssub.s32 512, 512
      %108 = vsyncadd [#allocation6], %s107
      %s109 = sshll.u32 [#allocation7], 4
      %s110 = int_to_ptr.vmem [resolvable:$true] %s109
      %115 = dma.hbm_to_vmem [thread:$0]  %s7, 512, %s110, [#allocation6], 128, 128, 8
    $region17: #{_forward_jit.1} parent=1 // pred_fallthru
      _
    // Predicated region
    $region18: #{_forward_jit.1} parent=1 // pred_check
      _
    $region19: #{_forward_jit.1} parent=1 // pred_check_branch
      %117 = sbr.rel (0) target = $region21
    $region20: #{_forward_jit.1} parent=1 // pred_region
      _
    $region21: #{_forward_jit.1} parent=1 // pred_fallthru
      _
    // Predicated region
    $region22: #{_forward_jit.1} parent=1 // pred_check
      _
    $region23: #{_forward_jit.1} parent=1 // pred_check_branch
      %119 = sbr.rel (0) target = $region25
    $region24: #{_forward_jit.1} parent=1 // pred_region
      %s121 = ssub.s32 1024, 1024
      %122 = vsyncadd [#allocation9], %s121
      %s123 = sshll.u32 [#allocation8], 4
      %s124 = int_to_ptr.vmem [resolvable:$true] %s123
      %129 = dma.hbm_to_vmem [thread:$0]  %s11, 1024, %s124, [#allocation9], 128, 128, 8
    $region25: #{_forward_jit.1} parent=1 // pred_fallthru
      _
    // Predicated region
    $region26: #{_forward_jit.1} parent=1 // pred_check
      _
    $region27: #{_forward_jit.1} parent=1 // pred_check_branch
      %131 = sbr.rel (0) target = $region29
    $region28: #{_forward_jit.1} parent=1 // pred_region
      %s133 = ssub.s32 1024, 1024
      %134 = vsyncadd [#allocation9], %s133
      %s135 = sshll.u32 [#allocation10], 4
      %s136 = int_to_ptr.vmem [resolvable:$true] %s135
      %141 = dma.hbm_to_vmem [thread:$0]  %s13, 1024, %s136, [#allocation9], 128, 128, 8
    $region29: #{_forward_jit.1} parent=1 // pred_fallthru
      _
    // Predicated region
    $region30: #{_forward_jit.1} parent=1 // pred_check
      _
    $region31: #{_forward_jit.1} parent=1 // pred_check_branch
      %143 = sbr.rel (0) target = $region33
    $region32: #{_forward_jit.1} parent=1 // pred_region
      %s145 = ssub.s32 768, 768
      %146 = vsyncadd [#allocation12], %s145
      %s147 = sshll.u32 [#allocation11], 4
      %s148 = int_to_ptr.vmem [resolvable:$true] %s147
      %153 = dma.hbm_to_vmem [thread:$0]  %s15, 768, %s148, [#allocation12], 64, 64, 4
    $region33: #{_forward_jit.1} parent=1 // pred_fallthru
      _
    // Predicated region
    $region34: #{_forward_jit.1} parent=1 // pred_check
      _
    $region35: #{_forward_jit.1} parent=1 // pred_check_branch
      %155 = sbr.rel (0) target = $region37
    $region36: #{_forward_jit.1} parent=1 // pred_region
      %s157 = ssub.s32 16, 16
      %158 = vsyncadd [#allocation12], %s157
      %s160 = sshll.u32 [#allocation13], 4
      %s161 = int_to_ptr.vmem [resolvable:$true] %s160
      %163 = dma.hbm_to_vmem [thread:$0]  %s17, 16, %s161, [#allocation12]
    $region37: #{_forward_jit.1} parent=1 // pred_fallthru
      _
    // Predicated region
    $region38: #{_forward_jit.1} parent=1 // pred_check
      _
    $region39: #{_forward_jit.1} parent=1 // pred_check_branch
      %165 = sbr.rel (0) target = $region41
    $region40: #{_forward_jit.1} parent=1 // pred_region
      %s167 = ssub.s32 256, 256
      %168 = vsyncadd [#allocation15], %s167
      %s169 = sshll.u32 [#allocation14], 4
      %s170 = int_to_ptr.vmem [resolvable:$true] %s169
      %175 = dma.hbm_to_vmem [thread:$0]  %s19, 256, %s170, [#allocation15], 128, 128, 8
    $region41: #{_forward_jit.1} parent=1 // pred_fallthru
      _
    // Predicated region
    $region42: #{_forward_jit.1} parent=1 // pred_check
      _
    $region43: #{_forward_jit.1} parent=1 // pred_check_branch
      %177 = sbr.rel (0) target = $region45
    $region44: #{_forward_jit.1} parent=1 // pred_region
      %s179 = ssub.s32 256, 256
      %180 = vsyncadd [#allocation15], %s179
      %s181 = sshll.u32 [#allocation16], 4
      %s182 = int_to_ptr.vmem [resolvable:$true] %s181
      %187 = dma.hbm_to_vmem [thread:$0]  %s21, 256, %s182, [#allocation15], 128, 128, 8
    $region45: #{_forward_jit.1} parent=1 // pred_fallthru
      _
    // Predicated region
    $region46: #{_forward_jit.1} parent=1 // pred_check
      _
    $region47: #{_forward_jit.1} parent=1 // pred_check_branch
      %189 = sbr.rel (0) target = $region49
    $region48: #{_forward_jit.1} parent=1 // pred_region
      %s191 = ssub.s32 1024, 1024
      %192 = vsyncadd [#allocation18], %s191
      %s193 = sshll.u32 [#allocation17], 4
      %s194 = int_to_ptr.vmem [resolvable:$true] %s193
      %199 = dma.hbm_to_vmem [thread:$0]  %s23, 1024, %s194, [#allocation18], 128, 128, 8
    $region49: #{_forward_jit.1} parent=1 // pred_fallthru
      _
    // Predicated region
    $region50: #{_forward_jit.1} parent=1 // pred_check
      _
    $region51: #{_forward_jit.1} parent=1 // pred_check_branch
      %201 = sbr.rel (0) target = $region53
    $region52: #{_forward_jit.1} parent=1 // pred_region
      %s203 = ssub.s32 1024, 1024
      %204 = vsyncadd [#allocation18], %s203
      %s205 = sshll.u32 [#allocation19], 4
      %s206 = int_to_ptr.vmem [resolvable:$true] %s205
      %211 = dma.hbm_to_vmem [thread:$0]  %s25, 1024, %s206, [#allocation18], 128, 128, 8
    $region53: #{_forward_jit.1} parent=1 // pred_fallthru
      _
    // Predicated region
    $region54: #{_forward_jit.1} parent=1 // pred_check
      _
    $region55: #{_forward_jit.1} parent=1 // pred_check_branch
      %213 = sbr.rel (0) target = $region57
    $region56: #{_forward_jit.1} parent=1 // pred_region
      %s215 = ssub.s32 768, 768
      %216 = vsyncadd [#allocation21], %s215
      %s217 = sshll.u32 [#allocation20], 4
      %s218 = int_to_ptr.vmem [resolvable:$true] %s217
      %223 = dma.hbm_to_vmem [thread:$0]  %s27, 768, %s218, [#allocation21], 64, 64, 4
    $region57: #{_forward_jit.1} parent=1 // pred_fallthru
      _
    // Predicated region
    $region58: #{_forward_jit.1} parent=1 // pred_check
      _
    $region59: #{_forward_jit.1} parent=1 // pred_check_branch
      %225 = sbr.rel (0) target = $region61
    $region60: #{_forward_jit.1} parent=1 // pred_region
      %s227 = ssub.s32 16, 16
      %228 = vsyncadd [#allocation21], %s227
      %s230 = sshll.u32 [#allocation22], 4
      %s231 = int_to_ptr.vmem [resolvable:$true] %s230
      %233 = dma.hbm_to_vmem [thread:$0]  %s29, 16, %s231, [#allocation21]
    $region61: #{_forward_jit.1} parent=1 // pred_fallthru
      _
    // Predicated region
    $region62: #{_forward_jit.1} parent=1 // pred_check
      _
    $region63: #{_forward_jit.1} parent=1 // pred_check_branch
      %235 = sbr.rel (0) target = $region65
    $region64: #{_forward_jit.1} parent=1 // pred_region
      %s237 = ssub.s32 1536, 1536
      %238 = vsyncadd [#allocation24], %s237
      %s239 = sshll.u32 [#allocation23], 4
      %s240 = int_to_ptr.vmem [resolvable:$true] %s239
      %245 = dma.hbm_to_vmem [thread:$0]  %s31, 1536, %s240, [#allocation24], 64, 64, 4
    $region65: #{_forward_jit.1} parent=1 // pred_fallthru
      _
    // Predicated region
    $region66: #{_forward_jit.1} parent=1 // pred_check
      _
    $region67: #{_forward_jit.1} parent=1 // pred_check_branch
      %247 = sbr.rel (0) target = $region69
    $region68: #{_forward_jit.1} parent=1 // pred_region
      %s249 = ssub.s32 16, 16
      %250 = vsyncadd [#allocation24], %s249
      %s252 = sshll.u32 [#allocation25], 4
      %s253 = int_to_ptr.vmem [resolvable:$true] %s252
      %255 = dma.hbm_to_vmem [thread:$0]  %s33, 16, %s253, [#allocation24]
    $region69: #{_forward_jit.1} parent=1 // pred_fallthru
      _
    // Predicated region
    $region70: #{_forward_jit.1} parent=1 // pred_check
      _
    $region71: #{_forward_jit.1} parent=1 // pred_check_branch
      %257 = sbr.rel (0) target = $region73
    $region72: #{_forward_jit.1} parent=1 // pred_region
      %s259 = ssub.s32 128, 128
      %260 = vsyncadd [#allocation27], %s259
      %s262 = sshll.u32 [#allocation26], 4
      %s263 = int_to_ptr.vmem [resolvable:$true] %s262
      %265 = dma.hbm_to_vmem [thread:$0]  %s35, 128, %s263, [#allocation27]
    $region73: #{_forward_jit.1} parent=1 // pred_fallthru
      _
    // Predicated region
    $region74: #{_forward_jit.1} parent=1 // pred_check
      _
    $region75: #{_forward_jit.1} parent=1 // pred_check_branch
      %267 = sbr.rel (0) target = $region77
    $region76: #{_forward_jit.1} parent=1 // pred_region
      _
    $region77: #{_forward_jit.1} parent=1 // pred_fallthru
      _
    // Predicated region
    $region78: #{_forward_jit.1} parent=1 // pred_check
      _
    $region79: #{_forward_jit.1} parent=1 // pred_check_branch
      %269 = sbr.rel (0) target = $region81
    $region80: #{_forward_jit.1} parent=1 // pred_region
      %s271 = ssub.s32 1536, 1536
      %272 = vsyncadd [#allocation27], %s271
      %s273 = sshll.u32 [#allocation28], 4
      %s274 = int_to_ptr.vmem [resolvable:$true] %s273
      %279 = dma.hbm_to_vmem [thread:$0]  %s39, 1536, %s274, [#allocation27], 64, 64, 4
    $region81: #{_forward_jit.1} parent=1 // pred_fallthru
      _
    // Predicated region
    $region82: #{_forward_jit.1} parent=1 // pred_check
      _
    $region83: #{_forward_jit.1} parent=1 // pred_check_branch
      %281 = sbr.rel (0) target = $region85
    $region84: #{_forward_jit.1} parent=1 // pred_region
      _
    $region85: #{_forward_jit.1} parent=1 // pred_fallthru
      _
    // Predicated region
    $region86: #{_forward_jit.1} parent=1 // pred_check
      _
    $region87: #{_forward_jit.1} parent=1 // pred_check_branch
      %283 = sbr.rel (0) target = $region89
    $region88: #{_forward_jit.1} parent=1 // pred_region
      _
    $region89: #{_forward_jit.1} parent=1 // pred_fallthru
      _
    // Predicated region
    $region90: #{_forward_jit.1} parent=1 // pred_check
      _
    $region91: #{_forward_jit.1} parent=1 // pred_check_branch
      %285 = sbr.rel (0) target = $region93
    $region92: #{_forward_jit.1} parent=1 // pred_region
      _
    $region93: #{_forward_jit.1} parent=1 // pred_fallthru
      _
    // Predicated region
    $region94: #{_forward_jit.1} parent=1 // pred_check
      _
    $region95: #{_forward_jit.1} parent=1 // pred_check_branch
      %287 = sbr.rel (0) target = $region97
    $region96: #{_forward_jit.1} parent=1 // pred_region
      _
    $region97: #{_forward_jit.1} parent=1 // pred_fallthru
      _
    // Predicated region
    $region98: #{_forward_jit.1} parent=1 // pred_check
      _
    $region99: #{_forward_jit.1} parent=1 // pred_check_branch
      %289 = sbr.rel (0) target = $region101
    $region100: #{_forward_jit.1} parent=1 // pred_region
      _
    $region101: #{_forward_jit.1} parent=1 // pred_fallthru
      _
    // Predicated region
    $region102: #{_forward_jit.1} parent=1 // pred_check
      _
    $region103: #{_forward_jit.1} parent=1 // pred_check_branch
      %291 = sbr.rel (0) target = $region105
    $region104: #{_forward_jit.1} parent=1 // pred_region
      %s293 = ssub.s32 64, 64
      %294 = vsyncadd [#allocation30], %s293
      %s296 = sshll.u32 [#allocation29], 4
      %s297 = int_to_ptr.vmem [resolvable:$true] %s296
      %299 = dma.hbm_to_vmem [thread:$0]  %s51, 64, %s297, [#allocation30]
    $region105: #{_forward_jit.1} parent=1 // pred_fallthru
      _
    // Predicated region
    $region106: #{_forward_jit.1} parent=1 // pred_check
      _
    $region107: #{_forward_jit.1} parent=1 // pred_check_branch
      %301 = sbr.rel (0) target = $region109
    $region108: #{_forward_jit.1} parent=1 // pred_region
      _
    $region109: #{_forward_jit.1} parent=1 // pred_fallthru
      _
    // Predicated region
    $region110: #{_forward_jit.1} parent=1 // pred_check
      _
    $region111: #{_forward_jit.1} parent=1 // pred_check_branch
      %303 = sbr.rel (0) target = $region113
    $region112: #{_forward_jit.1} parent=1 // pred_region
      %s305 = ssub.s32 2048, 2048
      %306 = vsyncadd [#allocation30], %s305
      %s307 = sshll.u32 [#allocation31], 4
      %s308 = int_to_ptr.vmem [resolvable:$true] %s307
      %313 = dma.hbm_to_vmem [thread:$0]  %s55, 2048, %s308, [#allocation30], 64, 64, 4
    $region113: #{_forward_jit.1} parent=1 // pred_fallthru
      _
    // Predicated region
    $region114: #{_forward_jit.1} parent=1 // pred_check
      _
    $region115: #{_forward_jit.1} parent=1 // pred_check_branch
      %315 = sbr.rel (0) target = $region117
    $region116: #{_forward_jit.1} parent=1 // pred_region
      %s317 = ssub.s32 16, 16
      %318 = vsyncadd [#allocation33], %s317
      %s320 = sshll.u32 [#allocation32], 4
      %s321 = int_to_ptr.vmem [resolvable:$true] %s320
      %323 = dma.hbm_to_vmem [thread:$0]  %s57, 16, %s321, [#allocation33]
    $region117: #{_forward_jit.1} parent=1 // pred_fallthru
      _
    // Predicated region
    $region118: #{_forward_jit.1} parent=1 // pred_check
      _
    $region119: #{_forward_jit.1} parent=1 // pred_check_branch
      %325 = sbr.rel (0) target = $region121
    $region120: #{_forward_jit.1} parent=1 // pred_region
      %s327 = ssub.s32 1536, 1536
      %328 = vsyncadd [#allocation33], %s327
      %s329 = sshll.u32 [#allocation34], 4
      %s330 = int_to_ptr.vmem [resolvable:$true] %s329
      %335 = dma.hbm_to_vmem [thread:$0]  %s59, 1536, %s330, [#allocation33], 128, 128, 8
    $region121: #{_forward_jit.1} parent=1 // pred_fallthru
      _
    // Predicated region
    $region122: #{_forward_jit.1} parent=1 // pred_check
      _
    $region123: #{_forward_jit.1} parent=1 // pred_check_branch
      %337 = sbr.rel (0) target = $region125
    $region124: #{_forward_jit.1} parent=1 // pred_region
      %s339 = ssub.s32 16, 16
      %340 = vsyncadd [#allocation36], %s339
      %s342 = sshll.u32 [#allocation35], 4
      %s343 = int_to_ptr.vmem [resolvable:$true] %s342
      %345 = dma.hbm_to_vmem [thread:$0]  %s61, 16, %s343, [#allocation36]
    $region125: #{_forward_jit.1} parent=1 // pred_fallthru
      _
    // Predicated region
    $region126: #{_forward_jit.1} parent=1 // pred_check
      _
    $region127: #{_forward_jit.1} parent=1 // pred_check_branch
      %347 = sbr.rel (0) target = $region129
    $region128: #{_forward_jit.1} parent=1 // pred_region
      %348 = dma.done [#allocation4], 384
    $region129: #{_forward_jit.1} parent=1 // pred_fallthru
      _
    // Predicated region
    $region130: #{_forward_jit.1} parent=1 // pred_check
      _
    $region131: #{_forward_jit.1} parent=1 // pred_check_branch
      %350 = sbr.rel (0) target = $region133
    $region132: #{_forward_jit.1} parent=1 // pred_region
      %351 = dma.done [#allocation6], 16
    $region133: #{_forward_jit.1} parent=1 // pred_fallthru
      _
    // Predicated region
    $region134: #{_forward_jit.1} parent=1 // pred_check
      _
    $region135: #{_forward_jit.1} parent=1 // pred_check_branch
      %353 = sbr.rel (0) target = $region137
    $region136: #{_forward_jit.1} parent=1 // pred_region
      %354 = dma.done [#allocation6], 512
    $region137: #{_forward_jit.1} parent=1 // pred_fallthru
      _
    // Predicated region
    $region138: #{_forward_jit.1} parent=1 // pred_check
      _
    $region139: #{_forward_jit.1} parent=1 // pred_check_branch
      %356 = sbr.rel (0) target = $region141
    $region140: #{_forward_jit.1} parent=1 // pred_region
      %357 = dma.done [#allocation9], 1024
    $region141: #{_forward_jit.1} parent=1 // pred_fallthru
      _
    // Predicated region
    $region142: #{_forward_jit.1} parent=1 // pred_check
      _
    $region143: #{_forward_jit.1} parent=1 // pred_check_branch
      %359 = sbr.rel (0) target = $region145
    $region144: #{_forward_jit.1} parent=1 // pred_region
      %360 = dma.done [#allocation9], 1024
    $region145: #{_forward_jit.1} parent=1 // pred_fallthru
      _
    // Predicated region
    $region146: #{_forward_jit.1} parent=1 // pred_check
      _
    $region147: #{_forward_jit.1} parent=1 // pred_check_branch
      %362 = sbr.rel (0) target = $region149
    $region148: #{_forward_jit.1} parent=1 // pred_region
      %363 = dma.done [#allocation12], 768
    $region149: #{_forward_jit.1} parent=1 // pred_fallthru
      _
    // Predicated region
    $region150: #{_forward_jit.1} parent=1 // pred_check
      _
    $region151: #{_forward_jit.1} parent=1 // pred_check_branch
      %365 = sbr.rel (0) target = $region153
    $region152: #{_forward_jit.1} parent=1 // pred_region
      %366 = dma.done [#allocation12], 16
    $region153: #{_forward_jit.1} parent=1 // pred_fallthru
      _
    // Predicated region
    $region154: #{_forward_jit.1} parent=1 // pred_check
      _
    $region155: #{_forward_jit.1} parent=1 // pred_check_branch
      %368 = sbr.rel (0) target = $region157
    $region156: #{_forward_jit.1} parent=1 // pred_region
      %369 = dma.done [#allocation15], 256
    $region157: #{_forward_jit.1} parent=1 // pred_fallthru
      _
    // Predicated region
    $region158: #{_forward_jit.1} parent=1 // pred_check
      _
    $region159: #{_forward_jit.1} parent=1 // pred_check_branch
      %371 = sbr.rel (0) target = $region161
    $region160: #{_forward_jit.1} parent=1 // pred_region
      %372 = dma.done [#allocation15], 256
    $region161: #{_forward_jit.1} parent=1 // pred_fallthru
      _
    // Predicated region
    $region162: #{_forward_jit.1} parent=1 // pred_check
      _
    $region163: #{_forward_jit.1} parent=1 // pred_check_branch
      %374 = sbr.rel (0) target = $region165
    $region164: #{_forward_jit.1} parent=1 // pred_region
      %375 = dma.done [#allocation18], 1024
    $region165: #{_forward_jit.1} parent=1 // pred_fallthru
      _
    // Predicated region
    $region166: #{_forward_jit.1} parent=1 // pred_check
      _
    $region167: #{_forward_jit.1} parent=1 // pred_check_branch
      %377 = sbr.rel (0) target = $region169
    $region168: #{_forward_jit.1} parent=1 // pred_region
      %378 = dma.done [#allocation18], 1024
    $region169: #{_forward_jit.1} parent=1 // pred_fallthru
      _
    // Predicated region
    $region170: #{_forward_jit.1} parent=1 // pred_check
      _
    $region171: #{_forward_jit.1} parent=1 // pred_check_branch
      %380 = sbr.rel (0) target = $region173
    $region172: #{_forward_jit.1} parent=1 // pred_region
      %381 = dma.done [#allocation21], 768
    $region173: #{_forward_jit.1} parent=1 // pred_fallthru
      _
    // Predicated region
    $region174: #{_forward_jit.1} parent=1 // pred_check
      _
    $region175: #{_forward_jit.1} parent=1 // pred_check_branch
      %383 = sbr.rel (0) target = $region177
    $region176: #{_forward_jit.1} parent=1 // pred_region
      %384 = dma.done [#allocation21], 16
    $region177: #{_forward_jit.1} parent=1 // pred_fallthru
      _
    // Predicated region
    $region178: #{_forward_jit.1} parent=1 // pred_check
      _
    $region179: #{_forward_jit.1} parent=1 // pred_check_branch
      %386 = sbr.rel (0) target = $region181
    $region180: #{_forward_jit.1} parent=1 // pred_region
      %387 = dma.done [#allocation24], 1536
    $region181: #{_forward_jit.1} parent=1 // pred_fallthru
      _
    // Predicated region
    $region182: #{_forward_jit.1} parent=1 // pred_check
      _
    $region183: #{_forward_jit.1} parent=1 // pred_check_branch
      %389 = sbr.rel (0) target = $region185
    $region184: #{_forward_jit.1} parent=1 // pred_region
      %390 = dma.done [#allocation24], 16
    $region185: #{_forward_jit.1} parent=1 // pred_fallthru
      _
    // Predicated region
    $region186: #{_forward_jit.1} parent=1 // pred_check
      _
    $region187: #{_forward_jit.1} parent=1 // pred_check_branch
      %392 = sbr.rel (0) target = $region189
    $region188: #{_forward_jit.1} parent=1 // pred_region
      %393 = dma.done [#allocation27], 128
    $region189: #{_forward_jit.1} parent=1 // pred_fallthru
      _
    // Predicated region
    $region190: #{_forward_jit.1} parent=1 // pred_check
      _
    $region191: #{_forward_jit.1} parent=1 // pred_check_branch
      %395 = sbr.rel (0) target = $region193
    $region192: #{_forward_jit.1} parent=1 // pred_region
      %396 = dma.done [#allocation27], 1536
    $region193: #{_forward_jit.1} parent=1 // pred_fallthru
      _
    // Predicated region
    $region194: #{_forward_jit.1} parent=1 // pred_check
      _
    $region195: #{_forward_jit.1} parent=1 // pred_check_branch
      %398 = sbr.rel (0) target = $region197
    $region196: #{_forward_jit.1} parent=1 // pred_region
      %399 = dma.done [#allocation30], 64
    $region197: #{_forward_jit.1} parent=1 // pred_fallthru
      _
    // Predicated region
    $region198: #{_forward_jit.1} parent=1 // pred_check
      _
    $region199: #{_forward_jit.1} parent=1 // pred_check_branch
      %401 = sbr.rel (0) target = $region201
    $region200: #{_forward_jit.1} parent=1 // pred_region
      %402 = dma.done [#allocation30], 2048
    $region201: #{_forward_jit.1} parent=1 // pred_fallthru
      _
    // Predicated region
    $region202: #{_forward_jit.1} parent=1 // pred_check
      _
    $region203: #{_forward_jit.1} parent=1 // pred_check_branch
      %404 = sbr.rel (0) target = $region205
    $region204: #{_forward_jit.1} parent=1 // pred_region
      %405 = dma.done [#allocation33], 16
    $region205: #{_forward_jit.1} parent=1 // pred_fallthru
      _
    // Predicated region
    $region206: #{_forward_jit.1} parent=1 // pred_check
      _
    $region207: #{_forward_jit.1} parent=1 // pred_check_branch
      %407 = sbr.rel (0) target = $region209
    $region208: #{_forward_jit.1} parent=1 // pred_region
      %408 = dma.done [#allocation33], 1536
    $region209: #{_forward_jit.1} parent=1 // pred_fallthru
      _
    // Predicated region
    $region210: #{_forward_jit.1} parent=1 // pred_check
      _
    $region211: #{_forward_jit.1} parent=1 // pred_check_branch
      %410 = sbr.rel (0) target = $region213
    $region212: #{_forward_jit.1} parent=1 // pred_region
      %411 = dma.done [#allocation36], 16
    $region213: #{_forward_jit.1} parent=1 // pred_fallthru
      _
    %413 = vst [vmem:[#allocation2] sm:$0xff] 0.0
    %414 = vst [vmem:[#allocation2 + $0x8] sm:$0xff] 0.0
    %415 = vst [vmem:[#allocation2 + $0x10] sm:$0xff] 0.0
    %416 = vst [vmem:[#allocation2 + $0x18] sm:$0xff] 0.0
    %417 = vst [vmem:[#allocation2 + $0x20] sm:$0xff] 0.0
    %418 = vst [vmem:[#allocation2 + $0x28] sm:$0xff] 0.0
    %419 = vst [vmem:[#allocation2 + $0x30] sm:$0xff] 0.0
    %420 = vst [vmem:[#allocation2 + $0x38] sm:$0xff] 0.0
    %421 = vst [vmem:[#allocation2 + $0x40] sm:$0xff] 0.0
    %422 = vst [vmem:[#allocation2 + $0x48] sm:$0xff] 0.0
    %v423 = vld [vmem:[%s1] sm:$0xff]
    %v424 = vld [vmem:[%s1 + $0x8] sm:$0xff]
    %v425 = vld [vmem:[%s1 + $0x10] sm:$0xff]
    %v426 = vld [vmem:[%s1 + $0x18] sm:$0xff]
    %v427 = vld [vmem:[%s1 + $0x20] sm:$0xff]
    %v428 = vld [vmem:[%s1 + $0x28] sm:$0xff]
    %v429 = vld [vmem:[%s1 + $0x30] sm:$0xff]
    %v430 = vld [vmem:[%s1 + $0x38] sm:$0xff]
    %vm431 = vcmask 122880
    %432 = vst.msk [vmem:[#allocation2] sm:$0x1] %vm431, 0.0
    %433 = vst.msk [vmem:[#allocation2 + $0x21] sm:$0x1] %vm431, 0.0
    %vm434 = vcmask 130048
    %435 = vst.msk [vmem:[#allocation2 + $0x1] sm:$0xff] %vm434, %v423
    %436 = vst.msk [vmem:[#allocation2 + $0x9] sm:$0xff] %vm434, %v424
    %437 = vst.msk [vmem:[#allocation2 + $0x11] sm:$0xff] %vm434, %v425
    %438 = vst.msk [vmem:[#allocation2 + $0x19] sm:$0xff] %vm434, %v426
    %439 = vst.msk [vmem:[#allocation2 + $0x28] sm:$0x1] %vm431, 0.0
    %440 = vst.msk [vmem:[#allocation2 + $0x49] sm:$0x1] %vm431, 0.0
    %441 = vst.msk [vmem:[#allocation2 + $0x29] sm:$0xff] %vm434, %v427
    %442 = vst.msk [vmem:[#allocation2 + $0x31] sm:$0xff] %vm434, %v428
    %443 = vst.msk [vmem:[#allocation2 + $0x39] sm:$0xff] %vm434, %v429
    %444 = vst.msk [vmem:[#allocation2 + $0x41] sm:$0xff] %vm434, %v430
    %v445 = vld [vmem:[#allocation2] sm:$0xff]
    %v446 = vld [vmem:[#allocation2 + $0x8] sm:$0xff]
    %v447 = vld [vmem:[#allocation2 + $0x10] sm:$0xff]
    %v448 = vld [vmem:[#allocation2 + $0x18] sm:$0xff]
    %v449 = vld [vmem:[#allocation2 + $0x20] sm:$0xff]
    %v450 = vld [vmem:[#allocation2 + $0x28] sm:$0xff]
    %v451 = vld [vmem:[#allocation2 + $0x30] sm:$0xff]
    %v452 = vld [vmem:[#allocation2 + $0x38] sm:$0xff]
    %v453 = vld [vmem:[#allocation2 + $0x40] sm:$0xff]
    %v454 = vpack.c.bf16 %v446, %v445
    %v455 = vpack.c.bf16 %v448, %v447
    %v456 = vpack.c.bf16 %v450, %v449
    %v457 = vpack.c.bf16 %v452, %v451
    %v458 = vpack.c.bf16 %v453, %v453
    %v459 = vld [vmem:[#allocation3] sm:$0xf]
    %v460 = vld [vmem:[#allocation3 + $0x4] sm:$0xf]
    %v461 = vld [vmem:[#allocation2 + $0x1] sm:$0xff]
    %v462 = vld [vmem:[#allocation2 + $0x9] sm:$0xff]
    %v463 = vld [vmem:[#allocation2 + $0x11] sm:$0xff]
    %v464 = vld [vmem:[#allocation2 + $0x19] sm:$0xff]
    %v465 = vld [vmem:[#allocation2 + $0x21] sm:$0xff]
    %v466 = vld [vmem:[#allocation2 + $0x29] sm:$0xff]
    %v467 = vld [vmem:[#allocation2 + $0x31] sm:$0xff]
    %v468 = vld [vmem:[#allocation2 + $0x39] sm:$0xff]
    %v469 = vld [vmem:[#allocation2 + $0x41] sm:$0xff]
    %v470 = vpack.c.bf16 %v462, %v461
    %v471 = vpack.c.bf16 %v464, %v463
    %v472 = vpack.c.bf16 %v466, %v465
    %v473 = vpack.c.bf16 %v468, %v467
    %v474 = vpack.c.bf16 %v469, %v469
    %s475 = scalar_lea.vmem [#allocation3], 8
    %v476 = vld [vmem:[%s475] sm:$0xf]
    %v477 = vld [vmem:[%s475 + $0x4] sm:$0xf]
    %v480 = vunpack.c.l.b16 %v476
    %v481 = vunpack.c.l.b16 %v477
    %v482 = vpack.c.b16 %v481, %v480
    %v485 = vsel %vm434, %v470, 0
    %v488 = vsel %vm434, %v471, 0
    %v491 = vsel %vm434, %v472, 0
    %v494 = vsel %vm434, %v473, 0
    %v497 = vsel %vm434, %v474, 0
    %499 = vmatprep.subr.bf16.mxu0 0
    %500 = vmatpush1.bf16.msra.mxu0 %v482
    %501 = vmatprep.subr.bf16.mxu0 0
    %502 = vmatpush1.bf16.msra.mxu0 0
    %503 = vmatprep.subr.bf16.mxu0 0
    %504 = vmatpush1.bf16.msra.mxu0 0
    %505 = vmatprep.subr.bf16.mxu0 0
    %506 = vmatpush1.bf16.msra.mxu0 0
    %507 = vmatprep.subr.bf16.mxu0 0
    %508 = vmatpush1.bf16.msra.mxu0 0
    %509 = vmatprep.subr.bf16.mxu0 0
    %510 = vmatpush1.bf16.msra.mxu0 0
    %511 = vmatprep.subr.bf16.mxu0 0
    %512 = vmatpush1.bf16.msra.mxu0 0
    %513 = vmatprep.subr.bf16.mxu0 0
    %514 = vmatpush1.bf16.msra.mxu0 0
    %515 = vmatprep.subr.bf16.mxu0 0
    %516 = vmatpush1.bf16.msra.mxu0 0
    %517 = vmatprep.subr.bf16.mxu0 0
    %518 = vmatpush1.bf16.msra.mxu0 0
    %519 = vmatprep.subr.bf16.mxu0 0
    %520 = vmatpush1.bf16.msra.mxu0 0
    %521 = vmatprep.subr.bf16.mxu0 0
    %522 = vmatpush1.bf16.msra.mxu0 0
    %523 = vmatprep.subr.bf16.mxu0 0
    %524 = vmatpush1.bf16.msra.mxu0 0
    %525 = vmatprep.subr.bf16.mxu0 0
    %526 = vmatpush1.bf16.msra.mxu0 0
    %527 = vmatprep.subr.bf16.mxu0 0
    %528 = vmatpush1.bf16.msra.mxu0 0
    %529 = vmatprep.subr.bf16.mxu0 0
    %530 = vmatpush1.bf16.msra.mxu0 0
    %531 = vmatprep.mubr.bf16.mxu0 0
    %532 = vmatmul.mubr.bf16.gmra.mrb[0].mxu0 %v485
    %v533 = vpop.f32.mrb[0].mxu0
    %v534 = vadd.f32 0.0, %v533
    %v535 = vpop.f32.mrb[0].mxu0
    %v536 = vpop.f32.mrb[0].mxu0
    %v537 = vadd.f32 0.0, %v536
    %v538 = vpop.f32.mrb[0].mxu0
    %539 = vmatprep.mubr.bf16.mxu0 0
    %540 = vmatmul.mubr.bf16.gmra.mrb[0].mxu0 %v488
    %v541 = vpop.f32.mrb[0].mxu0
    %v542 = vadd.f32 0.0, %v541
    %v543 = vpop.f32.mrb[0].mxu0
    %v544 = vpop.f32.mrb[0].mxu0
    %v545 = vadd.f32 0.0, %v544
    %v546 = vpop.f32.mrb[0].mxu0
    %547 = vmatprep.mubr.bf16.mxu0 0
    %548 = vmatmul.mubr.bf16.gmra.mrb[0].mxu0 %v491
    %v549 = vpop.f32.mrb[0].mxu0
    %v550 = vpop.f32.mrb[0].mxu0
    %v551 = vpop.f32.mrb[0].mxu0
    %v552 = vadd.f32 0.0, %v551
    %v553 = vpop.f32.mrb[0].mxu0
    %554 = vmatprep.mubr.bf16.mxu0 0
    %555 = vmatmul.mubr.bf16.gmra.mrb[0].mxu0 %v494
    %v556 = vpop.f32.mrb[0].mxu0
    %v557 = vadd.f32 0.0, %v556
    %v558 = vpop.f32.mrb[0].mxu0
    %v559 = vpop.f32.mrb[0].mxu0
    %v560 = vadd.f32 0.0, %v559
    %v561 = vpop.f32.mrb[0].mxu0
    %562 = vmatprep.mubr.bf16.mxu0 0
    %563 = vmatmul.mubr.bf16.gmra.mrb[0].mxu0 %v497
    %v564 = vpop.f32.mrb[0].mxu0
    %v565 = vadd.f32 0.0, %v564
    %v566 = vpop.f32.mrb[0].mxu0
    %v567 = vpop.f32.mrb[0].mxu0
    %v568 = vpop.f32.mrb[0].mxu0
    %569 = vdwg.mxu0
    %v572 = vunpack.c.l.b16 %v459
    %v573 = vunpack.c.l.b16 %v460
    %v574 = vpack.c.b16 %v573, %v572
    %v577 = vsel %vm434, %v454, 0
    %v580 = vsel %vm434, %v455, 0
    %v583 = vsel %vm434, %v456, 0
    %v586 = vsel %vm434, %v457, 0
    %v589 = vsel %vm434, %v458, 0
    %591 = vmatprep.subr.bf16.mxu0 0
    %592 = vmatpush1.bf16.msra.mxu0 %v574
    %593 = vmatprep.subr.bf16.mxu0 0
    %594 = vmatpush1.bf16.msra.mxu0 0
    %595 = vmatprep.subr.bf16.mxu0 0
    %596 = vmatpush1.bf16.msra.mxu0 0
    %597 = vmatprep.subr.bf16.mxu0 0
    %598 = vmatpush1.bf16.msra.mxu0 0
    %599 = vmatprep.subr.bf16.mxu0 0
    %600 = vmatpush1.bf16.msra.mxu0 0
    %601 = vmatprep.subr.bf16.mxu0 0
    %602 = vmatpush1.bf16.msra.mxu0 0
    %603 = vmatprep.subr.bf16.mxu0 0
    %604 = vmatpush1.bf16.msra.mxu0 0
    %605 = vmatprep.subr.bf16.mxu0 0
    %606 = vmatpush1.bf16.msra.mxu0 0
    %607 = vmatprep.subr.bf16.mxu0 0
    %608 = vmatpush1.bf16.msra.mxu0 0
    %609 = vmatprep.subr.bf16.mxu0 0
    %610 = vmatpush1.bf16.msra.mxu0 0
    %611 = vmatprep.subr.bf16.mxu0 0
    %612 = vmatpush1.bf16.msra.mxu0 0
    %613 = vmatprep.subr.bf16.mxu0 0
    %614 = vmatpush1.bf16.msra.mxu0 0
    %615 = vmatprep.subr.bf16.mxu0 0
    %616 = vmatpush1.bf16.msra.mxu0 0
    %617 = vmatprep.subr.bf16.mxu0 0
    %618 = vmatpush1.bf16.msra.mxu0 0
    %619 = vmatprep.subr.bf16.mxu0 0
    %620 = vmatpush1.bf16.msra.mxu0 0
    %621 = vmatprep.subr.bf16.mxu0 0
    %622 = vmatpush1.bf16.msra.mxu0 0
    %623 = vmatprep.mubr.bf16.mxu0 0
    %624 = vmatmul.mubr.bf16.gmra.mrb[0].mxu0 %v577
    %v625 = vpop.f32.mrb[0].mxu0
    %v626 = vadd.f32 %v534, %v625
    %v627 = vpop.f32.mrb[0].mxu0
    %v628 = vpop.f32.mrb[0].mxu0
    %v629 = vadd.f32 %v537, %v628
    %v630 = vpop.f32.mrb[0].mxu0
    %631 = vmatprep.mubr.bf16.mxu0 0
    %632 = vmatmul.mubr.bf16.gmra.mrb[0].mxu0 %v580
    %v633 = vpop.f32.mrb[0].mxu0
    %v634 = vadd.f32 %v542, %v633
    %v635 = vpop.f32.mrb[0].mxu0
    %v636 = vpop.f32.mrb[0].mxu0
    %v637 = vadd.f32 %v545, %v636
    %v638 = vpop.f32.mrb[0].mxu0
    %639 = vmatprep.mubr.bf16.mxu0 0
    %640 = vmatmul.mubr.bf16.gmra.mrb[0].mxu0 %v583
    %v641 = vpop.f32.mrb[0].mxu0
    %v642 = vpop.f32.mrb[0].mxu0
    %v643 = vpop.f32.mrb[0].mxu0
    %v644 = vadd.f32 %v552, %v643
    %v645 = vpop.f32.mrb[0].mxu0
    %646 = vmatprep.mubr.bf16.mxu0 0
    %647 = vmatmul.mubr.bf16.gmra.mrb[0].mxu0 %v586
    %v648 = vpop.f32.mrb[0].mxu0
    %v649 = vadd.f32 %v557, %v648
    %v650 = vpop.f32.mrb[0].mxu0
    %v651 = vpop.f32.mrb[0].mxu0
    %v652 = vadd.f32 %v560, %v651
    %v653 = vpop.f32.mrb[0].mxu0
    %654 = vmatprep.mubr.bf16.mxu0 0
    %655 = vmatmul.mubr.bf16.gmra.mrb[0].mxu0 %v589
    %v656 = vpop.f32.mrb[0].mxu0
    %v657 = vadd.f32 %v565, %v656
    %v658 = vpop.f32.mrb[0].mxu0
    %v659 = vpop.f32.mrb[0].mxu0
    %v660 = vpop.f32.mrb[0].mxu0
    %661 = vdwg.mxu0
    %v662 = vld [vmem:[#allocation2 + $0x2] sm:$0xff]
    %v663 = vld [vmem:[#allocation2 + $0xa] sm:$0xff]
    %v664 = vld [vmem:[#allocation2 + $0x12] sm:$0xff]
    %v665 = vld [vmem:[#allocation2 + $0x1a] sm:$0xff]
    %v666 = vld [vmem:[#allocation2 + $0x22] sm:$0xff]
    %v667 = vld [vmem:[#allocation2 + $0x2a] sm:$0xff]
    %v668 = vld [vmem:[#allocation2 + $0x32] sm:$0xff]
    %v669 = vld [vmem:[#allocation2 + $0x3a] sm:$0xff]
    %v670 = vld [vmem:[#allocation2 + $0x42] sm:$0xff]
    %v671 = vpack.c.bf16 %v663, %v662
    %v672 = vpack.c.bf16 %v665, %v664
    %v673 = vpack.c.bf16 %v667, %v666
    %v674 = vpack.c.bf16 %v669, %v668
    %v675 = vpack.c.bf16 %v670, %v670
    %s676 = scalar_lea.vmem [#allocation3], 16
    %v677 = vld [vmem:[%s676] sm:$0xf]
    %v678 = vld [vmem:[%s676 + $0x4] sm:$0xf]
    %v681 = vunpack.c.l.b16 %v677
    %v682 = vunpack.c.l.b16 %v678
    %v683 = vpack.c.b16 %v682, %v681
    %v686 = vsel %vm434, %v671, 0
    %v689 = vsel %vm434, %v672, 0
    %v692 = vsel %vm434, %v673, 0
    %v695 = vsel %vm434, %v674, 0
    %v698 = vsel %vm434, %v675, 0
    %700 = vmatprep.subr.bf16.mxu0 0
    %701 = vmatpush1.bf16.msra.mxu0 %v683
    %702 = vmatprep.subr.bf16.mxu0 0
    %703 = vmatpush1.bf16.msra.mxu0 0
    %704 = vmatprep.subr.bf16.mxu0 0
    %705 = vmatpush1.bf16.msra.mxu0 0
    %706 = vmatprep.subr.bf16.mxu0 0
    %707 = vmatpush1.bf16.msra.mxu0 0
    %708 = vmatprep.subr.bf16.mxu0 0
    %709 = vmatpush1.bf16.msra.mxu0 0
    %710 = vmatprep.subr.bf16.mxu0 0
    %711 = vmatpush1.bf16.msra.mxu0 0
    %712 = vmatprep.subr.bf16.mxu0 0
    %713 = vmatpush1.bf16.msra.mxu0 0
    %714 = vmatprep.subr.bf16.mxu0 0
    %715 = vmatpush1.bf16.msra.mxu0 0
    %716 = vmatprep.subr.bf16.mxu0 0
    %717 = vmatpush1.bf16.msra.mxu0 0
    %718 = vmatprep.subr.bf16.mxu0 0
    %719 = vmatpush1.bf16.msra.mxu0 0
    %720 = vmatprep.subr.bf16.mxu0 0
    %721 = vmatpush1.bf16.msra.mxu0 0
    %722 = vmatprep.subr.bf16.mxu0 0
    %723 = vmatpush1.bf16.msra.mxu0 0
    %724 = vmatprep.subr.bf16.mxu0 0
    %725 = vmatpush1.bf16.msra.mxu0 0
    %726 = vmatprep.subr.bf16.mxu0 0
    %727 = vmatpush1.bf16.msra.mxu0 0
    %728 = vmatprep.subr.bf16.mxu0 0
    %729 = vmatpush1.bf16.msra.mxu0 0
    %730 = vmatprep.subr.bf16.mxu0 0
    %731 = vmatpush1.bf16.msra.mxu0 0
    %732 = vmatprep.mubr.bf16.mxu0 0
    %733 = vmatmul.mubr.bf16.gmra.mrb[0].mxu0 %v686
    %v734 = vpop.f32.mrb[0].mxu0
    %v735 = vadd.f32 0.0, %v734
    %v736 = vpop.f32.mrb[0].mxu0
    %v737 = vpop.f32.mrb[0].mxu0
    %v738 = vadd.f32 0.0, %v737
    %v739 = vpop.f32.mrb[0].mxu0
    %740 = vmatprep.mubr.bf16.mxu0 0
    %741 = vmatmul.mubr.bf16.gmra.mrb[0].mxu0 %v689
    %v742 = vpop.f32.mrb[0].mxu0
    %v743 = vadd.f32 0.0, %v742
    %v744 = vpop.f32.mrb[0].mxu0
    %v745 = vpop.f32.mrb[0].mxu0
    %v746 = vadd.f32 0.0, %v745
    %v747 = vpop.f32.mrb[0].mxu0
    %748 = vmatprep.mubr.bf16.mxu0 0
    %749 = vmatmul.mubr.bf16.gmra.mrb[0].mxu0 %v692
    %v750 = vpop.f32.mrb[0].mxu0
    %v751 = vpop.f32.mrb[0].mxu0
    %v752 = vpop.f32.mrb[0].mxu0
    %v753 = vadd.f32 0.0, %v752
    %v754 = vpop.f32.mrb[0].mxu0
    %755 = vmatprep.mubr.bf16.mxu0 0
    %756 = vmatmul.mubr.bf16.gmra.mrb[0].mxu0 %v695
    %v757 = vpop.f32.mrb[0].mxu0
    %v758 = vadd.f32 0.0, %v757
    %v759 = vpop.f32.mrb[0].mxu0
    %v760 = vpop.f32.mrb[0].mxu0
    %v761 = vadd.f32 0.0, %v760
    %v762 = vpop.f32.mrb[0].mxu0
    %763 = vmatprep.mubr.bf16.mxu0 0
    %764 = vmatmul.mubr.bf16.gmra.mrb[0].mxu0 %v698
    %v765 = vpop.f32.mrb[0].mxu0
    %v766 = vadd.f32 0.0, %v765
    %v767 = vpop.f32.mrb[0].mxu0
    %v768 = vpop.f32.mrb[0].mxu0
    %v769 = vpop.f32.mrb[0].mxu0
    %770 = vdwg.mxu0
    %v771 = vadd.f32 %v626, %v735
    %v772 = vadd.f32 %v629, %v738
    %v773 = vadd.f32 %v634, %v743
    %v774 = vadd.f32 %v637, %v746
    %v775 = vadd.f32 %v644, %v753
    %v776 = vadd.f32 %v649, %v758
    %v777 = vadd.f32 %v652, %v761
    %v778 = vadd.f32 %v657, %v766
    %v779 = vld [vmem:[#allocation5] sm:$0x1]
    %v781 = vlaneseq
    %v782 = vshrl.u32 %v781, 7
    %v783 = vsub.s32 0, %v782
    %v784 = vrot.slane %v779, %v783
    %v786 = vadd.f32 %v771, %v784
    %v787 = vadd.f32 %v772, %v784
    %v788 = vadd.f32 %v773, %v784
    %v789 = vadd.f32 %v774, %v784
    %v790 = vadd.f32 %v775, %v784
    %v791 = vadd.f32 %v776, %v784
    %v792 = vadd.f32 %v777, %v784
    %v793 = vadd.f32 %v778, %v784
    %v794 = vmax.f32 %v786, 0.0
    %v795 = vmax.f32 %v787, 0.0
    %v796 = vmax.f32 %v788, 0.0
    %v797 = vmax.f32 %v789, 0.0
    %v798 = vmax.f32 %v790, 0.0
    %v799 = vmax.f32 %v791, 0.0
    %v800 = vmax.f32 %v792, 0.0
    %v801 = vmax.f32 %v793, 0.0
    %v802 = vld [vmem:[#allocation7] sm:$0xff]
    %v803 = vld [vmem:[#allocation7 + $0x8] sm:$0xff]
    %v804 = vld [vmem:[#allocation7 + $0x10] sm:$0xff]
    %v805 = vld [vmem:[#allocation7 + $0x18] sm:$0xff]
    %vm806 = vcmask 523264
    %v808 = vsel %vm806, %v802, 0
    %v811 = vsel %vm806, %v803, 0
    %v814 = vsel %vm806, %v804, 0
    %v817 = vsel %vm806, %v805, 0
    %819 = vmatprep.subr.mxu0 0.0
    %820 = vmatpush1.msra.mxu0 %v794
    %821 = vmatprep.subr.mxu0 0.0
    %822 = vmatpush1.msra.mxu0 %v795
    %823 = vmatprep.subr.mxu0 0.0
    %824 = vmatpush1.msra.mxu0 %v796
    %825 = vmatprep.subr.mxu0 0.0
    %826 = vmatpush1.msra.mxu0 %v797
    %827 = vmatprep.subr.mxu0 0.0
    %828 = vmatpush1.msra.mxu0 %v798
    %829 = vmatprep.subr.mxu0 0.0
    %830 = vmatpush1.msra.mxu0 %v799
    %831 = vmatprep.subr.mxu0 0.0
    %832 = vmatpush1.msra.mxu0 %v800
    %833 = vmatprep.subr.mxu0 0.0
    %834 = vmatpush1.msra.mxu0 %v801
    %835 = vmatprep.subr.mxu0 0.0
    %836 = vmatpush1.msra.mxu0 0.0
    %837 = vmatprep.subr.mxu0 0.0
    %838 = vmatpush1.msra.mxu0 0.0
    %839 = vmatprep.subr.mxu0 0.0
    %840 = vmatpush1.msra.mxu0 0.0
    %841 = vmatprep.subr.mxu0 0.0
    %842 = vmatpush1.msra.mxu0 0.0
    %843 = vmatprep.subr.mxu0 0.0
    %844 = vmatpush1.msra.mxu0 0.0
    %845 = vmatprep.subr.mxu0 0.0
    %846 = vmatpush1.msra.mxu0 0.0
    %847 = vmatprep.subr.mxu0 0.0
    %848 = vmatpush1.msra.mxu0 0.0
    %849 = vmatprep.subr.mxu0 0.0
    %850 = vmatpush1.msra.mxu0 0.0
    %851 = vmatprep.subr.mxu0 0.0
    %852 = vmatpush1.msra.mxu0 0.0
    %853 = vmatprep.subr.mxu0 0.0
    %854 = vmatpush1.msra.mxu0 0.0
    %855 = vmatprep.subr.mxu0 0.0
    %856 = vmatpush1.msra.mxu0 0.0
    %857 = vmatprep.subr.mxu0 0.0
    %858 = vmatpush1.msra.mxu0 0.0
    %859 = vmatprep.subr.mxu0 0.0
    %860 = vmatpush1.msra.mxu0 0.0
    %861 = vmatprep.subr.mxu0 0.0
    %862 = vmatpush1.msra.mxu0 0.0
    %863 = vmatprep.subr.mxu0 0.0
    %864 = vmatpush1.msra.mxu0 0.0
    %865 = vmatprep.subr.mxu0 0.0
    %866 = vmatpush1.msra.mxu0 0.0
    %867 = vmatprep.subr.mxu0 0.0
    %868 = vmatpush1.msra.mxu0 0.0
    %869 = vmatprep.subr.mxu0 0.0
    %870 = vmatpush1.msra.mxu0 0.0
    %871 = vmatprep.subr.mxu0 0.0
    %872 = vmatpush1.msra.mxu0 0.0
    %873 = vmatprep.subr.mxu0 0.0
    %874 = vmatpush1.msra.mxu0 0.0
    %875 = vmatprep.subr.mxu0 0.0
    %876 = vmatpush1.msra.mxu0 0.0
    %877 = vmatprep.subr.mxu0 0.0
    %878 = vmatpush1.msra.mxu0 0.0
    %879 = vmatprep.subr.mxu0 0.0
    %880 = vmatpush1.msra.mxu0 0.0
    %881 = vmatprep.subr.mxu0 0.0
    %882 = vmatpush1.msra.mxu0 0.0
    %883 = vmatprep.mubr.f32.mxu0 0.0
    %884 = vmatmul.mubr.f32.gmra.mrb[0].mxu0 %v808
    %v885 = vpop.f32.mrb[0].mxu0
    %v886 = vadd.f32 0.0, %v885
    %v887 = vpop.f32.mrb[0].mxu0
    %888 = vmatprep.mubr.f32.mxu0 0.0
    %889 = vmatmul.mubr.f32.gmra.mrb[0].mxu0 %v811
    %v890 = vpop.f32.mrb[0].mxu0
    %v891 = vadd.f32 0.0, %v890
    %v892 = vpop.f32.mrb[0].mxu0
    %893 = vmatprep.mubr.f32.mxu0 0.0
    %894 = vmatmul.mubr.f32.gmra.mrb[0].mxu0 %v814
    %v895 = vpop.f32.mrb[0].mxu0
    %v896 = vadd.f32 0.0, %v895
    %v897 = vpop.f32.mrb[0].mxu0
    %898 = vmatprep.mubr.f32.mxu0 0.0
    %899 = vmatmul.mubr.f32.gmra.mrb[0].mxu0 %v817
    %v900 = vpop.f32.mrb[0].mxu0
    %v901 = vadd.f32 0.0, %v900
    %v902 = vpop.f32.mrb[0].mxu0
    %903 = vdwg.mxu0
    %v904 = vld [vmem:[%s9] sm:$0xff]
    %v905 = vld [vmem:[%s9 + $0x8] sm:$0xff]
    %v906 = vld [vmem:[%s9 + $0x10] sm:$0xff]
    %v907 = vld [vmem:[%s9 + $0x18] sm:$0xff]
    %v909 = vsel %vm806, %v904, 0
    %v912 = vsel %vm806, %v905, 0
    %v915 = vsel %vm806, %v906, 0
    %v918 = vsel %vm806, %v907, 0
    %920 = vmatprep.subr.mxu0 0.0
    %921 = vmatpush1.msra.mxu0 %v794
    %922 = vmatprep.subr.mxu0 0.0
    %923 = vmatpush1.msra.mxu0 %v795
    %924 = vmatprep.subr.mxu0 0.0
    %925 = vmatpush1.msra.mxu0 %v796
    %926 = vmatprep.subr.mxu0 0.0
    %927 = vmatpush1.msra.mxu0 %v797
    %928 = vmatprep.subr.mxu0 0.0
    %929 = vmatpush1.msra.mxu0 %v798
    %930 = vmatprep.subr.mxu0 0.0
    %931 = vmatpush1.msra.mxu0 %v799
    %932 = vmatprep.subr.mxu0 0.0
    %933 = vmatpush1.msra.mxu0 %v800
    %934 = vmatprep.subr.mxu0 0.0
    %935 = vmatpush1.msra.mxu0 %v801
    %936 = vmatprep.subr.mxu0 0.0
    %937 = vmatpush1.msra.mxu0 0.0
    %938 = vmatprep.subr.mxu0 0.0
    %939 = vmatpush1.msra.mxu0 0.0
    %940 = vmatprep.subr.mxu0 0.0
    %941 = vmatpush1.msra.mxu0 0.0
    %942 = vmatprep.subr.mxu0 0.0
    %943 = vmatpush1.msra.mxu0 0.0
    %944 = vmatprep.subr.mxu0 0.0
    %945 = vmatpush1.msra.mxu0 0.0
    %946 = vmatprep.subr.mxu0 0.0
    %947 = vmatpush1.msra.mxu0 0.0
    %948 = vmatprep.subr.mxu0 0.0
    %949 = vmatpush1.msra.mxu0 0.0
    %950 = vmatprep.subr.mxu0 0.0
    %951 = vmatpush1.msra.mxu0 0.0
    %952 = vmatprep.subr.mxu0 0.0
    %953 = vmatpush1.msra.mxu0 0.0
    %954 = vmatprep.subr.mxu0 0.0
    %955 = vmatpush1.msra.mxu0 0.0
    %956 = vmatprep.subr.mxu0 0.0
    %957 = vmatpush1.msra.mxu0 0.0
    %958 = vmatprep.subr.mxu0 0.0
    %959 = vmatpush1.msra.mxu0 0.0
    %960 = vmatprep.subr.mxu0 0.0
    %961 = vmatpush1.msra.mxu0 0.0
    %962 = vmatprep.subr.mxu0 0.0
    %963 = vmatpush1.msra.mxu0 0.0
    %964 = vmatprep.subr.mxu0 0.0
    %965 = vmatpush1.msra.mxu0 0.0
    %966 = vmatprep.subr.mxu0 0.0
    %967 = vmatpush1.msra.mxu0 0.0
    %968 = vmatprep.subr.mxu0 0.0
    %969 = vmatpush1.msra.mxu0 0.0
    %970 = vmatprep.subr.mxu0 0.0
    %971 = vmatpush1.msra.mxu0 0.0
    %972 = vmatprep.subr.mxu0 0.0
    %973 = vmatpush1.msra.mxu0 0.0
    %974 = vmatprep.subr.mxu0 0.0
    %975 = vmatpush1.msra.mxu0 0.0
    %976 = vmatprep.subr.mxu0 0.0
    %977 = vmatpush1.msra.mxu0 0.0
    %978 = vmatprep.subr.mxu0 0.0
    %979 = vmatpush1.msra.mxu0 0.0
    %980 = vmatprep.subr.mxu0 0.0
    %981 = vmatpush1.msra.mxu0 0.0
    %982 = vmatprep.subr.mxu0 0.0
    %983 = vmatpush1.msra.mxu0 0.0
    %984 = vmatprep.mubr.f32.mxu0 0.0
    %985 = vmatmul.mubr.f32.gmra.mrb[0].mxu0 %v909
    %v986 = vpop.f32.mrb[0].mxu0
    %v987 = vadd.f32 0.0, %v986
    %v988 = vpop.f32.mrb[0].mxu0
    %989 = vmatprep.mubr.f32.mxu0 0.0
    %990 = vmatmul.mubr.f32.gmra.mrb[0].mxu0 %v912
    %v991 = vpop.f32.mrb[0].mxu0
    %v992 = vadd.f32 0.0, %v991
    %v993 = vpop.f32.mrb[0].mxu0
    %994 = vmatprep.mubr.f32.mxu0 0.0
    %995 = vmatmul.mubr.f32.gmra.mrb[0].mxu0 %v915
    %v996 = vpop.f32.mrb[0].mxu0
    %v997 = vadd.f32 0.0, %v996
    %v998 = vpop.f32.mrb[0].mxu0
    %999 = vmatprep.mubr.f32.mxu0 0.0
    %1000 = vmatmul.mubr.f32.gmra.mrb[0].mxu0 %v918
    %v1001 = vpop.f32.mrb[0].mxu0
    %v1002 = vadd.f32 0.0, %v1001
    %v1003 = vpop.f32.mrb[0].mxu0
    %1004 = vdwg.mxu0
    %v1005 = vmax.f32 %v886, %v987
    %v1006 = vmax.f32 %v891, %v992
    %v1007 = vmax.f32 %v896, %v997
    %v1008 = vmax.f32 %v901, %v1002
    %v1009 = vld [vmem:[#allocation8] sm:$0xff]
    %v1010 = vld [vmem:[#allocation8 + $0x8] sm:$0xff]
    %v1011 = vld [vmem:[#allocation8 + $0x10] sm:$0xff]
    %v1012 = vld [vmem:[#allocation8 + $0x18] sm:$0xff]
    %v1013 = vld [vmem:[#allocation8 + $0x20] sm:$0xff]
    %v1014 = vld [vmem:[#allocation8 + $0x28] sm:$0xff]
    %v1015 = vld [vmem:[#allocation8 + $0x30] sm:$0xff]
    %v1016 = vld [vmem:[#allocation8 + $0x38] sm:$0xff]
    %v1018 = vsel %vm806, %v1005, 0
    %v1021 = vsel %vm806, %v1006, 0
    %v1024 = vsel %vm806, %v1007, 0
    %v1027 = vsel %vm806, %v1008, 0
    %1029 = vmatprep.subr.mxu0 0.0
    %1030 = vmatpush1.msra.mxu0 %v1009
    %1031 = vmatprep.subr.mxu0 0.0
    %1032 = vmatpush1.msra.mxu0 %v1010
    %1033 = vmatprep.subr.mxu0 0.0
    %1034 = vmatpush1.msra.mxu0 %v1011
    %1035 = vmatprep.subr.mxu0 0.0
    %1036 = vmatpush1.msra.mxu0 %v1012
    %1037 = vmatprep.subr.mxu0 0.0
    %1038 = vmatpush1.msra.mxu0 %v1013
    %1039 = vmatprep.subr.mxu0 0.0
    %1040 = vmatpush1.msra.mxu0 %v1014
    %1041 = vmatprep.subr.mxu0 0.0
    %1042 = vmatpush1.msra.mxu0 %v1015
    %1043 = vmatprep.subr.mxu0 0.0
    %1044 = vmatpush1.msra.mxu0 %v1016
    %1045 = vmatprep.subr.mxu0 0.0
    %1046 = vmatpush1.msra.mxu0 0.0
    %1047 = vmatprep.subr.mxu0 0.0
    %1048 = vmatpush1.msra.mxu0 0.0
    %1049 = vmatprep.subr.mxu0 0.0
    %1050 = vmatpush1.msra.mxu0 0.0
    %1051 = vmatprep.subr.mxu0 0.0
    %1052 = vmatpush1.msra.mxu0 0.0
    %1053 = vmatprep.subr.mxu0 0.0
    %1054 = vmatpush1.msra.mxu0 0.0
    %1055 = vmatprep.subr.mxu0 0.0
    %1056 = vmatpush1.msra.mxu0 0.0
    %1057 = vmatprep.subr.mxu0 0.0
    %1058 = vmatpush1.msra.mxu0 0.0
    %1059 = vmatprep.subr.mxu0 0.0
    %1060 = vmatpush1.msra.mxu0 0.0
    %1061 = vmatprep.subr.mxu0 0.0
    %1062 = vmatpush1.msra.mxu0 0.0
    %1063 = vmatprep.subr.mxu0 0.0
    %1064 = vmatpush1.msra.mxu0 0.0
    %1065 = vmatprep.subr.mxu0 0.0
    %1066 = vmatpush1.msra.mxu0 0.0
    %1067 = vmatprep.subr.mxu0 0.0
    %1068 = vmatpush1.msra.mxu0 0.0
    %1069 = vmatprep.subr.mxu0 0.0
    %1070 = vmatpush1.msra.mxu0 0.0
    %1071 = vmatprep.subr.mxu0 0.0
    %1072 = vmatpush1.msra.mxu0 0.0
    %1073 = vmatprep.subr.mxu0 0.0
    %1074 = vmatpush1.msra.mxu0 0.0
    %1075 = vmatprep.subr.mxu0 0.0
    %1076 = vmatpush1.msra.mxu0 0.0
    %1077 = vmatprep.subr.mxu0 0.0
    %1078 = vmatpush1.msra.mxu0 0.0
    %1079 = vmatprep.subr.mxu0 0.0
    %1080 = vmatpush1.msra.mxu0 0.0
    %1081 = vmatprep.subr.mxu0 0.0
    %1082 = vmatpush1.msra.mxu0 0.0
    %1083 = vmatprep.subr.mxu0 0.0
    %1084 = vmatpush1.msra.mxu0 0.0
    %1085 = vmatprep.subr.mxu0 0.0
    %1086 = vmatpush1.msra.mxu0 0.0
    %1087 = vmatprep.subr.mxu0 0.0
    %1088 = vmatpush1.msra.mxu0 0.0
    %1089 = vmatprep.subr.mxu0 0.0
    %1090 = vmatpush1.msra.mxu0 0.0
    %1091 = vmatprep.subr.mxu0 0.0
    %1092 = vmatpush1.msra.mxu0 0.0
    %1093 = vmatprep.mubr.f32.mxu0 0.0
    %1094 = vmatmul.mubr.f32.gmra.mrb[0].mxu0 %v1018
    %v1095 = vpop.f32.mrb[0].mxu0
    %v1096 = vadd.f32 0.0, %v1095
    %v1097 = vpop.f32.mrb[0].mxu0
    %1098 = vmatprep.mubr.f32.mxu0 0.0
    %1099 = vmatmul.mubr.f32.gmra.mrb[0].mxu0 %v1021
    %v1100 = vpop.f32.mrb[0].mxu0
    %v1101 = vadd.f32 0.0, %v1100
    %v1102 = vpop.f32.mrb[0].mxu0
    %1103 = vmatprep.mubr.f32.mxu0 0.0
    %1104 = vmatmul.mubr.f32.gmra.mrb[0].mxu0 %v1024
    %v1105 = vpop.f32.mrb[0].mxu0
    %v1106 = vadd.f32 0.0, %v1105
    %v1107 = vpop.f32.mrb[0].mxu0
    %1108 = vmatprep.mubr.f32.mxu0 0.0
    %1109 = vmatmul.mubr.f32.gmra.mrb[0].mxu0 %v1027
    %v1110 = vpop.f32.mrb[0].mxu0
    %v1111 = vadd.f32 0.0, %v1110
    %v1112 = vpop.f32.mrb[0].mxu0
    %1113 = vdwg.mxu0
    %v1114 = vld [vmem:[#allocation10] sm:$0xff]
    %v1115 = vld [vmem:[#allocation10 + $0x8] sm:$0xff]
    %v1116 = vld [vmem:[#allocation10 + $0x10] sm:$0xff]
    %v1117 = vld [vmem:[#allocation10 + $0x18] sm:$0xff]
    %v1118 = vld [vmem:[#allocation10 + $0x20] sm:$0xff]
    %v1119 = vld [vmem:[#allocation10 + $0x28] sm:$0xff]
    %v1120 = vld [vmem:[#allocation10 + $0x30] sm:$0xff]
    %v1121 = vld [vmem:[#allocation10 + $0x38] sm:$0xff]
    %1122 = vmatprep.subr.mxu0 0.0
    %1123 = vmatpush1.msra.mxu0 %v1114
    %1124 = vmatprep.subr.mxu0 0.0
    %1125 = vmatpush1.msra.mxu0 %v1115
    %1126 = vmatprep.subr.mxu0 0.0
    %1127 = vmatpush1.msra.mxu0 %v1116
    %1128 = vmatprep.subr.mxu0 0.0
    %1129 = vmatpush1.msra.mxu0 %v1117
    %1130 = vmatprep.subr.mxu0 0.0
    %1131 = vmatpush1.msra.mxu0 %v1118
    %1132 = vmatprep.subr.mxu0 0.0
    %1133 = vmatpush1.msra.mxu0 %v1119
    %1134 = vmatprep.subr.mxu0 0.0
    %1135 = vmatpush1.msra.mxu0 %v1120
    %1136 = vmatprep.subr.mxu0 0.0
    %1137 = vmatpush1.msra.mxu0 %v1121
    %1138 = vmatprep.subr.mxu0 0.0
    %1139 = vmatpush1.msra.mxu0 0.0
    %1140 = vmatprep.subr.mxu0 0.0
    %1141 = vmatpush1.msra.mxu0 0.0
    %1142 = vmatprep.subr.mxu0 0.0
    %1143 = vmatpush1.msra.mxu0 0.0
    %1144 = vmatprep.subr.mxu0 0.0
    %1145 = vmatpush1.msra.mxu0 0.0
    %1146 = vmatprep.subr.mxu0 0.0
    %1147 = vmatpush1.msra.mxu0 0.0
    %1148 = vmatprep.subr.mxu0 0.0
    %1149 = vmatpush1.msra.mxu0 0.0
    %1150 = vmatprep.subr.mxu0 0.0
    %1151 = vmatpush1.msra.mxu0 0.0
    %1152 = vmatprep.subr.mxu0 0.0
    %1153 = vmatpush1.msra.mxu0 0.0
    %1154 = vmatprep.subr.mxu0 0.0
    %1155 = vmatpush1.msra.mxu0 0.0
    %1156 = vmatprep.subr.mxu0 0.0
    %1157 = vmatpush1.msra.mxu0 0.0
    %1158 = vmatprep.subr.mxu0 0.0
    %1159 = vmatpush1.msra.mxu0 0.0
    %1160 = vmatprep.subr.mxu0 0.0
    %1161 = vmatpush1.msra.mxu0 0.0
    %1162 = vmatprep.subr.mxu0 0.0
    %1163 = vmatpush1.msra.mxu0 0.0
    %1164 = vmatprep.subr.mxu0 0.0
    %1165 = vmatpush1.msra.mxu0 0.0
    %1166 = vmatprep.subr.mxu0 0.0
    %1167 = vmatpush1.msra.mxu0 0.0
    %1168 = vmatprep.subr.mxu0 0.0
    %1169 = vmatpush1.msra.mxu0 0.0
    %1170 = vmatprep.subr.mxu0 0.0
    %1171 = vmatpush1.msra.mxu0 0.0
    %1172 = vmatprep.subr.mxu0 0.0
    %1173 = vmatpush1.msra.mxu0 0.0
    %1174 = vmatprep.subr.mxu0 0.0
    %1175 = vmatpush1.msra.mxu0 0.0
    %1176 = vmatprep.subr.mxu0 0.0
    %1177 = vmatpush1.msra.mxu0 0.0
    %1178 = vmatprep.subr.mxu0 0.0
    %1179 = vmatpush1.msra.mxu0 0.0
    %1180 = vmatprep.subr.mxu0 0.0
    %1181 = vmatpush1.msra.mxu0 0.0
    %1182 = vmatprep.subr.mxu0 0.0
    %1183 = vmatpush1.msra.mxu0 0.0
    %1184 = vmatprep.subr.mxu0 0.0
    %1185 = vmatpush1.msra.mxu0 0.0
    %1186 = vmatprep.mubr.f32.mxu0 0.0
    %1187 = vmatmul.mubr.f32.gmra.mrb[0].mxu0 %v1018
    %v1188 = vpop.f32.mrb[0].mxu0
    %v1189 = vadd.f32 0.0, %v1188
    %v1190 = vpop.f32.mrb[0].mxu0
    %1191 = vmatprep.mubr.f32.mxu0 0.0
    %1192 = vmatmul.mubr.f32.gmra.mrb[0].mxu0 %v1021
    %v1193 = vpop.f32.mrb[0].mxu0
    %v1194 = vadd.f32 0.0, %v1193
    %v1195 = vpop.f32.mrb[0].mxu0
    %1196 = vmatprep.mubr.f32.mxu0 0.0
    %1197 = vmatmul.mubr.f32.gmra.mrb[0].mxu0 %v1024
    %v1198 = vpop.f32.mrb[0].mxu0
    %v1199 = vadd.f32 0.0, %v1198
    %v1200 = vpop.f32.mrb[0].mxu0
    %1201 = vmatprep.mubr.f32.mxu0 0.0
    %1202 = vmatmul.mubr.f32.gmra.mrb[0].mxu0 %v1027
    %v1203 = vpop.f32.mrb[0].mxu0
    %v1204 = vadd.f32 0.0, %v1203
    %v1205 = vpop.f32.mrb[0].mxu0
    %1206 = vdwg.mxu0
    %v1207 = vmax.f32 %v1096, %v1189
    %v1208 = vmax.f32 %v1101, %v1194
    %v1209 = vmax.f32 %v1106, %v1199
    %v1210 = vmax.f32 %v1111, %v1204
    %vm1211 = vcmask 253952
    %1212 = vst.msk [vmem:[#allocation2] sm:$0x1] %vm1211, 0.0
    %1213 = vst.msk [vmem:[#allocation2 + $0x11] sm:$0x1] %vm1211, 0.0
    %vm1214 = vcmask 261120
    %1215 = vst.msk [vmem:[#allocation2 + $0x1] sm:$0xff] %vm1214, %v1207
    %1216 = vst.msk [vmem:[#allocation2 + $0x9] sm:$0xff] %vm1214, %v1208
    %1217 = vst.msk [vmem:[#allocation2 + $0x18] sm:$0x1] %vm1211, 0.0
    %1218 = vst.msk [vmem:[#allocation2 + $0x29] sm:$0x1] %vm1211, 0.0
    %1219 = vst.msk [vmem:[#allocation2 + $0x19] sm:$0xff] %vm1214, %v1209
    %1220 = vst.msk [vmem:[#allocation2 + $0x21] sm:$0xff] %vm1214, %v1210
    %v1221 = vld [vmem:[#allocation2] sm:$0xff]
    %v1222 = vld [vmem:[#allocation2 + $0x8] sm:$0xff]
    %v1223 = vld [vmem:[#allocation2 + $0x10] sm:$0xff]
    %v1224 = vld [vmem:[#allocation2 + $0x18] sm:$0xff]
    %v1225 = vld [vmem:[#allocation2 + $0x20] sm:$0xff]
    %v1226 = vpack.c.bf16 %v1222, %v1221
    %v1227 = vpack.c.bf16 %v1224, %v1223
    %v1228 = vpack.c.bf16 %v1225, %v1225
    %v1229 = vld [vmem:[#allocation11] sm:$0xf]
    %v1230 = vld [vmem:[#allocation11 + $0x4] sm:$0xf]
    %v1231 = vld [vmem:[#allocation11 + $0x8] sm:$0xf]
    %v1232 = vld [vmem:[#allocation11 + $0xc] sm:$0xf]
    %v1233 = vld [vmem:[#allocation2 + $0x1] sm:$0xff]
    %v1234 = vld [vmem:[#allocation2 + $0x9] sm:$0xff]
    %v1235 = vld [vmem:[#allocation2 + $0x11] sm:$0xff]
    %v1236 = vld [vmem:[#allocation2 + $0x19] sm:$0xff]
    %v1237 = vld [vmem:[#allocation2 + $0x21] sm:$0xff]
    %v1238 = vpack.c.bf16 %v1234, %v1233
    %v1239 = vpack.c.bf16 %v1236, %v1235
    %v1240 = vpack.c.bf16 %v1237, %v1237
    %s1241 = scalar_lea.vmem [#allocation11], 16
    %v1242 = vld [vmem:[%s1241] sm:$0xf]
    %v1243 = vld [vmem:[%s1241 + $0x4] sm:$0xf]
    %v1244 = vld [vmem:[%s1241 + $0x8] sm:$0xf]
    %v1245 = vld [vmem:[%s1241 + $0xc] sm:$0xf]
    %v1250 = vunpack.c.l.b16 %v1242
    %v1251 = vunpack.c.l.b16 %v1243
    %v1252 = vunpack.c.l.b16 %v1244
    %v1253 = vunpack.c.l.b16 %v1245
    %v1254 = vpack.c.b16 %v1251, %v1250
    %v1255 = vpack.c.b16 %v1253, %v1252
    %v1259 = vsel %vm1214, %v1238, 0
    %v1262 = vsel %vm1214, %v1239, 0
    %v1265 = vsel %vm1214, %v1240, 0
    %1267 = vmatprep.subr.bf16.mxu0 0
    %1268 = vmatpush1.bf16.msra.mxu0 %v1254
    %1269 = vmatprep.subr.bf16.mxu0 0
    %1270 = vmatpush1.bf16.msra.mxu0 %v1255
    %1271 = vmatprep.subr.bf16.mxu0 0
    %1272 = vmatpush1.bf16.msra.mxu0 0
    %1273 = vmatprep.subr.bf16.mxu0 0
    %1274 = vmatpush1.bf16.msra.mxu0 0
    %1275 = vmatprep.subr.bf16.mxu0 0
    %1276 = vmatpush1.bf16.msra.mxu0 0
    %1277 = vmatprep.subr.bf16.mxu0 0
    %1278 = vmatpush1.bf16.msra.mxu0 0
    %1279 = vmatprep.subr.bf16.mxu0 0
    %1280 = vmatpush1.bf16.msra.mxu0 0
    %1281 = vmatprep.subr.bf16.mxu0 0
    %1282 = vmatpush1.bf16.msra.mxu0 0
    %1283 = vmatprep.subr.bf16.mxu0 0
    %1284 = vmatpush1.bf16.msra.mxu0 0
    %1285 = vmatprep.subr.bf16.mxu0 0
    %1286 = vmatpush1.bf16.msra.mxu0 0
    %1287 = vmatprep.subr.bf16.mxu0 0
    %1288 = vmatpush1.bf16.msra.mxu0 0
    %1289 = vmatprep.subr.bf16.mxu0 0
    %1290 = vmatpush1.bf16.msra.mxu0 0
    %1291 = vmatprep.subr.bf16.mxu0 0
    %1292 = vmatpush1.bf16.msra.mxu0 0
    %1293 = vmatprep.subr.bf16.mxu0 0
    %1294 = vmatpush1.bf16.msra.mxu0 0
    %1295 = vmatprep.subr.bf16.mxu0 0
    %1296 = vmatpush1.bf16.msra.mxu0 0
    %1297 = vmatprep.subr.bf16.mxu0 0
    %1298 = vmatpush1.bf16.msra.mxu0 0
    %1299 = vmatprep.mubr.bf16.mxu0 0
    %1300 = vmatmul.mubr.bf16.gmra.mrb[0].mxu0 %v1259
    %v1301 = vpop.f32.mrb[0].mxu0
    %v1302 = vadd.f32 0.0, %v1301
    %v1303 = vpop.f32.mrb[0].mxu0
    %v1304 = vpop.f32.mrb[0].mxu0
    %v1305 = vadd.f32 0.0, %v1304
    %v1306 = vpop.f32.mrb[0].mxu0
    %1307 = vmatprep.mubr.bf16.mxu0 0
    %1308 = vmatmul.mubr.bf16.gmra.mrb[0].mxu0 %v1262
    %v1309 = vpop.f32.mrb[0].mxu0
    %v1310 = vpop.f32.mrb[0].mxu0
    %v1311 = vpop.f32.mrb[0].mxu0
    %v1312 = vadd.f32 0.0, %v1311
    %v1313 = vpop.f32.mrb[0].mxu0
    %1314 = vmatprep.mubr.bf16.mxu0 0
    %1315 = vmatmul.mubr.bf16.gmra.mrb[0].mxu0 %v1265
    %v1316 = vpop.f32.mrb[0].mxu0
    %v1317 = vadd.f32 0.0, %v1316
    %v1318 = vpop.f32.mrb[0].mxu0
    %v1319 = vpop.f32.mrb[0].mxu0
    %v1320 = vpop.f32.mrb[0].mxu0
    %1321 = vdwg.mxu0
    %v1326 = vunpack.c.l.b16 %v1229
    %v1327 = vunpack.c.l.b16 %v1230
    %v1328 = vunpack.c.l.b16 %v1231
    %v1329 = vunpack.c.l.b16 %v1232
    %v1330 = vpack.c.b16 %v1327, %v1326
    %v1331 = vpack.c.b16 %v1329, %v1328
    %v1335 = vsel %vm1214, %v1226, 0
    %v1338 = vsel %vm1214, %v1227, 0
    %v1341 = vsel %vm1214, %v1228, 0
    %1343 = vmatprep.subr.bf16.mxu0 0
    %1344 = vmatpush1.bf16.msra.mxu0 %v1330
    %1345 = vmatprep.subr.bf16.mxu0 0
    %1346 = vmatpush1.bf16.msra.mxu0 %v1331
    %1347 = vmatprep.subr.bf16.mxu0 0
    %1348 = vmatpush1.bf16.msra.mxu0 0
    %1349 = vmatprep.subr.bf16.mxu0 0
    %1350 = vmatpush1.bf16.msra.mxu0 0
    %1351 = vmatprep.subr.bf16.mxu0 0
    %1352 = vmatpush1.bf16.msra.mxu0 0
    %1353 = vmatprep.subr.bf16.mxu0 0
    %1354 = vmatpush1.bf16.msra.mxu0 0
    %1355 = vmatprep.subr.bf16.mxu0 0
    %1356 = vmatpush1.bf16.msra.mxu0 0
    %1357 = vmatprep.subr.bf16.mxu0 0
    %1358 = vmatpush1.bf16.msra.mxu0 0
    %1359 = vmatprep.subr.bf16.mxu0 0
    %1360 = vmatpush1.bf16.msra.mxu0 0
    %1361 = vmatprep.subr.bf16.mxu0 0
    %1362 = vmatpush1.bf16.msra.mxu0 0
    %1363 = vmatprep.subr.bf16.mxu0 0
    %1364 = vmatpush1.bf16.msra.mxu0 0
    %1365 = vmatprep.subr.bf16.mxu0 0
    %1366 = vmatpush1.bf16.msra.mxu0 0
    %1367 = vmatprep.subr.bf16.mxu0 0
    %1368 = vmatpush1.bf16.msra.mxu0 0
    %1369 = vmatprep.subr.bf16.mxu0 0
    %1370 = vmatpush1.bf16.msra.mxu0 0
    %1371 = vmatprep.subr.bf16.mxu0 0
    %1372 = vmatpush1.bf16.msra.mxu0 0
    %1373 = vmatprep.subr.bf16.mxu0 0
    %1374 = vmatpush1.bf16.msra.mxu0 0
    %1375 = vmatprep.mubr.bf16.mxu0 0
    %1376 = vmatmul.mubr.bf16.gmra.mrb[0].mxu0 %v1335
    %v1377 = vpop.f32.mrb[0].mxu0
    %v1378 = vadd.f32 %v1302, %v1377
    %v1379 = vpop.f32.mrb[0].mxu0
    %v1380 = vpop.f32.mrb[0].mxu0
    %v1381 = vadd.f32 %v1305, %v1380
    %v1382 = vpop.f32.mrb[0].mxu0
    %1383 = vmatprep.mubr.bf16.mxu0 0
    %1384 = vmatmul.mubr.bf16.gmra.mrb[0].mxu0 %v1338
    %v1385 = vpop.f32.mrb[0].mxu0
    %v1386 = vpop.f32.mrb[0].mxu0
    %v1387 = vpop.f32.mrb[0].mxu0
    %v1388 = vadd.f32 %v1312, %v1387
    %v1389 = vpop.f32.mrb[0].mxu0
    %1390 = vmatprep.mubr.bf16.mxu0 0
    %1391 = vmatmul.mubr.bf16.gmra.mrb[0].mxu0 %v1341
    %v1392 = vpop.f32.mrb[0].mxu0
    %v1393 = vadd.f32 %v1317, %v1392
    %v1394 = vpop.f32.mrb[0].mxu0
    %v1395 = vpop.f32.mrb[0].mxu0
    %v1396 = vpop.f32.mrb[0].mxu0
    %1397 = vdwg.mxu0
    %v1398 = vld [vmem:[#allocation2 + $0x2] sm:$0xff]
    %v1399 = vld [vmem:[#allocation2 + $0xa] sm:$0xff]
    %v1400 = vld [vmem:[#allocation2 + $0x12] sm:$0xff]
    %v1401 = vld [vmem:[#allocation2 + $0x1a] sm:$0xff]
    %v1402 = vld [vmem:[#allocation2 + $0x22] sm:$0xff]
    %v1403 = vpack.c.bf16 %v1399, %v1398
    %v1404 = vpack.c.bf16 %v1401, %v1400
    %v1405 = vpack.c.bf16 %v1402, %v1402
    %s1406 = scalar_lea.vmem [#allocation11], 32
    %v1407 = vld [vmem:[%s1406] sm:$0xf]
    %v1408 = vld [vmem:[%s1406 + $0x4] sm:$0xf]
    %v1409 = vld [vmem:[%s1406 + $0x8] sm:$0xf]
    %v1410 = vld [vmem:[%s1406 + $0xc] sm:$0xf]
    %v1415 = vunpack.c.l.b16 %v1407
    %v1416 = vunpack.c.l.b16 %v1408
    %v1417 = vunpack.c.l.b16 %v1409
    %v1418 = vunpack.c.l.b16 %v1410
    %v1419 = vpack.c.b16 %v1416, %v1415
    %v1420 = vpack.c.b16 %v1418, %v1417
    %v1424 = vsel %vm1214, %v1403, 0
    %v1427 = vsel %vm1214, %v1404, 0
    %v1430 = vsel %vm1214, %v1405, 0
    %1432 = vmatprep.subr.bf16.mxu0 0
    %1433 = vmatpush1.bf16.msra.mxu0 %v1419
    %1434 = vmatprep.subr.bf16.mxu0 0
    %1435 = vmatpush1.bf16.msra.mxu0 %v1420
    %1436 = vmatprep.subr.bf16.mxu0 0
    %1437 = vmatpush1.bf16.msra.mxu0 0
    %1438 = vmatprep.subr.bf16.mxu0 0
    %1439 = vmatpush1.bf16.msra.mxu0 0
    %1440 = vmatprep.subr.bf16.mxu0 0
    %1441 = vmatpush1.bf16.msra.mxu0 0
    %1442 = vmatprep.subr.bf16.mxu0 0
    %1443 = vmatpush1.bf16.msra.mxu0 0
    %1444 = vmatprep.subr.bf16.mxu0 0
    %1445 = vmatpush1.bf16.msra.mxu0 0
    %1446 = vmatprep.subr.bf16.mxu0 0
    %1447 = vmatpush1.bf16.msra.mxu0 0
    %1448 = vmatprep.subr.bf16.mxu0 0
    %1449 = vmatpush1.bf16.msra.mxu0 0
    %1450 = vmatprep.subr.bf16.mxu0 0
    %1451 = vmatpush1.bf16.msra.mxu0 0
    %1452 = vmatprep.subr.bf16.mxu0 0
    %1453 = vmatpush1.bf16.msra.mxu0 0
    %1454 = vmatprep.subr.bf16.mxu0 0
    %1455 = vmatpush1.bf16.msra.mxu0 0
    %1456 = vmatprep.subr.bf16.mxu0 0
    %1457 = vmatpush1.bf16.msra.mxu0 0
    %1458 = vmatprep.subr.bf16.mxu0 0
    %1459 = vmatpush1.bf16.msra.mxu0 0
    %1460 = vmatprep.subr.bf16.mxu0 0
    %1461 = vmatpush1.bf16.msra.mxu0 0
    %1462 = vmatprep.subr.bf16.mxu0 0
    %1463 = vmatpush1.bf16.msra.mxu0 0
    %1464 = vmatprep.mubr.bf16.mxu0 0
    %1465 = vmatmul.mubr.bf16.gmra.mrb[0].mxu0 %v1424
    %v1466 = vpop.f32.mrb[0].mxu0
    %v1467 = vadd.f32 0.0, %v1466
    %v1468 = vpop.f32.mrb[0].mxu0
    %v1469 = vpop.f32.mrb[0].mxu0
    %v1470 = vadd.f32 0.0, %v1469
    %v1471 = vpop.f32.mrb[0].mxu0
    %1472 = vmatprep.mubr.bf16.mxu0 0
    %1473 = vmatmul.mubr.bf16.gmra.mrb[0].mxu0 %v1427
    %v1474 = vpop.f32.mrb[0].mxu0
    %v1475 = vpop.f32.mrb[0].mxu0
    %v1476 = vpop.f32.mrb[0].mxu0
    %v1477 = vadd.f32 0.0, %v1476
    %v1478 = vpop.f32.mrb[0].mxu0
    %1479 = vmatprep.mubr.bf16.mxu0 0
    %1480 = vmatmul.mubr.bf16.gmra.mrb[0].mxu0 %v1430
    %v1481 = vpop.f32.mrb[0].mxu0
    %v1482 = vadd.f32 0.0, %v1481
    %v1483 = vpop.f32.mrb[0].mxu0
    %v1484 = vpop.f32.mrb[0].mxu0
    %v1485 = vpop.f32.mrb[0].mxu0
    %1486 = vdwg.mxu0
    %v1487 = vadd.f32 %v1378, %v1467
    %v1488 = vadd.f32 %v1381, %v1470
    %v1489 = vadd.f32 %v1388, %v1477
    %v1490 = vadd.f32 %v1393, %v1482
    %v1491 = vld [vmem:[#allocation13] sm:$0x1]
    %v1493 = vlaneseq
    %v1494 = vshrl.u32 %v1493, 7
    %v1495 = vsub.s32 0, %v1494
    %v1496 = vrot.slane %v1491, %v1495
    %v1498 = vadd.f32 %v1487, %v1496
    %v1499 = vadd.f32 %v1488, %v1496
    %v1500 = vadd.f32 %v1489, %v1496
    %v1501 = vadd.f32 %v1490, %v1496
    %v1502 = vmax.f32 %v1498, 0.0
    %v1503 = vmax.f32 %v1499, 0.0
    %v1504 = vmax.f32 %v1500, 0.0
    %v1505 = vmax.f32 %v1501, 0.0
    %v1506 = vld [vmem:[#allocation14] sm:$0xff]
    %v1507 = vld [vmem:[#allocation14 + $0x8] sm:$0xff]
    %v1509 = vsel %vm1214, %v1506, 0
    %v1512 = vsel %vm1214, %v1507, 0
    %1514 = vmatprep.subr.mxu0 0.0
    %1515 = vmatpush1.msra.mxu0 %v1502
    %1516 = vmatprep.subr.mxu0 0.0
    %1517 = vmatpush1.msra.mxu0 %v1503
    %1518 = vmatprep.subr.mxu0 0.0
    %1519 = vmatpush1.msra.mxu0 %v1504
    %1520 = vmatprep.subr.mxu0 0.0
    %1521 = vmatpush1.msra.mxu0 %v1505
    %1522 = vmatprep.subr.mxu0 0.0
    %1523 = vmatpush1.msra.mxu0 0.0
    %1524 = vmatprep.subr.mxu0 0.0
    %1525 = vmatpush1.msra.mxu0 0.0
    %1526 = vmatprep.subr.mxu0 0.0
    %1527 = vmatpush1.msra.mxu0 0.0
    %1528 = vmatprep.subr.mxu0 0.0
    %1529 = vmatpush1.msra.mxu0 0.0
    %1530 = vmatprep.subr.mxu0 0.0
    %1531 = vmatpush1.msra.mxu0 0.0
    %1532 = vmatprep.subr.mxu0 0.0
    %1533 = vmatpush1.msra.mxu0 0.0
    %1534 = vmatprep.subr.mxu0 0.0
    %1535 = vmatpush1.msra.mxu0 0.0
    %1536 = vmatprep.subr.mxu0 0.0
    %1537 = vmatpush1.msra.mxu0 0.0
    %1538 = vmatprep.subr.mxu0 0.0
    %1539 = vmatpush1.msra.mxu0 0.0
    %1540 = vmatprep.subr.mxu0 0.0
    %1541 = vmatpush1.msra.mxu0 0.0
    %1542 = vmatprep.subr.mxu0 0.0
    %1543 = vmatpush1.msra.mxu0 0.0
    %1544 = vmatprep.subr.mxu0 0.0
    %1545 = vmatpush1.msra.mxu0 0.0
    %1546 = vmatprep.subr.mxu0 0.0
    %1547 = vmatpush1.msra.mxu0 0.0
    %1548 = vmatprep.subr.mxu0 0.0
    %1549 = vmatpush1.msra.mxu0 0.0
    %1550 = vmatprep.subr.mxu0 0.0
    %1551 = vmatpush1.msra.mxu0 0.0
    %1552 = vmatprep.subr.mxu0 0.0
    %1553 = vmatpush1.msra.mxu0 0.0
    %1554 = vmatprep.subr.mxu0 0.0
    %1555 = vmatpush1.msra.mxu0 0.0
    %1556 = vmatprep.subr.mxu0 0.0
    %1557 = vmatpush1.msra.mxu0 0.0
    %1558 = vmatprep.subr.mxu0 0.0
    %1559 = vmatpush1.msra.mxu0 0.0
    %1560 = vmatprep.subr.mxu0 0.0
    %1561 = vmatpush1.msra.mxu0 0.0
    %1562 = vmatprep.subr.mxu0 0.0
    %1563 = vmatpush1.msra.mxu0 0.0
    %1564 = vmatprep.subr.mxu0 0.0
    %1565 = vmatpush1.msra.mxu0 0.0
    %1566 = vmatprep.subr.mxu0 0.0
    %1567 = vmatpush1.msra.mxu0 0.0
    %1568 = vmatprep.subr.mxu0 0.0
    %1569 = vmatpush1.msra.mxu0 0.0
    %1570 = vmatprep.subr.mxu0 0.0
    %1571 = vmatpush1.msra.mxu0 0.0
    %1572 = vmatprep.subr.mxu0 0.0
    %1573 = vmatpush1.msra.mxu0 0.0
    %1574 = vmatprep.subr.mxu0 0.0
    %1575 = vmatpush1.msra.mxu0 0.0
    %1576 = vmatprep.subr.mxu0 0.0
    %1577 = vmatpush1.msra.mxu0 0.0
    %1578 = vmatprep.mubr.f32.mxu0 0.0
    %1579 = vmatmul.mubr.f32.gmra.mrb[0].mxu0 %v1509
    %v1580 = vpop.f32.mrb[0].mxu0
    %v1581 = vadd.f32 0.0, %v1580
    %v1582 = vpop.f32.mrb[0].mxu0
    %1583 = vmatprep.mubr.f32.mxu0 0.0
    %1584 = vmatmul.mubr.f32.gmra.mrb[0].mxu0 %v1512
    %v1585 = vpop.f32.mrb[0].mxu0
    %v1586 = vadd.f32 0.0, %v1585
    %v1587 = vpop.f32.mrb[0].mxu0
    %1588 = vdwg.mxu0
    %v1589 = vld [vmem:[#allocation16] sm:$0xff]
    %v1590 = vld [vmem:[#allocation16 + $0x8] sm:$0xff]
    %v1592 = vsel %vm1214, %v1589, 0
    %v1595 = vsel %vm1214, %v1590, 0
    %1597 = vmatprep.subr.mxu0 0.0
    %1598 = vmatpush1.msra.mxu0 %v1502
    %1599 = vmatprep.subr.mxu0 0.0
    %1600 = vmatpush1.msra.mxu0 %v1503
    %1601 = vmatprep.subr.mxu0 0.0
    %1602 = vmatpush1.msra.mxu0 %v1504
    %1603 = vmatprep.subr.mxu0 0.0
    %1604 = vmatpush1.msra.mxu0 %v1505
    %1605 = vmatprep.subr.mxu0 0.0
    %1606 = vmatpush1.msra.mxu0 0.0
    %1607 = vmatprep.subr.mxu0 0.0
    %1608 = vmatpush1.msra.mxu0 0.0
    %1609 = vmatprep.subr.mxu0 0.0
    %1610 = vmatpush1.msra.mxu0 0.0
    %1611 = vmatprep.subr.mxu0 0.0
    %1612 = vmatpush1.msra.mxu0 0.0
    %1613 = vmatprep.subr.mxu0 0.0
    %1614 = vmatpush1.msra.mxu0 0.0
    %1615 = vmatprep.subr.mxu0 0.0
    %1616 = vmatpush1.msra.mxu0 0.0
    %1617 = vmatprep.subr.mxu0 0.0
    %1618 = vmatpush1.msra.mxu0 0.0
    %1619 = vmatprep.subr.mxu0 0.0
    %1620 = vmatpush1.msra.mxu0 0.0
    %1621 = vmatprep.subr.mxu0 0.0
    %1622 = vmatpush1.msra.mxu0 0.0
    %1623 = vmatprep.subr.mxu0 0.0
    %1624 = vmatpush1.msra.mxu0 0.0
    %1625 = vmatprep.subr.mxu0 0.0
    %1626 = vmatpush1.msra.mxu0 0.0
    %1627 = vmatprep.subr.mxu0 0.0
    %1628 = vmatpush1.msra.mxu0 0.0
    %1629 = vmatprep.subr.mxu0 0.0
    %1630 = vmatpush1.msra.mxu0 0.0
    %1631 = vmatprep.subr.mxu0 0.0
    %1632 = vmatpush1.msra.mxu0 0.0
    %1633 = vmatprep.subr.mxu0 0.0
    %1634 = vmatpush1.msra.mxu0 0.0
    %1635 = vmatprep.subr.mxu0 0.0
    %1636 = vmatpush1.msra.mxu0 0.0
    %1637 = vmatprep.subr.mxu0 0.0
    %1638 = vmatpush1.msra.mxu0 0.0
    %1639 = vmatprep.subr.mxu0 0.0
    %1640 = vmatpush1.msra.mxu0 0.0
    %1641 = vmatprep.subr.mxu0 0.0
    %1642 = vmatpush1.msra.mxu0 0.0
    %1643 = vmatprep.subr.mxu0 0.0
    %1644 = vmatpush1.msra.mxu0 0.0
    %1645 = vmatprep.subr.mxu0 0.0
    %1646 = vmatpush1.msra.mxu0 0.0
    %1647 = vmatprep.subr.mxu0 0.0
    %1648 = vmatpush1.msra.mxu0 0.0
    %1649 = vmatprep.subr.mxu0 0.0
    %1650 = vmatpush1.msra.mxu0 0.0
    %1651 = vmatprep.subr.mxu0 0.0
    %1652 = vmatpush1.msra.mxu0 0.0
    %1653 = vmatprep.subr.mxu0 0.0
    %1654 = vmatpush1.msra.mxu0 0.0
    %1655 = vmatprep.subr.mxu0 0.0
    %1656 = vmatpush1.msra.mxu0 0.0
    %1657 = vmatprep.subr.mxu0 0.0
    %1658 = vmatpush1.msra.mxu0 0.0
    %1659 = vmatprep.subr.mxu0 0.0
    %1660 = vmatpush1.msra.mxu0 0.0
    %1661 = vmatprep.mubr.f32.mxu0 0.0
    %1662 = vmatmul.mubr.f32.gmra.mrb[0].mxu0 %v1592
    %v1663 = vpop.f32.mrb[0].mxu0
    %v1664 = vadd.f32 0.0, %v1663
    %v1665 = vpop.f32.mrb[0].mxu0
    %1666 = vmatprep.mubr.f32.mxu0 0.0
    %1667 = vmatmul.mubr.f32.gmra.mrb[0].mxu0 %v1595
    %v1668 = vpop.f32.mrb[0].mxu0
    %v1669 = vadd.f32 0.0, %v1668
    %v1670 = vpop.f32.mrb[0].mxu0
    %1671 = vdwg.mxu0
    %v1672 = vmax.f32 %v1581, %v1664
    %v1673 = vmax.f32 %v1586, %v1669
    %v1674 = vld [vmem:[#allocation17] sm:$0xff]
    %v1675 = vld [vmem:[#allocation17 + $0x8] sm:$0xff]
    %v1676 = vld [vmem:[#allocation17 + $0x10] sm:$0xff]
    %v1677 = vld [vmem:[#allocation17 + $0x18] sm:$0xff]
    %v1678 = vld [vmem:[#allocation17 + $0x20] sm:$0xff]
    %v1679 = vld [vmem:[#allocation17 + $0x28] sm:$0xff]
    %v1680 = vld [vmem:[#allocation17 + $0x30] sm:$0xff]
    %v1681 = vld [vmem:[#allocation17 + $0x38] sm:$0xff]
    %v1683 = vsel %vm806, %v1672, 0
    %v1686 = vsel %vm806, %v1673, 0
    %1688 = vmatprep.subr.mxu0 0.0
    %1689 = vmatpush1.msra.mxu0 %v1674
    %1690 = vmatprep.subr.mxu0 0.0
    %1691 = vmatpush1.msra.mxu0 %v1675
    %1692 = vmatprep.subr.mxu0 0.0
    %1693 = vmatpush1.msra.mxu0 %v1676
    %1694 = vmatprep.subr.mxu0 0.0
    %1695 = vmatpush1.msra.mxu0 %v1677
    %1696 = vmatprep.subr.mxu0 0.0
    %1697 = vmatpush1.msra.mxu0 %v1678
    %1698 = vmatprep.subr.mxu0 0.0
    %1699 = vmatpush1.msra.mxu0 %v1679
    %1700 = vmatprep.subr.mxu0 0.0
    %1701 = vmatpush1.msra.mxu0 %v1680
    %1702 = vmatprep.subr.mxu0 0.0
    %1703 = vmatpush1.msra.mxu0 %v1681
    %1704 = vmatprep.subr.mxu0 0.0
    %1705 = vmatpush1.msra.mxu0 0.0
    %1706 = vmatprep.subr.mxu0 0.0
    %1707 = vmatpush1.msra.mxu0 0.0
    %1708 = vmatprep.subr.mxu0 0.0
    %1709 = vmatpush1.msra.mxu0 0.0
    %1710 = vmatprep.subr.mxu0 0.0
    %1711 = vmatpush1.msra.mxu0 0.0
    %1712 = vmatprep.subr.mxu0 0.0
    %1713 = vmatpush1.msra.mxu0 0.0
    %1714 = vmatprep.subr.mxu0 0.0
    %1715 = vmatpush1.msra.mxu0 0.0
    %1716 = vmatprep.subr.mxu0 0.0
    %1717 = vmatpush1.msra.mxu0 0.0
    %1718 = vmatprep.subr.mxu0 0.0
    %1719 = vmatpush1.msra.mxu0 0.0
    %1720 = vmatprep.subr.mxu0 0.0
    %1721 = vmatpush1.msra.mxu0 0.0
    %1722 = vmatprep.subr.mxu0 0.0
    %1723 = vmatpush1.msra.mxu0 0.0
    %1724 = vmatprep.subr.mxu0 0.0
    %1725 = vmatpush1.msra.mxu0 0.0
    %1726 = vmatprep.subr.mxu0 0.0
    %1727 = vmatpush1.msra.mxu0 0.0
    %1728 = vmatprep.subr.mxu0 0.0
    %1729 = vmatpush1.msra.mxu0 0.0
    %1730 = vmatprep.subr.mxu0 0.0
    %1731 = vmatpush1.msra.mxu0 0.0
    %1732 = vmatprep.subr.mxu0 0.0
    %1733 = vmatpush1.msra.mxu0 0.0
    %1734 = vmatprep.subr.mxu0 0.0
    %1735 = vmatpush1.msra.mxu0 0.0
    %1736 = vmatprep.subr.mxu0 0.0
    %1737 = vmatpush1.msra.mxu0 0.0
    %1738 = vmatprep.subr.mxu0 0.0
    %1739 = vmatpush1.msra.mxu0 0.0
    %1740 = vmatprep.subr.mxu0 0.0
    %1741 = vmatpush1.msra.mxu0 0.0
    %1742 = vmatprep.subr.mxu0 0.0
    %1743 = vmatpush1.msra.mxu0 0.0
    %1744 = vmatprep.subr.mxu0 0.0
    %1745 = vmatpush1.msra.mxu0 0.0
    %1746 = vmatprep.subr.mxu0 0.0
    %1747 = vmatpush1.msra.mxu0 0.0
    %1748 = vmatprep.subr.mxu0 0.0
    %1749 = vmatpush1.msra.mxu0 0.0
    %1750 = vmatprep.subr.mxu0 0.0
    %1751 = vmatpush1.msra.mxu0 0.0
    %1752 = vmatprep.mubr.f32.mxu0 0.0
    %1753 = vmatmul.mubr.f32.gmra.mrb[0].mxu0 %v1683
    %v1754 = vpop.f32.mrb[0].mxu0
    %v1755 = vadd.f32 0.0, %v1754
    %v1756 = vpop.f32.mrb[0].mxu0
    %1757 = vmatprep.mubr.f32.mxu0 0.0
    %1758 = vmatmul.mubr.f32.gmra.mrb[0].mxu0 %v1686
    %v1759 = vpop.f32.mrb[0].mxu0
    %v1760 = vadd.f32 0.0, %v1759
    %v1761 = vpop.f32.mrb[0].mxu0
    %1762 = vdwg.mxu0
    %v1763 = vld [vmem:[#allocation19] sm:$0xff]
    %v1764 = vld [vmem:[#allocation19 + $0x8] sm:$0xff]
    %v1765 = vld [vmem:[#allocation19 + $0x10] sm:$0xff]
    %v1766 = vld [vmem:[#allocation19 + $0x18] sm:$0xff]
    %v1767 = vld [vmem:[#allocation19 + $0x20] sm:$0xff]
    %v1768 = vld [vmem:[#allocation19 + $0x28] sm:$0xff]
    %v1769 = vld [vmem:[#allocation19 + $0x30] sm:$0xff]
    %v1770 = vld [vmem:[#allocation19 + $0x38] sm:$0xff]
    %1771 = vmatprep.subr.mxu0 0.0
    %1772 = vmatpush1.msra.mxu0 %v1763
    %1773 = vmatprep.subr.mxu0 0.0
    %1774 = vmatpush1.msra.mxu0 %v1764
    %1775 = vmatprep.subr.mxu0 0.0
    %1776 = vmatpush1.msra.mxu0 %v1765
    %1777 = vmatprep.subr.mxu0 0.0
    %1778 = vmatpush1.msra.mxu0 %v1766
    %1779 = vmatprep.subr.mxu0 0.0
    %1780 = vmatpush1.msra.mxu0 %v1767
    %1781 = vmatprep.subr.mxu0 0.0
    %1782 = vmatpush1.msra.mxu0 %v1768
    %1783 = vmatprep.subr.mxu0 0.0
    %1784 = vmatpush1.msra.mxu0 %v1769
    %1785 = vmatprep.subr.mxu0 0.0
    %1786 = vmatpush1.msra.mxu0 %v1770
    %1787 = vmatprep.subr.mxu0 0.0
    %1788 = vmatpush1.msra.mxu0 0.0
    %1789 = vmatprep.subr.mxu0 0.0
    %1790 = vmatpush1.msra.mxu0 0.0
    %1791 = vmatprep.subr.mxu0 0.0
    %1792 = vmatpush1.msra.mxu0 0.0
    %1793 = vmatprep.subr.mxu0 0.0
    %1794 = vmatpush1.msra.mxu0 0.0
    %1795 = vmatprep.subr.mxu0 0.0
    %1796 = vmatpush1.msra.mxu0 0.0
    %1797 = vmatprep.subr.mxu0 0.0
    %1798 = vmatpush1.msra.mxu0 0.0
    %1799 = vmatprep.subr.mxu0 0.0
    %1800 = vmatpush1.msra.mxu0 0.0
    %1801 = vmatprep.subr.mxu0 0.0
    %1802 = vmatpush1.msra.mxu0 0.0
    %1803 = vmatprep.subr.mxu0 0.0
    %1804 = vmatpush1.msra.mxu0 0.0
    %1805 = vmatprep.subr.mxu0 0.0
    %1806 = vmatpush1.msra.mxu0 0.0
    %1807 = vmatprep.subr.mxu0 0.0
    %1808 = vmatpush1.msra.mxu0 0.0
    %1809 = vmatprep.subr.mxu0 0.0
    %1810 = vmatpush1.msra.mxu0 0.0
    %1811 = vmatprep.subr.mxu0 0.0
    %1812 = vmatpush1.msra.mxu0 0.0
    %1813 = vmatprep.subr.mxu0 0.0
    %1814 = vmatpush1.msra.mxu0 0.0
    %1815 = vmatprep.subr.mxu0 0.0
    %1816 = vmatpush1.msra.mxu0 0.0
    %1817 = vmatprep.subr.mxu0 0.0
    %1818 = vmatpush1.msra.mxu0 0.0
    %1819 = vmatprep.subr.mxu0 0.0
    %1820 = vmatpush1.msra.mxu0 0.0
    %1821 = vmatprep.subr.mxu0 0.0
    %1822 = vmatpush1.msra.mxu0 0.0
    %1823 = vmatprep.subr.mxu0 0.0
    %1824 = vmatpush1.msra.mxu0 0.0
    %1825 = vmatprep.subr.mxu0 0.0
    %1826 = vmatpush1.msra.mxu0 0.0
    %1827 = vmatprep.subr.mxu0 0.0
    %1828 = vmatpush1.msra.mxu0 0.0
    %1829 = vmatprep.subr.mxu0 0.0
    %1830 = vmatpush1.msra.mxu0 0.0
    %1831 = vmatprep.subr.mxu0 0.0
    %1832 = vmatpush1.msra.mxu0 0.0
    %1833 = vmatprep.subr.mxu0 0.0
    %1834 = vmatpush1.msra.mxu0 0.0
    %1835 = vmatprep.mubr.f32.mxu0 0.0
    %1836 = vmatmul.mubr.f32.gmra.mrb[0].mxu0 %v1683
    %v1837 = vpop.f32.mrb[0].mxu0
    %v1838 = vadd.f32 0.0, %v1837
    %v1839 = vpop.f32.mrb[0].mxu0
    %1840 = vmatprep.mubr.f32.mxu0 0.0
    %1841 = vmatmul.mubr.f32.gmra.mrb[0].mxu0 %v1686
    %v1842 = vpop.f32.mrb[0].mxu0
    %v1843 = vadd.f32 0.0, %v1842
    %v1844 = vpop.f32.mrb[0].mxu0
    %1845 = vdwg.mxu0
    %v1846 = vmax.f32 %v1755, %v1838
    %v1847 = vmax.f32 %v1760, %v1843
    %1848 = vst.msk [vmem:[#allocation2] sm:$0x1] %vm1211, 0.0
    %1849 = vst.msk [vmem:[#allocation2 + $0x9] sm:$0x1] %vm1211, 0.0
    %1850 = vst.msk [vmem:[#allocation2 + $0x1] sm:$0xff] %vm1214, %v1846
    %1851 = vst.msk [vmem:[#allocation2 + $0x10] sm:$0x1] %vm1211, 0.0
    %1852 = vst.msk [vmem:[#allocation2 + $0x19] sm:$0x1] %vm1211, 0.0
    %1853 = vst.msk [vmem:[#allocation2 + $0x11] sm:$0xff] %vm1214, %v1847
    %v1854 = vld [vmem:[#allocation2] sm:$0xff]
    %v1855 = vld [vmem:[#allocation2 + $0x8] sm:$0xff]
    %v1856 = vld [vmem:[#allocation2 + $0x10] sm:$0xff]
    %v1857 = vpack.c.bf16 %v1855, %v1854
    %v1858 = vpack.c.bf16 %v1856, %v1856
    %v1859 = vld [vmem:[#allocation20] sm:$0xf]
    %v1860 = vld [vmem:[#allocation20 + $0x4] sm:$0xf]
    %v1861 = vld [vmem:[#allocation20 + $0x8] sm:$0xf]
    %v1862 = vld [vmem:[#allocation20 + $0xc] sm:$0xf]
    %v1863 = vld [vmem:[#allocation2 + $0x1] sm:$0xff]
    %v1864 = vld [vmem:[#allocation2 + $0x9] sm:$0xff]
    %v1865 = vld [vmem:[#allocation2 + $0x11] sm:$0xff]
    %v1866 = vpack.c.bf16 %v1864, %v1863
    %v1867 = vpack.c.bf16 %v1865, %v1865
    %s1868 = scalar_lea.vmem [#allocation20], 16
    %v1869 = vld [vmem:[%s1868] sm:$0xf]
    %v1870 = vld [vmem:[%s1868 + $0x4] sm:$0xf]
    %v1871 = vld [vmem:[%s1868 + $0x8] sm:$0xf]
    %v1872 = vld [vmem:[%s1868 + $0xc] sm:$0xf]
    %v1877 = vunpack.c.l.b16 %v1869
    %v1878 = vunpack.c.l.b16 %v1870
    %v1879 = vunpack.c.l.b16 %v1871
    %v1880 = vunpack.c.l.b16 %v1872
    %v1881 = vpack.c.b16 %v1878, %v1877
    %v1882 = vpack.c.b16 %v1880, %v1879
    %v1886 = vsel %vm1214, %v1866, 0
    %v1889 = vsel %vm1214, %v1867, 0
    %1891 = vmatprep.subr.bf16.mxu0 0
    %1892 = vmatpush1.bf16.msra.mxu0 %v1881
    %1893 = vmatprep.subr.bf16.mxu0 0
    %1894 = vmatpush1.bf16.msra.mxu0 %v1882
    %1895 = vmatprep.subr.bf16.mxu0 0
    %1896 = vmatpush1.bf16.msra.mxu0 0
    %1897 = vmatprep.subr.bf16.mxu0 0
    %1898 = vmatpush1.bf16.msra.mxu0 0
    %1899 = vmatprep.subr.bf16.mxu0 0
    %1900 = vmatpush1.bf16.msra.mxu0 0
    %1901 = vmatprep.subr.bf16.mxu0 0
    %1902 = vmatpush1.bf16.msra.mxu0 0
    %1903 = vmatprep.subr.bf16.mxu0 0
    %1904 = vmatpush1.bf16.msra.mxu0 0
    %1905 = vmatprep.subr.bf16.mxu0 0
    %1906 = vmatpush1.bf16.msra.mxu0 0
    %1907 = vmatprep.subr.bf16.mxu0 0
    %1908 = vmatpush1.bf16.msra.mxu0 0
    %1909 = vmatprep.subr.bf16.mxu0 0
    %1910 = vmatpush1.bf16.msra.mxu0 0
    %1911 = vmatprep.subr.bf16.mxu0 0
    %1912 = vmatpush1.bf16.msra.mxu0 0
    %1913 = vmatprep.subr.bf16.mxu0 0
    %1914 = vmatpush1.bf16.msra.mxu0 0
    %1915 = vmatprep.subr.bf16.mxu0 0
    %1916 = vmatpush1.bf16.msra.mxu0 0
    %1917 = vmatprep.subr.bf16.mxu0 0
    %1918 = vmatpush1.bf16.msra.mxu0 0
    %1919 = vmatprep.subr.bf16.mxu0 0
    %1920 = vmatpush1.bf16.msra.mxu0 0
    %1921 = vmatprep.subr.bf16.mxu0 0
    %1922 = vmatpush1.bf16.msra.mxu0 0
    %1923 = vmatprep.mubr.bf16.mxu0 0
    %1924 = vmatmul.mubr.bf16.gmra.mrb[0].mxu0 %v1886
    %v1925 = vpop.f32.mrb[0].mxu0
    %v1926 = vadd.f32 0.0, %v1925
    %v1927 = vpop.f32.mrb[0].mxu0
    %v1928 = vpop.f32.mrb[0].mxu0
    %v1929 = vpop.f32.mrb[0].mxu0
    %1930 = vmatprep.mubr.bf16.mxu0 0
    %1931 = vmatmul.mubr.bf16.gmra.mrb[0].mxu0 %v1889
    %v1932 = vpop.f32.mrb[0].mxu0
    %v1933 = vadd.f32 0.0, %v1932
    %v1934 = vpop.f32.mrb[0].mxu0
    %v1935 = vpop.f32.mrb[0].mxu0
    %v1936 = vpop.f32.mrb[0].mxu0
    %1937 = vdwg.mxu0
    %v1942 = vunpack.c.l.b16 %v1859
    %v1943 = vunpack.c.l.b16 %v1860
    %v1944 = vunpack.c.l.b16 %v1861
    %v1945 = vunpack.c.l.b16 %v1862
    %v1946 = vpack.c.b16 %v1943, %v1942
    %v1947 = vpack.c.b16 %v1945, %v1944
    %v1951 = vsel %vm1214, %v1857, 0
    %v1954 = vsel %vm1214, %v1858, 0
    %1956 = vmatprep.subr.bf16.mxu0 0
    %1957 = vmatpush1.bf16.msra.mxu0 %v1946
    %1958 = vmatprep.subr.bf16.mxu0 0
    %1959 = vmatpush1.bf16.msra.mxu0 %v1947
    %1960 = vmatprep.subr.bf16.mxu0 0
    %1961 = vmatpush1.bf16.msra.mxu0 0
    %1962 = vmatprep.subr.bf16.mxu0 0
    %1963 = vmatpush1.bf16.msra.mxu0 0
    %1964 = vmatprep.subr.bf16.mxu0 0
    %1965 = vmatpush1.bf16.msra.mxu0 0
    %1966 = vmatprep.subr.bf16.mxu0 0
    %1967 = vmatpush1.bf16.msra.mxu0 0
    %1968 = vmatprep.subr.bf16.mxu0 0
    %1969 = vmatpush1.bf16.msra.mxu0 0
    %1970 = vmatprep.subr.bf16.mxu0 0
    %1971 = vmatpush1.bf16.msra.mxu0 0
    %1972 = vmatprep.subr.bf16.mxu0 0
    %1973 = vmatpush1.bf16.msra.mxu0 0
    %1974 = vmatprep.subr.bf16.mxu0 0
    %1975 = vmatpush1.bf16.msra.mxu0 0
    %1976 = vmatprep.subr.bf16.mxu0 0
    %1977 = vmatpush1.bf16.msra.mxu0 0
    %1978 = vmatprep.subr.bf16.mxu0 0
    %1979 = vmatpush1.bf16.msra.mxu0 0
    %1980 = vmatprep.subr.bf16.mxu0 0
    %1981 = vmatpush1.bf16.msra.mxu0 0
    %1982 = vmatprep.subr.bf16.mxu0 0
    %1983 = vmatpush1.bf16.msra.mxu0 0
    %1984 = vmatprep.subr.bf16.mxu0 0
    %1985 = vmatpush1.bf16.msra.mxu0 0
    %1986 = vmatprep.subr.bf16.mxu0 0
    %1987 = vmatpush1.bf16.msra.mxu0 0
    %1988 = vmatprep.mubr.bf16.mxu0 0
    %1989 = vmatmul.mubr.bf16.gmra.mrb[0].mxu0 %v1951
    %v1990 = vpop.f32.mrb[0].mxu0
    %v1991 = vadd.f32 %v1926, %v1990
    %v1992 = vpop.f32.mrb[0].mxu0
    %v1993 = vpop.f32.mrb[0].mxu0
    %v1994 = vpop.f32.mrb[0].mxu0
    %1995 = vmatprep.mubr.bf16.mxu0 0
    %1996 = vmatmul.mubr.bf16.gmra.mrb[0].mxu0 %v1954
    %v1997 = vpop.f32.mrb[0].mxu0
    %v1998 = vadd.f32 %v1933, %v1997
    %v1999 = vpop.f32.mrb[0].mxu0
    %v2000 = vpop.f32.mrb[0].mxu0
    %v2001 = vpop.f32.mrb[0].mxu0
    %2002 = vdwg.mxu0
    %v2003 = vld [vmem:[#allocation2 + $0x2] sm:$0xff]
    %v2004 = vld [vmem:[#allocation2 + $0xa] sm:$0xff]
    %v2005 = vld [vmem:[#allocation2 + $0x12] sm:$0xff]
    %v2006 = vpack.c.bf16 %v2004, %v2003
    %v2007 = vpack.c.bf16 %v2005, %v2005
    %s2008 = scalar_lea.vmem [#allocation20], 32
    %v2009 = vld [vmem:[%s2008] sm:$0xf]
    %v2010 = vld [vmem:[%s2008 + $0x4] sm:$0xf]
    %v2011 = vld [vmem:[%s2008 + $0x8] sm:$0xf]
    %v2012 = vld [vmem:[%s2008 + $0xc] sm:$0xf]
    %v2017 = vunpack.c.l.b16 %v2009
    %v2018 = vunpack.c.l.b16 %v2010
    %v2019 = vunpack.c.l.b16 %v2011
    %v2020 = vunpack.c.l.b16 %v2012
    %v2021 = vpack.c.b16 %v2018, %v2017
    %v2022 = vpack.c.b16 %v2020, %v2019
    %v2026 = vsel %vm1214, %v2006, 0
    %v2029 = vsel %vm1214, %v2007, 0
    %2031 = vmatprep.subr.bf16.mxu0 0
    %2032 = vmatpush1.bf16.msra.mxu0 %v2021
    %2033 = vmatprep.subr.bf16.mxu0 0
    %2034 = vmatpush1.bf16.msra.mxu0 %v2022
    %2035 = vmatprep.subr.bf16.mxu0 0
    %2036 = vmatpush1.bf16.msra.mxu0 0
    %2037 = vmatprep.subr.bf16.mxu0 0
    %2038 = vmatpush1.bf16.msra.mxu0 0
    %2039 = vmatprep.subr.bf16.mxu0 0
    %2040 = vmatpush1.bf16.msra.mxu0 0
    %2041 = vmatprep.subr.bf16.mxu0 0
    %2042 = vmatpush1.bf16.msra.mxu0 0
    %2043 = vmatprep.subr.bf16.mxu0 0
    %2044 = vmatpush1.bf16.msra.mxu0 0
    %2045 = vmatprep.subr.bf16.mxu0 0
    %2046 = vmatpush1.bf16.msra.mxu0 0
    %2047 = vmatprep.subr.bf16.mxu0 0
    %2048 = vmatpush1.bf16.msra.mxu0 0
    %2049 = vmatprep.subr.bf16.mxu0 0
    %2050 = vmatpush1.bf16.msra.mxu0 0
    %2051 = vmatprep.subr.bf16.mxu0 0
    %2052 = vmatpush1.bf16.msra.mxu0 0
    %2053 = vmatprep.subr.bf16.mxu0 0
    %2054 = vmatpush1.bf16.msra.mxu0 0
    %2055 = vmatprep.subr.bf16.mxu0 0
    %2056 = vmatpush1.bf16.msra.mxu0 0
    %2057 = vmatprep.subr.bf16.mxu0 0
    %2058 = vmatpush1.bf16.msra.mxu0 0
    %2059 = vmatprep.subr.bf16.mxu0 0
    %2060 = vmatpush1.bf16.msra.mxu0 0
    %2061 = vmatprep.subr.bf16.mxu0 0
    %2062 = vmatpush1.bf16.msra.mxu0 0
    %2063 = vmatprep.mubr.bf16.mxu0 0
    %2064 = vmatmul.mubr.bf16.gmra.mrb[0].mxu0 %v2026
    %v2065 = vpop.f32.mrb[0].mxu0
    %v2066 = vadd.f32 0.0, %v2065
    %v2067 = vpop.f32.mrb[0].mxu0
    %v2068 = vpop.f32.mrb[0].mxu0
    %v2069 = vpop.f32.mrb[0].mxu0
    %2070 = vmatprep.mubr.bf16.mxu0 0
    %2071 = vmatmul.mubr.bf16.gmra.mrb[0].mxu0 %v2029
    %v2072 = vpop.f32.mrb[0].mxu0
    %v2073 = vadd.f32 0.0, %v2072
    %v2074 = vpop.f32.mrb[0].mxu0
    %v2075 = vpop.f32.mrb[0].mxu0
    %v2076 = vpop.f32.mrb[0].mxu0
    %2077 = vdwg.mxu0
    %v2078 = vadd.f32 %v1991, %v2066
    %v2079 = vadd.f32 %v1998, %v2073
    %v2080 = vld [vmem:[#allocation22] sm:$0x1]
    %v2082 = vlaneseq
    %v2083 = vshrl.u32 %v2082, 7
    %v2084 = vsub.s32 0, %v2083
    %v2085 = vrot.slane %v2080, %v2084
    %v2087 = vadd.f32 %v2078, %v2085
    %v2088 = vadd.f32 %v2079, %v2085
    %v2089 = vmax.f32 %v2087, 0.0
    %v2090 = vmax.f32 %v2088, 0.0
    %vm2091 = vcmask 516096
    %2092 = vst.msk [vmem:[#allocation2] sm:$0x1] %vm2091, 0.0
    %2093 = vst.msk [vmem:[#allocation2 + $0x9] sm:$0x1] %vm2091, 0.0
    %2094 = vst.msk [vmem:[#allocation2 + $0x1] sm:$0xff] %vm806, %v2089
    %2095 = vst.msk [vmem:[#allocation2 + $0x10] sm:$0x1] %vm2091, 0.0
    %2096 = vst.msk [vmem:[#allocation2 + $0x19] sm:$0x1] %vm2091, 0.0
    %2097 = vst.msk [vmem:[#allocation2 + $0x11] sm:$0xff] %vm806, %v2090
    %v2098 = vld [vmem:[#allocation2] sm:$0xff]
    %v2099 = vld [vmem:[#allocation2 + $0x8] sm:$0xff]
    %v2100 = vld [vmem:[#allocation2 + $0x10] sm:$0xff]
    %v2101 = vpack.c.bf16 %v2099, %v2098
    %v2102 = vpack.c.bf16 %v2100, %v2100
    %v2103 = vld [vmem:[#allocation23] sm:$0xf]
    %v2104 = vld [vmem:[#allocation23 + $0x4] sm:$0xf]
    %v2105 = vld [vmem:[#allocation23 + $0x8] sm:$0xf]
    %v2106 = vld [vmem:[#allocation23 + $0xc] sm:$0xf]
    %v2107 = vld [vmem:[#allocation23 + $0x10] sm:$0xf]
    %v2108 = vld [vmem:[#allocation23 + $0x14] sm:$0xf]
    %v2109 = vld [vmem:[#allocation23 + $0x18] sm:$0xf]
    %v2110 = vld [vmem:[#allocation23 + $0x1c] sm:$0xf]
    %v2111 = vld [vmem:[#allocation2 + $0x1] sm:$0xff]
    %v2112 = vld [vmem:[#allocation2 + $0x9] sm:$0xff]
    %v2113 = vld [vmem:[#allocation2 + $0x11] sm:$0xff]
    %v2114 = vpack.c.bf16 %v2112, %v2111
    %v2115 = vpack.c.bf16 %v2113, %v2113
    %s2116 = scalar_lea.vmem [#allocation23], 32
    %v2117 = vld [vmem:[%s2116] sm:$0xf]
    %v2118 = vld [vmem:[%s2116 + $0x4] sm:$0xf]
    %v2119 = vld [vmem:[%s2116 + $0x8] sm:$0xf]
    %v2120 = vld [vmem:[%s2116 + $0xc] sm:$0xf]
    %v2121 = vld [vmem:[%s2116 + $0x10] sm:$0xf]
    %v2122 = vld [vmem:[%s2116 + $0x14] sm:$0xf]
    %v2123 = vld [vmem:[%s2116 + $0x18] sm:$0xf]
    %v2124 = vld [vmem:[%s2116 + $0x1c] sm:$0xf]
    %v2133 = vunpack.c.l.b16 %v2117
    %v2134 = vunpack.c.l.b16 %v2118
    %v2135 = vunpack.c.l.b16 %v2119
    %v2136 = vunpack.c.l.b16 %v2120
    %v2137 = vunpack.c.l.b16 %v2121
    %v2138 = vunpack.c.l.b16 %v2122
    %v2139 = vunpack.c.l.b16 %v2123
    %v2140 = vunpack.c.l.b16 %v2124
    %v2141 = vpack.c.b16 %v2134, %v2133
    %v2142 = vpack.c.b16 %v2136, %v2135
    %v2143 = vpack.c.b16 %v2138, %v2137
    %v2144 = vpack.c.b16 %v2140, %v2139
    %v2150 = vsel %vm806, %v2114, 0
    %v2153 = vsel %vm806, %v2115, 0
    %2155 = vmatprep.subr.bf16.mxu0 0
    %2156 = vmatpush1.bf16.msra.mxu0 %v2141
    %2157 = vmatprep.subr.bf16.mxu0 0
    %2158 = vmatpush1.bf16.msra.mxu0 %v2142
    %2159 = vmatprep.subr.bf16.mxu0 0
    %2160 = vmatpush1.bf16.msra.mxu0 %v2143
    %2161 = vmatprep.subr.bf16.mxu0 0
    %2162 = vmatpush1.bf16.msra.mxu0 %v2144
    %2163 = vmatprep.subr.bf16.mxu0 0
    %2164 = vmatpush1.bf16.msra.mxu0 0
    %2165 = vmatprep.subr.bf16.mxu0 0
    %2166 = vmatpush1.bf16.msra.mxu0 0
    %2167 = vmatprep.subr.bf16.mxu0 0
    %2168 = vmatpush1.bf16.msra.mxu0 0
    %2169 = vmatprep.subr.bf16.mxu0 0
    %2170 = vmatpush1.bf16.msra.mxu0 0
    %2171 = vmatprep.subr.bf16.mxu0 0
    %2172 = vmatpush1.bf16.msra.mxu0 0
    %2173 = vmatprep.subr.bf16.mxu0 0
    %2174 = vmatpush1.bf16.msra.mxu0 0
    %2175 = vmatprep.subr.bf16.mxu0 0
    %2176 = vmatpush1.bf16.msra.mxu0 0
    %2177 = vmatprep.subr.bf16.mxu0 0
    %2178 = vmatpush1.bf16.msra.mxu0 0
    %2179 = vmatprep.subr.bf16.mxu0 0
    %2180 = vmatpush1.bf16.msra.mxu0 0
    %2181 = vmatprep.subr.bf16.mxu0 0
    %2182 = vmatpush1.bf16.msra.mxu0 0
    %2183 = vmatprep.subr.bf16.mxu0 0
    %2184 = vmatpush1.bf16.msra.mxu0 0
    %2185 = vmatprep.subr.bf16.mxu0 0
    %2186 = vmatpush1.bf16.msra.mxu0 0
    %2187 = vmatprep.mubr.bf16.mxu0 0
    %2188 = vmatmul.mubr.bf16.gmra.mrb[0].mxu0 %v2150
    %v2189 = vpop.f32.mrb[0].mxu0
    %v2190 = vadd.f32 0.0, %v2189
    %v2191 = vpop.f32.mrb[0].mxu0
    %v2192 = vpop.f32.mrb[0].mxu0
    %v2193 = vpop.f32.mrb[0].mxu0
    %2194 = vmatprep.mubr.bf16.mxu0 0
    %2195 = vmatmul.mubr.bf16.gmra.mrb[0].mxu0 %v2153
    %v2196 = vpop.f32.mrb[0].mxu0
    %v2197 = vadd.f32 0.0, %v2196
    %v2198 = vpop.f32.mrb[0].mxu0
    %v2199 = vpop.f32.mrb[0].mxu0
    %v2200 = vpop.f32.mrb[0].mxu0
    %2201 = vdwg.mxu0
    %v2210 = vunpack.c.l.b16 %v2103
    %v2211 = vunpack.c.l.b16 %v2104
    %v2212 = vunpack.c.l.b16 %v2105
    %v2213 = vunpack.c.l.b16 %v2106
    %v2214 = vunpack.c.l.b16 %v2107
    %v2215 = vunpack.c.l.b16 %v2108
    %v2216 = vunpack.c.l.b16 %v2109
    %v2217 = vunpack.c.l.b16 %v2110
    %v2218 = vpack.c.b16 %v2211, %v2210
    %v2219 = vpack.c.b16 %v2213, %v2212
    %v2220 = vpack.c.b16 %v2215, %v2214
    %v2221 = vpack.c.b16 %v2217, %v2216
    %v2227 = vsel %vm806, %v2101, 0
    %v2230 = vsel %vm806, %v2102, 0
    %2232 = vmatprep.subr.bf16.mxu0 0
    %2233 = vmatpush1.bf16.msra.mxu0 %v2218
    %2234 = vmatprep.subr.bf16.mxu0 0
    %2235 = vmatpush1.bf16.msra.mxu0 %v2219
    %2236 = vmatprep.subr.bf16.mxu0 0
    %2237 = vmatpush1.bf16.msra.mxu0 %v2220
    %2238 = vmatprep.subr.bf16.mxu0 0
    %2239 = vmatpush1.bf16.msra.mxu0 %v2221
    %2240 = vmatprep.subr.bf16.mxu0 0
    %2241 = vmatpush1.bf16.msra.mxu0 0
    %2242 = vmatprep.subr.bf16.mxu0 0
    %2243 = vmatpush1.bf16.msra.mxu0 0
    %2244 = vmatprep.subr.bf16.mxu0 0
    %2245 = vmatpush1.bf16.msra.mxu0 0
    %2246 = vmatprep.subr.bf16.mxu0 0
    %2247 = vmatpush1.bf16.msra.mxu0 0
    %2248 = vmatprep.subr.bf16.mxu0 0
    %2249 = vmatpush1.bf16.msra.mxu0 0
    %2250 = vmatprep.subr.bf16.mxu0 0
    %2251 = vmatpush1.bf16.msra.mxu0 0
    %2252 = vmatprep.subr.bf16.mxu0 0
    %2253 = vmatpush1.bf16.msra.mxu0 0
    %2254 = vmatprep.subr.bf16.mxu0 0
    %2255 = vmatpush1.bf16.msra.mxu0 0
    %2256 = vmatprep.subr.bf16.mxu0 0
    %2257 = vmatpush1.bf16.msra.mxu0 0
    %2258 = vmatprep.subr.bf16.mxu0 0
    %2259 = vmatpush1.bf16.msra.mxu0 0
    %2260 = vmatprep.subr.bf16.mxu0 0
    %2261 = vmatpush1.bf16.msra.mxu0 0
    %2262 = vmatprep.subr.bf16.mxu0 0
    %2263 = vmatpush1.bf16.msra.mxu0 0
    %2264 = vmatprep.mubr.bf16.mxu0 0
    %2265 = vmatmul.mubr.bf16.gmra.mrb[0].mxu0 %v2227
    %v2266 = vpop.f32.mrb[0].mxu0
    %v2267 = vadd.f32 %v2190, %v2266
    %v2268 = vpop.f32.mrb[0].mxu0
    %v2269 = vpop.f32.mrb[0].mxu0
    %v2270 = vpop.f32.mrb[0].mxu0
    %2271 = vmatprep.mubr.bf16.mxu0 0
    %2272 = vmatmul.mubr.bf16.gmra.mrb[0].mxu0 %v2230
    %v2273 = vpop.f32.mrb[0].mxu0
    %v2274 = vadd.f32 %v2197, %v2273
    %v2275 = vpop.f32.mrb[0].mxu0
    %v2276 = vpop.f32.mrb[0].mxu0
    %v2277 = vpop.f32.mrb[0].mxu0
    %2278 = vdwg.mxu0
    %v2279 = vld [vmem:[#allocation2 + $0x2] sm:$0xff]
    %v2280 = vld [vmem:[#allocation2 + $0xa] sm:$0xff]
    %v2281 = vld [vmem:[#allocation2 + $0x12] sm:$0xff]
    %v2282 = vpack.c.bf16 %v2280, %v2279
    %v2283 = vpack.c.bf16 %v2281, %v2281
    %s2284 = scalar_lea.vmem [#allocation23], 64
    %v2285 = vld [vmem:[%s2284] sm:$0xf]
    %v2286 = vld [vmem:[%s2284 + $0x4] sm:$0xf]
    %v2287 = vld [vmem:[%s2284 + $0x8] sm:$0xf]
    %v2288 = vld [vmem:[%s2284 + $0xc] sm:$0xf]
    %v2289 = vld [vmem:[%s2284 + $0x10] sm:$0xf]
    %v2290 = vld [vmem:[%s2284 + $0x14] sm:$0xf]
    %v2291 = vld [vmem:[%s2284 + $0x18] sm:$0xf]
    %v2292 = vld [vmem:[%s2284 + $0x1c] sm:$0xf]
    %v2301 = vunpack.c.l.b16 %v2285
    %v2302 = vunpack.c.l.b16 %v2286
    %v2303 = vunpack.c.l.b16 %v2287
    %v2304 = vunpack.c.l.b16 %v2288
    %v2305 = vunpack.c.l.b16 %v2289
    %v2306 = vunpack.c.l.b16 %v2290
    %v2307 = vunpack.c.l.b16 %v2291
    %v2308 = vunpack.c.l.b16 %v2292
    %v2309 = vpack.c.b16 %v2302, %v2301
    %v2310 = vpack.c.b16 %v2304, %v2303
    %v2311 = vpack.c.b16 %v2306, %v2305
    %v2312 = vpack.c.b16 %v2308, %v2307
    %v2318 = vsel %vm806, %v2282, 0
    %v2321 = vsel %vm806, %v2283, 0
    %2323 = vmatprep.subr.bf16.mxu0 0
    %2324 = vmatpush1.bf16.msra.mxu0 %v2309
    %2325 = vmatprep.subr.bf16.mxu0 0
    %2326 = vmatpush1.bf16.msra.mxu0 %v2310
    %2327 = vmatprep.subr.bf16.mxu0 0
    %2328 = vmatpush1.bf16.msra.mxu0 %v2311
    %2329 = vmatprep.subr.bf16.mxu0 0
    %2330 = vmatpush1.bf16.msra.mxu0 %v2312
    %2331 = vmatprep.subr.bf16.mxu0 0
    %2332 = vmatpush1.bf16.msra.mxu0 0
    %2333 = vmatprep.subr.bf16.mxu0 0
    %2334 = vmatpush1.bf16.msra.mxu0 0
    %2335 = vmatprep.subr.bf16.mxu0 0
    %2336 = vmatpush1.bf16.msra.mxu0 0
    %2337 = vmatprep.subr.bf16.mxu0 0
    %2338 = vmatpush1.bf16.msra.mxu0 0
    %2339 = vmatprep.subr.bf16.mxu0 0
    %2340 = vmatpush1.bf16.msra.mxu0 0
    %2341 = vmatprep.subr.bf16.mxu0 0
    %2342 = vmatpush1.bf16.msra.mxu0 0
    %2343 = vmatprep.subr.bf16.mxu0 0
    %2344 = vmatpush1.bf16.msra.mxu0 0
    %2345 = vmatprep.subr.bf16.mxu0 0
    %2346 = vmatpush1.bf16.msra.mxu0 0
    %2347 = vmatprep.subr.bf16.mxu0 0
    %2348 = vmatpush1.bf16.msra.mxu0 0
    %2349 = vmatprep.subr.bf16.mxu0 0
    %2350 = vmatpush1.bf16.msra.mxu0 0
    %2351 = vmatprep.subr.bf16.mxu0 0
    %2352 = vmatpush1.bf16.msra.mxu0 0
    %2353 = vmatprep.subr.bf16.mxu0 0
    %2354 = vmatpush1.bf16.msra.mxu0 0
    %2355 = vmatprep.mubr.bf16.mxu0 0
    %2356 = vmatmul.mubr.bf16.gmra.mrb[0].mxu0 %v2318
    %v2357 = vpop.f32.mrb[0].mxu0
    %v2358 = vadd.f32 0.0, %v2357
    %v2359 = vpop.f32.mrb[0].mxu0
    %v2360 = vpop.f32.mrb[0].mxu0
    %v2361 = vpop.f32.mrb[0].mxu0
    %2362 = vmatprep.mubr.bf16.mxu0 0
    %2363 = vmatmul.mubr.bf16.gmra.mrb[0].mxu0 %v2321
    %v2364 = vpop.f32.mrb[0].mxu0
    %v2365 = vadd.f32 0.0, %v2364
    %v2366 = vpop.f32.mrb[0].mxu0
    %v2367 = vpop.f32.mrb[0].mxu0
    %v2368 = vpop.f32.mrb[0].mxu0
    %2369 = vdwg.mxu0
    %v2370 = vadd.f32 %v2267, %v2358
    %v2371 = vadd.f32 %v2274, %v2365
    %v2372 = vld [vmem:[#allocation25] sm:$0x1]
    %v2374 = vlaneseq
    %v2375 = vshrl.u32 %v2374, 7
    %v2376 = vsub.s32 0, %v2375
    %v2377 = vrot.slane %v2372, %v2376
    %v2379 = vadd.f32 %v2370, %v2377
    %v2380 = vadd.f32 %v2371, %v2377
    %v2381 = vmax.f32 %v2379, 0.0
    %v2382 = vmax.f32 %v2380, 0.0
    %v2383 = vld [vmem:[#allocation26] sm:$0xff]
    %v2385 = vsel %vm434, %v2383, 0
    %2387 = vmatprep.subr.mxu0 0.0
    %2388 = vmatpush1.msra.mxu0 %v2381
    %2389 = vmatprep.subr.mxu0 0.0
    %2390 = vmatpush1.msra.mxu0 %v2382
    %2391 = vmatprep.subr.mxu0 0.0
    %2392 = vmatpush1.msra.mxu0 0.0
    %2393 = vmatprep.subr.mxu0 0.0
    %2394 = vmatpush1.msra.mxu0 0.0
    %2395 = vmatprep.subr.mxu0 0.0
    %2396 = vmatpush1.msra.mxu0 0.0
    %2397 = vmatprep.subr.mxu0 0.0
    %2398 = vmatpush1.msra.mxu0 0.0
    %2399 = vmatprep.subr.mxu0 0.0
    %2400 = vmatpush1.msra.mxu0 0.0
    %2401 = vmatprep.subr.mxu0 0.0
    %2402 = vmatpush1.msra.mxu0 0.0
    %2403 = vmatprep.subr.mxu0 0.0
    %2404 = vmatpush1.msra.mxu0 0.0
    %2405 = vmatprep.subr.mxu0 0.0
    %2406 = vmatpush1.msra.mxu0 0.0
    %2407 = vmatprep.subr.mxu0 0.0
    %2408 = vmatpush1.msra.mxu0 0.0
    %2409 = vmatprep.subr.mxu0 0.0
    %2410 = vmatpush1.msra.mxu0 0.0
    %2411 = vmatprep.subr.mxu0 0.0
    %2412 = vmatpush1.msra.mxu0 0.0
    %2413 = vmatprep.subr.mxu0 0.0
    %2414 = vmatpush1.msra.mxu0 0.0
    %2415 = vmatprep.subr.mxu0 0.0
    %2416 = vmatpush1.msra.mxu0 0.0
    %2417 = vmatprep.subr.mxu0 0.0
    %2418 = vmatpush1.msra.mxu0 0.0
    %2419 = vmatprep.subr.mxu0 0.0
    %2420 = vmatpush1.msra.mxu0 0.0
    %2421 = vmatprep.subr.mxu0 0.0
    %2422 = vmatpush1.msra.mxu0 0.0
    %2423 = vmatprep.subr.mxu0 0.0
    %2424 = vmatpush1.msra.mxu0 0.0
    %2425 = vmatprep.subr.mxu0 0.0
    %2426 = vmatpush1.msra.mxu0 0.0
    %2427 = vmatprep.subr.mxu0 0.0
    %2428 = vmatpush1.msra.mxu0 0.0
    %2429 = vmatprep.subr.mxu0 0.0
    %2430 = vmatpush1.msra.mxu0 0.0
    %2431 = vmatprep.subr.mxu0 0.0
    %2432 = vmatpush1.msra.mxu0 0.0
    %2433 = vmatprep.subr.mxu0 0.0
    %2434 = vmatpush1.msra.mxu0 0.0
    %2435 = vmatprep.subr.mxu0 0.0
    %2436 = vmatpush1.msra.mxu0 0.0
    %2437 = vmatprep.subr.mxu0 0.0
    %2438 = vmatpush1.msra.mxu0 0.0
    %2439 = vmatprep.subr.mxu0 0.0
    %2440 = vmatpush1.msra.mxu0 0.0
    %2441 = vmatprep.subr.mxu0 0.0
    %2442 = vmatpush1.msra.mxu0 0.0
    %2443 = vmatprep.subr.mxu0 0.0
    %2444 = vmatpush1.msra.mxu0 0.0
    %2445 = vmatprep.subr.mxu0 0.0
    %2446 = vmatpush1.msra.mxu0 0.0
    %2447 = vmatprep.subr.mxu0 0.0
    %2448 = vmatpush1.msra.mxu0 0.0
    %2449 = vmatprep.subr.mxu0 0.0
    %2450 = vmatpush1.msra.mxu0 0.0
    %2451 = vmatprep.mubr.f32.mxu0 0.0
    %2452 = vmatmul.mubr.f32.gmra.mrb[0].mxu0 %v2385
    %v2453 = vpop.f32.mrb[0].mxu0
    %v2454 = vadd.f32 0.0, %v2453
    %v2455 = vpop.f32.mrb[0].mxu0
    %2456 = vdwg.mxu0
    %v2457 = vld [vmem:[%s37] sm:$0xff]
    %v2459 = vsel %vm434, %v2457, 0
    %2461 = vmatprep.subr.mxu0 0.0
    %2462 = vmatpush1.msra.mxu0 %v2381
    %2463 = vmatprep.subr.mxu0 0.0
    %2464 = vmatpush1.msra.mxu0 %v2382
    %2465 = vmatprep.subr.mxu0 0.0
    %2466 = vmatpush1.msra.mxu0 0.0
    %2467 = vmatprep.subr.mxu0 0.0
    %2468 = vmatpush1.msra.mxu0 0.0
    %2469 = vmatprep.subr.mxu0 0.0
    %2470 = vmatpush1.msra.mxu0 0.0
    %2471 = vmatprep.subr.mxu0 0.0
    %2472 = vmatpush1.msra.mxu0 0.0
    %2473 = vmatprep.subr.mxu0 0.0
    %2474 = vmatpush1.msra.mxu0 0.0
    %2475 = vmatprep.subr.mxu0 0.0
    %2476 = vmatpush1.msra.mxu0 0.0
    %2477 = vmatprep.subr.mxu0 0.0
    %2478 = vmatpush1.msra.mxu0 0.0
    %2479 = vmatprep.subr.mxu0 0.0
    %2480 = vmatpush1.msra.mxu0 0.0
    %2481 = vmatprep.subr.mxu0 0.0
    %2482 = vmatpush1.msra.mxu0 0.0
    %2483 = vmatprep.subr.mxu0 0.0
    %2484 = vmatpush1.msra.mxu0 0.0
    %2485 = vmatprep.subr.mxu0 0.0
    %2486 = vmatpush1.msra.mxu0 0.0
    %2487 = vmatprep.subr.mxu0 0.0
    %2488 = vmatpush1.msra.mxu0 0.0
    %2489 = vmatprep.subr.mxu0 0.0
    %2490 = vmatpush1.msra.mxu0 0.0
    %2491 = vmatprep.subr.mxu0 0.0
    %2492 = vmatpush1.msra.mxu0 0.0
    %2493 = vmatprep.subr.mxu0 0.0
    %2494 = vmatpush1.msra.mxu0 0.0
    %2495 = vmatprep.subr.mxu0 0.0
    %2496 = vmatpush1.msra.mxu0 0.0
    %2497 = vmatprep.subr.mxu0 0.0
    %2498 = vmatpush1.msra.mxu0 0.0
    %2499 = vmatprep.subr.mxu0 0.0
    %2500 = vmatpush1.msra.mxu0 0.0
    %2501 = vmatprep.subr.mxu0 0.0
    %2502 = vmatpush1.msra.mxu0 0.0
    %2503 = vmatprep.subr.mxu0 0.0
    %2504 = vmatpush1.msra.mxu0 0.0
    %2505 = vmatprep.subr.mxu0 0.0
    %2506 = vmatpush1.msra.mxu0 0.0
    %2507 = vmatprep.subr.mxu0 0.0
    %2508 = vmatpush1.msra.mxu0 0.0
    %2509 = vmatprep.subr.mxu0 0.0
    %2510 = vmatpush1.msra.mxu0 0.0
    %2511 = vmatprep.subr.mxu0 0.0
    %2512 = vmatpush1.msra.mxu0 0.0
    %2513 = vmatprep.subr.mxu0 0.0
    %2514 = vmatpush1.msra.mxu0 0.0
    %2515 = vmatprep.subr.mxu0 0.0
    %2516 = vmatpush1.msra.mxu0 0.0
    %2517 = vmatprep.subr.mxu0 0.0
    %2518 = vmatpush1.msra.mxu0 0.0
    %2519 = vmatprep.subr.mxu0 0.0
    %2520 = vmatpush1.msra.mxu0 0.0
    %2521 = vmatprep.subr.mxu0 0.0
    %2522 = vmatpush1.msra.mxu0 0.0
    %2523 = vmatprep.subr.mxu0 0.0
    %2524 = vmatpush1.msra.mxu0 0.0
    %2525 = vmatprep.mubr.f32.mxu0 0.0
    %2526 = vmatmul.mubr.f32.gmra.mrb[0].mxu0 %v2459
    %v2527 = vpop.f32.mrb[0].mxu0
    %v2528 = vadd.f32 0.0, %v2527
    %v2529 = vpop.f32.mrb[0].mxu0
    %2530 = vdwg.mxu0
    %v2531 = vmax.f32 %v2454, %v2528
    %2532 = vst.msk [vmem:[#allocation2] sm:$0x1] %vm2091, 0.0
    %2533 = vst.msk [vmem:[#allocation2 + $0x5] sm:$0x1] %vm2091, 0.0
    %vm2534 = vcmask 519168
    %2535 = vst.msk [vmem:[#allocation2 + $0x1] sm:$0xf] %vm2534, %v2531
    %2536 = vst.msk [vmem:[#allocation2 + $0x8] sm:$0x1] %vm2091, 0.0
    %2537 = vst.msk [vmem:[#allocation2 + $0xd] sm:$0x1] %vm2091, 0.0
    %vm2538 = vcmask 523268
    %2539 = vst.msk [vmem:[#allocation2 + $0x5] sm:$0xf0] %vm2538, %v2531
    %v2540 = vld [vmem:[#allocation2] sm:$0xff]
    %v2541 = vld [vmem:[#allocation2 + $0x8] sm:$0xf]
    %v2542 = vpack.c.bf16 %v2541, %v2540
    %v2543 = vld [vmem:[#allocation28] sm:$0xf]
    %v2544 = vld [vmem:[#allocation28 + $0x4] sm:$0xf]
    %v2545 = vld [vmem:[#allocation28 + $0x8] sm:$0xf]
    %v2546 = vld [vmem:[#allocation28 + $0xc] sm:$0xf]
    %v2547 = vld [vmem:[#allocation28 + $0x10] sm:$0xf]
    %v2548 = vld [vmem:[#allocation28 + $0x14] sm:$0xf]
    %v2549 = vld [vmem:[#allocation28 + $0x18] sm:$0xf]
    %v2550 = vld [vmem:[#allocation28 + $0x1c] sm:$0xf]
    %v2551 = vld [vmem:[#allocation2 + $0x1] sm:$0xff]
    %v2552 = vld [vmem:[#allocation2 + $0x9] sm:$0xf]
    %v2553 = vpack.c.bf16 %v2552, %v2551
    %s2554 = scalar_lea.vmem [#allocation28], 32
    %v2555 = vld [vmem:[%s2554] sm:$0xf]
    %v2556 = vld [vmem:[%s2554 + $0x4] sm:$0xf]
    %v2557 = vld [vmem:[%s2554 + $0x8] sm:$0xf]
    %v2558 = vld [vmem:[%s2554 + $0xc] sm:$0xf]
    %v2559 = vld [vmem:[%s2554 + $0x10] sm:$0xf]
    %v2560 = vld [vmem:[%s2554 + $0x14] sm:$0xf]
    %v2561 = vld [vmem:[%s2554 + $0x18] sm:$0xf]
    %v2562 = vld [vmem:[%s2554 + $0x1c] sm:$0xf]
    %v2571 = vunpack.c.l.b16 %v2555
    %v2572 = vunpack.c.l.b16 %v2556
    %v2573 = vunpack.c.l.b16 %v2557
    %v2574 = vunpack.c.l.b16 %v2558
    %v2575 = vunpack.c.l.b16 %v2559
    %v2576 = vunpack.c.l.b16 %v2560
    %v2577 = vunpack.c.l.b16 %v2561
    %v2578 = vunpack.c.l.b16 %v2562
    %v2579 = vpack.c.b16 %v2572, %v2571
    %v2580 = vpack.c.b16 %v2574, %v2573
    %v2581 = vpack.c.b16 %v2576, %v2575
    %v2582 = vpack.c.b16 %v2578, %v2577
    %v2588 = vsel %vm806, %v2553, 0
    %2590 = vmatprep.subr.bf16.mxu0 0
    %2591 = vmatpush1.bf16.msra.mxu0 %v2579
    %2592 = vmatprep.subr.bf16.mxu0 0
    %2593 = vmatpush1.bf16.msra.mxu0 %v2580
    %2594 = vmatprep.subr.bf16.mxu0 0
    %2595 = vmatpush1.bf16.msra.mxu0 %v2581
    %2596 = vmatprep.subr.bf16.mxu0 0
    %2597 = vmatpush1.bf16.msra.mxu0 %v2582
    %2598 = vmatprep.subr.bf16.mxu0 0
    %2599 = vmatpush1.bf16.msra.mxu0 0
    %2600 = vmatprep.subr.bf16.mxu0 0
    %2601 = vmatpush1.bf16.msra.mxu0 0
    %2602 = vmatprep.subr.bf16.mxu0 0
    %2603 = vmatpush1.bf16.msra.mxu0 0
    %2604 = vmatprep.subr.bf16.mxu0 0
    %2605 = vmatpush1.bf16.msra.mxu0 0
    %2606 = vmatprep.subr.bf16.mxu0 0
    %2607 = vmatpush1.bf16.msra.mxu0 0
    %2608 = vmatprep.subr.bf16.mxu0 0
    %2609 = vmatpush1.bf16.msra.mxu0 0
    %2610 = vmatprep.subr.bf16.mxu0 0
    %2611 = vmatpush1.bf16.msra.mxu0 0
    %2612 = vmatprep.subr.bf16.mxu0 0
    %2613 = vmatpush1.bf16.msra.mxu0 0
    %2614 = vmatprep.subr.bf16.mxu0 0
    %2615 = vmatpush1.bf16.msra.mxu0 0
    %2616 = vmatprep.subr.bf16.mxu0 0
    %2617 = vmatpush1.bf16.msra.mxu0 0
    %2618 = vmatprep.subr.bf16.mxu0 0
    %2619 = vmatpush1.bf16.msra.mxu0 0
    %2620 = vmatprep.subr.bf16.mxu0 0
    %2621 = vmatpush1.bf16.msra.mxu0 0
    %2622 = vmatprep.mubr.bf16.mxu0 0
    %2623 = vmatmul.mubr.bf16.gmra.mrb[0].mxu0 %v2588
    %v2624 = vpop.f32.mrb[0].mxu0
    %v2625 = vadd.f32 0.0, %v2624
    %v2626 = vpop.f32.mrb[0].mxu0
    %v2627 = vpop.f32.mrb[0].mxu0
    %v2628 = vadd.f32 0.0, %v2627
    %v2629 = vpop.f32.mrb[0].mxu0
    %2630 = vdwg.mxu0
    %v2639 = vunpack.c.l.b16 %v2543
    %v2640 = vunpack.c.l.b16 %v2544
    %v2641 = vunpack.c.l.b16 %v2545
    %v2642 = vunpack.c.l.b16 %v2546
    %v2643 = vunpack.c.l.b16 %v2547
    %v2644 = vunpack.c.l.b16 %v2548
    %v2645 = vunpack.c.l.b16 %v2549
    %v2646 = vunpack.c.l.b16 %v2550
    %v2647 = vpack.c.b16 %v2640, %v2639
    %v2648 = vpack.c.b16 %v2642, %v2641
    %v2649 = vpack.c.b16 %v2644, %v2643
    %v2650 = vpack.c.b16 %v2646, %v2645
    %v2656 = vsel %vm806, %v2542, 0
    %2658 = vmatprep.subr.bf16.mxu0 0
    %2659 = vmatpush1.bf16.msra.mxu0 %v2647
    %2660 = vmatprep.subr.bf16.mxu0 0
    %2661 = vmatpush1.bf16.msra.mxu0 %v2648
    %2662 = vmatprep.subr.bf16.mxu0 0
    %2663 = vmatpush1.bf16.msra.mxu0 %v2649
    %2664 = vmatprep.subr.bf16.mxu0 0
    %2665 = vmatpush1.bf16.msra.mxu0 %v2650
    %2666 = vmatprep.subr.bf16.mxu0 0
    %2667 = vmatpush1.bf16.msra.mxu0 0
    %2668 = vmatprep.subr.bf16.mxu0 0
    %2669 = vmatpush1.bf16.msra.mxu0 0
    %2670 = vmatprep.subr.bf16.mxu0 0
    %2671 = vmatpush1.bf16.msra.mxu0 0
    %2672 = vmatprep.subr.bf16.mxu0 0
    %2673 = vmatpush1.bf16.msra.mxu0 0
    %2674 = vmatprep.subr.bf16.mxu0 0
    %2675 = vmatpush1.bf16.msra.mxu0 0
    %2676 = vmatprep.subr.bf16.mxu0 0
    %2677 = vmatpush1.bf16.msra.mxu0 0
    %2678 = vmatprep.subr.bf16.mxu0 0
    %2679 = vmatpush1.bf16.msra.mxu0 0
    %2680 = vmatprep.subr.bf16.mxu0 0
    %2681 = vmatpush1.bf16.msra.mxu0 0
    %2682 = vmatprep.subr.bf16.mxu0 0
    %2683 = vmatpush1.bf16.msra.mxu0 0
    %2684 = vmatprep.subr.bf16.mxu0 0
    %2685 = vmatpush1.bf16.msra.mxu0 0
    %2686 = vmatprep.subr.bf16.mxu0 0
    %2687 = vmatpush1.bf16.msra.mxu0 0
    %2688 = vmatprep.subr.bf16.mxu0 0
    %2689 = vmatpush1.bf16.msra.mxu0 0
    %2690 = vmatprep.mubr.bf16.mxu0 0
    %2691 = vmatmul.mubr.bf16.gmra.mrb[0].mxu0 %v2656
    %v2692 = vpop.f32.mrb[0].mxu0
    %v2693 = vadd.f32 %v2625, %v2692
    %v2694 = vpop.f32.mrb[0].mxu0
    %v2695 = vpop.f32.mrb[0].mxu0
    %v2696 = vadd.f32 %v2628, %v2695
    %v2697 = vpop.f32.mrb[0].mxu0
    %2698 = vdwg.mxu0
    %v2699 = vld [vmem:[#allocation2 + $0x2] sm:$0xff]
    %v2700 = vld [vmem:[#allocation2 + $0xa] sm:$0xf]
    %v2701 = vpack.c.bf16 %v2700, %v2699
    %s2702 = scalar_lea.vmem [#allocation28], 64
    %v2703 = vld [vmem:[%s2702] sm:$0xf]
    %v2704 = vld [vmem:[%s2702 + $0x4] sm:$0xf]
    %v2705 = vld [vmem:[%s2702 + $0x8] sm:$0xf]
    %v2706 = vld [vmem:[%s2702 + $0xc] sm:$0xf]
    %v2707 = vld [vmem:[%s2702 + $0x10] sm:$0xf]
    %v2708 = vld [vmem:[%s2702 + $0x14] sm:$0xf]
    %v2709 = vld [vmem:[%s2702 + $0x18] sm:$0xf]
    %v2710 = vld [vmem:[%s2702 + $0x1c] sm:$0xf]
    %v2719 = vunpack.c.l.b16 %v2703
    %v2720 = vunpack.c.l.b16 %v2704
    %v2721 = vunpack.c.l.b16 %v2705
    %v2722 = vunpack.c.l.b16 %v2706
    %v2723 = vunpack.c.l.b16 %v2707
    %v2724 = vunpack.c.l.b16 %v2708
    %v2725 = vunpack.c.l.b16 %v2709
    %v2726 = vunpack.c.l.b16 %v2710
    %v2727 = vpack.c.b16 %v2720, %v2719
    %v2728 = vpack.c.b16 %v2722, %v2721
    %v2729 = vpack.c.b16 %v2724, %v2723
    %v2730 = vpack.c.b16 %v2726, %v2725
    %v2736 = vsel %vm806, %v2701, 0
    %2738 = vmatprep.subr.bf16.mxu0 0
    %2739 = vmatpush1.bf16.msra.mxu0 %v2727
    %2740 = vmatprep.subr.bf16.mxu0 0
    %2741 = vmatpush1.bf16.msra.mxu0 %v2728
    %2742 = vmatprep.subr.bf16.mxu0 0
    %2743 = vmatpush1.bf16.msra.mxu0 %v2729
    %2744 = vmatprep.subr.bf16.mxu0 0
    %2745 = vmatpush1.bf16.msra.mxu0 %v2730
    %2746 = vmatprep.subr.bf16.mxu0 0
    %2747 = vmatpush1.bf16.msra.mxu0 0
    %2748 = vmatprep.subr.bf16.mxu0 0
    %2749 = vmatpush1.bf16.msra.mxu0 0
    %2750 = vmatprep.subr.bf16.mxu0 0
    %2751 = vmatpush1.bf16.msra.mxu0 0
    %2752 = vmatprep.subr.bf16.mxu0 0
    %2753 = vmatpush1.bf16.msra.mxu0 0
    %2754 = vmatprep.subr.bf16.mxu0 0
    %2755 = vmatpush1.bf16.msra.mxu0 0
    %2756 = vmatprep.subr.bf16.mxu0 0
    %2757 = vmatpush1.bf16.msra.mxu0 0
    %2758 = vmatprep.subr.bf16.mxu0 0
    %2759 = vmatpush1.bf16.msra.mxu0 0
    %2760 = vmatprep.subr.bf16.mxu0 0
    %2761 = vmatpush1.bf16.msra.mxu0 0
    %2762 = vmatprep.subr.bf16.mxu0 0
    %2763 = vmatpush1.bf16.msra.mxu0 0
    %2764 = vmatprep.subr.bf16.mxu0 0
    %2765 = vmatpush1.bf16.msra.mxu0 0
    %2766 = vmatprep.subr.bf16.mxu0 0
    %2767 = vmatpush1.bf16.msra.mxu0 0
    %2768 = vmatprep.subr.bf16.mxu0 0
    %2769 = vmatpush1.bf16.msra.mxu0 0
    %2770 = vmatprep.mubr.bf16.mxu0 0
    %2771 = vmatmul.mubr.bf16.gmra.mrb[0].mxu0 %v2736
    %v2772 = vpop.f32.mrb[0].mxu0
    %v2773 = vadd.f32 0.0, %v2772
    %v2774 = vpop.f32.mrb[0].mxu0
    %v2775 = vpop.f32.mrb[0].mxu0
    %v2776 = vadd.f32 0.0, %v2775
    %v2777 = vpop.f32.mrb[0].mxu0
    %2778 = vdwg.mxu0
    %v2779 = vadd.f32 %v2693, %v2773
    %v2780 = vadd.f32 %v2696, %v2776
    %v2782 = vrot.slane %v2780, 4
    %vm2784 = vcmask 1043456
    %v2785 = vsel %vm2784, %v2779, %v2782
    %v2786 = vrot.slane %v2785, 4
    %v2787 = vadd.f32 %v2785, %v2786
    %v2788 = vrot.slane %v2787, 2
    %v2789 = vadd.f32 %v2787, %v2788
    %v2790 = vrot.slane %v2789, 1
    %v2791 = vadd.f32 %v2789, %v2790
    %v2792 = vmul.f32 %v2785, %v2785
    %v2793 = vrot.slane %v2792, 4
    %v2794 = vadd.f32 %v2792, %v2793
    %v2795 = vrot.slane %v2794, 2
    %v2796 = vadd.f32 %v2794, %v2795
    %v2797 = vrot.slane %v2796, 1
    %v2798 = vadd.f32 %v2796, %v2797
    %2800 = vrot.lane.b32.xlu0 %v2791, 96
    %v2801 = vpop.permute.xlu0 %2800
    %v2803 = vadd.f32 %v2791, %v2801
    %2805 = vrot.lane.b32.xlu0 %v2798, 96
    %v2806 = vpop.permute.xlu0 %2805
    %v2808 = vadd.f32 %v2798, %v2806
    %2809 = vrot.lane.b32.xlu0 %v2791, 64
    %v2810 = vpop.permute.xlu0 %2809
    %v2812 = vadd.f32 %v2803, %v2810
    %2813 = vrot.lane.b32.xlu0 %v2798, 64
    %v2814 = vpop.permute.xlu0 %2813
    %v2816 = vadd.f32 %v2808, %v2814
    %2817 = vrot.lane.b32.xlu0 %v2791, 32
    %v2818 = vpop.permute.xlu0 %2817
    %v2820 = vadd.f32 %v2812, %v2818
    %2821 = vrot.lane.b32.xlu0 %v2798, 32
    %v2822 = vpop.permute.xlu0 %2821
    %v2824 = vadd.f32 %v2816, %v2822
    %v2825 = vrcp.pop 32.0
    %v2826 = vmul.f32 %v2820, %v2825
    %v2827 = vmul.f32 %v2824, %v2825
    %v2828 = vmul.f32 %v2826, %v2826
    %v2829 = vsub.f32 %v2827, %v2828
    %v2830 = vmax.f32 %v2829, 0.0
    %v2831 = vld [vmem:[%s41] sm:$0x1]
    %v2832 = vadd.f32 %v2830, 1e-05
    %v2833 = vrsqrt.pop %v2832
    %v2834 = vmul.f32 %v2831, %v2833
    %v2835 = vld [vmem:[%s43] sm:$0x1]
    %v2836 = vmul.f32 %v2826, %v2834
    %v2837 = vsub.f32 %v2835, %v2836
    %v2839 = vlaneseq
    %v2840 = vshrl.u32 %v2839, 7
    %v2841 = vsub.s32 0, %v2840
    %v2842 = vrot.slane %v2834, %v2841
    %2843 = vrot.lane.b32.xlu0 %v2842, 32
    %v2844 = vpop.permute.xlu0 %2843
    %2846 = vrot.lane.b32.xlu0 %v2842, 64
    %v2847 = vpop.permute.xlu0 %2846
    %2849 = vrot.lane.b32.xlu0 %v2842, 96
    %v2850 = vpop.permute.xlu0 %2849
    %v2852 = vsel %vm1214, %v2834, %v2844
    %v2853 = vsel %vm806, %v2852, %v2847
    %vm2854 = vcmask 785408
    %v2855 = vsel %vm2854, %v2853, %v2850
    %v2857 = vlaneseq
    %v2858 = vshrl.u32 %v2857, 7
    %v2859 = vsub.s32 0, %v2858
    %v2860 = vrot.slane %v2837, %v2859
    %2861 = vrot.lane.b32.xlu0 %v2860, 32
    %v2862 = vpop.permute.xlu0 %2861
    %2864 = vrot.lane.b32.xlu0 %v2860, 64
    %v2865 = vpop.permute.xlu0 %2864
    %2867 = vrot.lane.b32.xlu0 %v2860, 96
    %v2868 = vpop.permute.xlu0 %2867
    %v2870 = vsel %vm1214, %v2837, %v2862
    %v2871 = vsel %vm806, %v2870, %v2865
    %v2872 = vsel %vm2854, %v2871, %v2868
    %v2873 = vlaneseq
    %v2874 = vshrl.u32 %v2873, 7
    %v2875 = vsub.s32 0, %v2874
    %v2876 = vrot.slane %v2855, %v2875
    %v2877 = vmul.f32 %v2785, %v2876
    %v2878 = vlaneseq
    %v2879 = vshrl.u32 %v2878, 7
    %v2880 = vsub.s32 0, %v2879
    %v2881 = vrot.slane %v2872, %v2880
    %v2882 = vadd.f32 %v2877, %v2881
    %v2883 = vmax.f32 %v2882, 0.0
    %2884 = vst [vmem:[#allocation2] sm:$0x1] 0.0
    %2885 = vst [vmem:[#allocation2 + $0x5] sm:$0x1] 0.0
    %2886 = vst [vmem:[#allocation2 + $0x1] sm:$0xf] %v2883
    %2887 = vst [vmem:[#allocation2 + $0x8] sm:$0x1] 0.0
    %2888 = vst [vmem:[#allocation2 + $0xd] sm:$0x1] 0.0
    %2889 = vst [vmem:[#allocation2 + $0x5] sm:$0xf0] %v2883
    %v2890 = vld [vmem:[#allocation2] sm:$0xff]
    %v2891 = vld [vmem:[#allocation2 + $0x8] sm:$0xf]
    %v2892 = vpack.c.bf16 %v2891, %v2890
    %v2893 = vld [vmem:[%s45] sm:$0xf]
    %v2894 = vld [vmem:[%s45 + $0x4] sm:$0xf]
    %v2895 = vld [vmem:[%s45 + $0x8] sm:$0xf]
    %v2896 = vld [vmem:[%s45 + $0xc] sm:$0xf]
    %v2897 = vld [vmem:[%s45 + $0x10] sm:$0xf]
    %v2898 = vld [vmem:[%s45 + $0x14] sm:$0xf]
    %v2899 = vld [vmem:[%s45 + $0x18] sm:$0xf]
    %v2900 = vld [vmem:[%s45 + $0x1c] sm:$0xf]
    %v2901 = vld [vmem:[%s45 + $0x20] sm:$0xf]
    %v2902 = vld [vmem:[%s45 + $0x24] sm:$0xf]
    %v2903 = vld [vmem:[%s45 + $0x28] sm:$0xf]
    %v2904 = vld [vmem:[%s45 + $0x2c] sm:$0xf]
    %v2905 = vld [vmem:[%s45 + $0x30] sm:$0xf]
    %v2906 = vld [vmem:[%s45 + $0x34] sm:$0xf]
    %v2907 = vld [vmem:[%s45 + $0x38] sm:$0xf]
    %v2908 = vld [vmem:[%s45 + $0x3c] sm:$0xf]
    %v2909 = vld [vmem:[#allocation2 + $0x1] sm:$0xff]
    %v2910 = vld [vmem:[#allocation2 + $0x9] sm:$0xf]
    %v2911 = vpack.c.bf16 %v2910, %v2909
    %s2912 = scalar_lea.vmem %s45, 64
    %v2913 = vld [vmem:[%s2912] sm:$0xf]
    %v2914 = vld [vmem:[%s2912 + $0x4] sm:$0xf]
    %v2915 = vld [vmem:[%s2912 + $0x8] sm:$0xf]
    %v2916 = vld [vmem:[%s2912 + $0xc] sm:$0xf]
    %v2917 = vld [vmem:[%s2912 + $0x10] sm:$0xf]
    %v2918 = vld [vmem:[%s2912 + $0x14] sm:$0xf]
    %v2919 = vld [vmem:[%s2912 + $0x18] sm:$0xf]
    %v2920 = vld [vmem:[%s2912 + $0x1c] sm:$0xf]
    %v2921 = vld [vmem:[%s2912 + $0x20] sm:$0xf]
    %v2922 = vld [vmem:[%s2912 + $0x24] sm:$0xf]
    %v2923 = vld [vmem:[%s2912 + $0x28] sm:$0xf]
    %v2924 = vld [vmem:[%s2912 + $0x2c] sm:$0xf]
    %v2925 = vld [vmem:[%s2912 + $0x30] sm:$0xf]
    %v2926 = vld [vmem:[%s2912 + $0x34] sm:$0xf]
    %v2927 = vld [vmem:[%s2912 + $0x38] sm:$0xf]
    %v2928 = vld [vmem:[%s2912 + $0x3c] sm:$0xf]
    %v2945 = vunpack.c.l.b16 %v2913
    %v2946 = vunpack.c.l.b16 %v2914
    %v2947 = vunpack.c.l.b16 %v2915
    %v2948 = vunpack.c.l.b16 %v2916
    %v2949 = vunpack.c.l.b16 %v2917
    %v2950 = vunpack.c.l.b16 %v2918
    %v2951 = vunpack.c.l.b16 %v2919
    %v2952 = vunpack.c.l.b16 %v2920
    %v2953 = vunpack.c.l.b16 %v2921
    %v2954 = vunpack.c.l.b16 %v2922
    %v2955 = vunpack.c.l.b16 %v2923
    %v2956 = vunpack.c.l.b16 %v2924
    %v2957 = vunpack.c.l.b16 %v2925
    %v2958 = vunpack.c.l.b16 %v2926
    %v2959 = vunpack.c.l.b16 %v2927
    %v2960 = vunpack.c.l.b16 %v2928
    %v2961 = vpack.c.b16 %v2946, %v2945
    %v2962 = vpack.c.b16 %v2948, %v2947
    %v2963 = vpack.c.b16 %v2950, %v2949
    %v2964 = vpack.c.b16 %v2952, %v2951
    %v2965 = vpack.c.b16 %v2954, %v2953
    %v2966 = vpack.c.b16 %v2956, %v2955
    %v2967 = vpack.c.b16 %v2958, %v2957
    %v2968 = vpack.c.b16 %v2960, %v2959
    %2977 = vmatprep.subr.bf16.mxu0 0
    %2978 = vmatpush1.bf16.msra.mxu0 %v2961
    %2979 = vmatprep.subr.bf16.mxu0 0
    %2980 = vmatpush1.bf16.msra.mxu0 %v2962
    %2981 = vmatprep.subr.bf16.mxu0 0
    %2982 = vmatpush1.bf16.msra.mxu0 %v2963
    %2983 = vmatprep.subr.bf16.mxu0 0
    %2984 = vmatpush1.bf16.msra.mxu0 %v2964
    %2985 = vmatprep.subr.bf16.mxu0 0
    %2986 = vmatpush1.bf16.msra.mxu0 %v2965
    %2987 = vmatprep.subr.bf16.mxu0 0
    %2988 = vmatpush1.bf16.msra.mxu0 %v2966
    %2989 = vmatprep.subr.bf16.mxu0 0
    %2990 = vmatpush1.bf16.msra.mxu0 %v2967
    %2991 = vmatprep.subr.bf16.mxu0 0
    %2992 = vmatpush1.bf16.msra.mxu0 %v2968
    %2993 = vmatprep.subr.bf16.mxu0 0
    %2994 = vmatpush1.bf16.msra.mxu0 0
    %2995 = vmatprep.subr.bf16.mxu0 0
    %2996 = vmatpush1.bf16.msra.mxu0 0
    %2997 = vmatprep.subr.bf16.mxu0 0
    %2998 = vmatpush1.bf16.msra.mxu0 0
    %2999 = vmatprep.subr.bf16.mxu0 0
    %3000 = vmatpush1.bf16.msra.mxu0 0
    %3001 = vmatprep.subr.bf16.mxu0 0
    %3002 = vmatpush1.bf16.msra.mxu0 0
    %3003 = vmatprep.subr.bf16.mxu0 0
    %3004 = vmatpush1.bf16.msra.mxu0 0
    %3005 = vmatprep.subr.bf16.mxu0 0
    %3006 = vmatpush1.bf16.msra.mxu0 0
    %3007 = vmatprep.subr.bf16.mxu0 0
    %3008 = vmatpush1.bf16.msra.mxu0 0
    %3009 = vmatprep.mubr.bf16.mxu0 0
    %3010 = vmatmul.mubr.bf16.gmra.mrb[0].mxu0 %v2911
    %v3011 = vpop.f32.mrb[0].mxu0
    %v3012 = vadd.f32 0.0, %v3011
    %v3013 = vpop.f32.mrb[0].mxu0
    %v3014 = vpop.f32.mrb[0].mxu0
    %v3015 = vadd.f32 0.0, %v3014
    %v3016 = vpop.f32.mrb[0].mxu0
    %3017 = vdwg.mxu0
    %v3034 = vunpack.c.l.b16 %v2893
    %v3035 = vunpack.c.l.b16 %v2894
    %v3036 = vunpack.c.l.b16 %v2895
    %v3037 = vunpack.c.l.b16 %v2896
    %v3038 = vunpack.c.l.b16 %v2897
    %v3039 = vunpack.c.l.b16 %v2898
    %v3040 = vunpack.c.l.b16 %v2899
    %v3041 = vunpack.c.l.b16 %v2900
    %v3042 = vunpack.c.l.b16 %v2901
    %v3043 = vunpack.c.l.b16 %v2902
    %v3044 = vunpack.c.l.b16 %v2903
    %v3045 = vunpack.c.l.b16 %v2904
    %v3046 = vunpack.c.l.b16 %v2905
    %v3047 = vunpack.c.l.b16 %v2906
    %v3048 = vunpack.c.l.b16 %v2907
    %v3049 = vunpack.c.l.b16 %v2908
    %v3050 = vpack.c.b16 %v3035, %v3034
    %v3051 = vpack.c.b16 %v3037, %v3036
    %v3052 = vpack.c.b16 %v3039, %v3038
    %v3053 = vpack.c.b16 %v3041, %v3040
    %v3054 = vpack.c.b16 %v3043, %v3042
    %v3055 = vpack.c.b16 %v3045, %v3044
    %v3056 = vpack.c.b16 %v3047, %v3046
    %v3057 = vpack.c.b16 %v3049, %v3048
    %3066 = vmatprep.subr.bf16.mxu0 0
    %3067 = vmatpush1.bf16.msra.mxu0 %v3050
    %3068 = vmatprep.subr.bf16.mxu0 0
    %3069 = vmatpush1.bf16.msra.mxu0 %v3051
    %3070 = vmatprep.subr.bf16.mxu0 0
    %3071 = vmatpush1.bf16.msra.mxu0 %v3052
    %3072 = vmatprep.subr.bf16.mxu0 0
    %3073 = vmatpush1.bf16.msra.mxu0 %v3053
    %3074 = vmatprep.subr.bf16.mxu0 0
    %3075 = vmatpush1.bf16.msra.mxu0 %v3054
    %3076 = vmatprep.subr.bf16.mxu0 0
    %3077 = vmatpush1.bf16.msra.mxu0 %v3055
    %3078 = vmatprep.subr.bf16.mxu0 0
    %3079 = vmatpush1.bf16.msra.mxu0 %v3056
    %3080 = vmatprep.subr.bf16.mxu0 0
    %3081 = vmatpush1.bf16.msra.mxu0 %v3057
    %3082 = vmatprep.subr.bf16.mxu0 0
    %3083 = vmatpush1.bf16.msra.mxu0 0
    %3084 = vmatprep.subr.bf16.mxu0 0
    %3085 = vmatpush1.bf16.msra.mxu0 0
    %3086 = vmatprep.subr.bf16.mxu0 0
    %3087 = vmatpush1.bf16.msra.mxu0 0
    %3088 = vmatprep.subr.bf16.mxu0 0
    %3089 = vmatpush1.bf16.msra.mxu0 0
    %3090 = vmatprep.subr.bf16.mxu0 0
    %3091 = vmatpush1.bf16.msra.mxu0 0
    %3092 = vmatprep.subr.bf16.mxu0 0
    %3093 = vmatpush1.bf16.msra.mxu0 0
    %3094 = vmatprep.subr.bf16.mxu0 0
    %3095 = vmatpush1.bf16.msra.mxu0 0
    %3096 = vmatprep.subr.bf16.mxu0 0
    %3097 = vmatpush1.bf16.msra.mxu0 0
    %3098 = vmatprep.mubr.bf16.mxu0 0
    %3099 = vmatmul.mubr.bf16.gmra.mrb[0].mxu0 %v2892
    %v3100 = vpop.f32.mrb[0].mxu0
    %v3101 = vadd.f32 %v3012, %v3100
    %v3102 = vpop.f32.mrb[0].mxu0
    %v3103 = vpop.f32.mrb[0].mxu0
    %v3104 = vadd.f32 %v3015, %v3103
    %v3105 = vpop.f32.mrb[0].mxu0
    %3106 = vdwg.mxu0
    %v3107 = vld [vmem:[#allocation2 + $0x2] sm:$0xff]
    %v3108 = vld [vmem:[#allocation2 + $0xa] sm:$0xf]
    %v3109 = vpack.c.bf16 %v3108, %v3107
    %s3110 = scalar_lea.vmem %s45, 128
    %v3111 = vld [vmem:[%s3110] sm:$0xf]
    %v3112 = vld [vmem:[%s3110 + $0x4] sm:$0xf]
    %v3113 = vld [vmem:[%s3110 + $0x8] sm:$0xf]
    %v3114 = vld [vmem:[%s3110 + $0xc] sm:$0xf]
    %v3115 = vld [vmem:[%s3110 + $0x10] sm:$0xf]
    %v3116 = vld [vmem:[%s3110 + $0x14] sm:$0xf]
    %v3117 = vld [vmem:[%s3110 + $0x18] sm:$0xf]
    %v3118 = vld [vmem:[%s3110 + $0x1c] sm:$0xf]
    %v3119 = vld [vmem:[%s3110 + $0x20] sm:$0xf]
    %v3120 = vld [vmem:[%s3110 + $0x24] sm:$0xf]
    %v3121 = vld [vmem:[%s3110 + $0x28] sm:$0xf]
    %v3122 = vld [vmem:[%s3110 + $0x2c] sm:$0xf]
    %v3123 = vld [vmem:[%s3110 + $0x30] sm:$0xf]
    %v3124 = vld [vmem:[%s3110 + $0x34] sm:$0xf]
    %v3125 = vld [vmem:[%s3110 + $0x38] sm:$0xf]
    %v3126 = vld [vmem:[%s3110 + $0x3c] sm:$0xf]
    %v3143 = vunpack.c.l.b16 %v3111
    %v3144 = vunpack.c.l.b16 %v3112
    %v3145 = vunpack.c.l.b16 %v3113
    %v3146 = vunpack.c.l.b16 %v3114
    %v3147 = vunpack.c.l.b16 %v3115
    %v3148 = vunpack.c.l.b16 %v3116
    %v3149 = vunpack.c.l.b16 %v3117
    %v3150 = vunpack.c.l.b16 %v3118
    %v3151 = vunpack.c.l.b16 %v3119
    %v3152 = vunpack.c.l.b16 %v3120
    %v3153 = vunpack.c.l.b16 %v3121
    %v3154 = vunpack.c.l.b16 %v3122
    %v3155 = vunpack.c.l.b16 %v3123
    %v3156 = vunpack.c.l.b16 %v3124
    %v3157 = vunpack.c.l.b16 %v3125
    %v3158 = vunpack.c.l.b16 %v3126
    %v3159 = vpack.c.b16 %v3144, %v3143
    %v3160 = vpack.c.b16 %v3146, %v3145
    %v3161 = vpack.c.b16 %v3148, %v3147
    %v3162 = vpack.c.b16 %v3150, %v3149
    %v3163 = vpack.c.b16 %v3152, %v3151
    %v3164 = vpack.c.b16 %v3154, %v3153
    %v3165 = vpack.c.b16 %v3156, %v3155
    %v3166 = vpack.c.b16 %v3158, %v3157
    %3175 = vmatprep.subr.bf16.mxu0 0
    %3176 = vmatpush1.bf16.msra.mxu0 %v3159
    %3177 = vmatprep.subr.bf16.mxu0 0
    %3178 = vmatpush1.bf16.msra.mxu0 %v3160
    %3179 = vmatprep.subr.bf16.mxu0 0
    %3180 = vmatpush1.bf16.msra.mxu0 %v3161
    %3181 = vmatprep.subr.bf16.mxu0 0
    %3182 = vmatpush1.bf16.msra.mxu0 %v3162
    %3183 = vmatprep.subr.bf16.mxu0 0
    %3184 = vmatpush1.bf16.msra.mxu0 %v3163
    %3185 = vmatprep.subr.bf16.mxu0 0
    %3186 = vmatpush1.bf16.msra.mxu0 %v3164
    %3187 = vmatprep.subr.bf16.mxu0 0
    %3188 = vmatpush1.bf16.msra.mxu0 %v3165
    %3189 = vmatprep.subr.bf16.mxu0 0
    %3190 = vmatpush1.bf16.msra.mxu0 %v3166
    %3191 = vmatprep.subr.bf16.mxu0 0
    %3192 = vmatpush1.bf16.msra.mxu0 0
    %3193 = vmatprep.subr.bf16.mxu0 0
    %3194 = vmatpush1.bf16.msra.mxu0 0
    %3195 = vmatprep.subr.bf16.mxu0 0
    %3196 = vmatpush1.bf16.msra.mxu0 0
    %3197 = vmatprep.subr.bf16.mxu0 0
    %3198 = vmatpush1.bf16.msra.mxu0 0
    %3199 = vmatprep.subr.bf16.mxu0 0
    %3200 = vmatpush1.bf16.msra.mxu0 0
    %3201 = vmatprep.subr.bf16.mxu0 0
    %3202 = vmatpush1.bf16.msra.mxu0 0
    %3203 = vmatprep.subr.bf16.mxu0 0
    %3204 = vmatpush1.bf16.msra.mxu0 0
    %3205 = vmatprep.subr.bf16.mxu0 0
    %3206 = vmatpush1.bf16.msra.mxu0 0
    %3207 = vmatprep.mubr.bf16.mxu0 0
    %3208 = vmatmul.mubr.bf16.gmra.mrb[0].mxu0 %v3109
    %v3209 = vpop.f32.mrb[0].mxu0
    %v3210 = vadd.f32 0.0, %v3209
    %v3211 = vpop.f32.mrb[0].mxu0
    %v3212 = vpop.f32.mrb[0].mxu0
    %v3213 = vadd.f32 0.0, %v3212
    %v3214 = vpop.f32.mrb[0].mxu0
    %3215 = vdwg.mxu0
    %v3216 = vadd.f32 %v3101, %v3210
    %v3217 = vadd.f32 %v3104, %v3213
    %v3219 = vrot.slane %v3217, 4
    %v3221 = vsel %vm2784, %v3216, %v3219
    %v3222 = vrot.slane %v3221, 4
    %v3223 = vadd.f32 %v3221, %v3222
    %v3224 = vrot.slane %v3223, 2
    %v3225 = vadd.f32 %v3223, %v3224
    %v3226 = vrot.slane %v3225, 1
    %v3227 = vadd.f32 %v3225, %v3226
    %v3228 = vmul.f32 %v3221, %v3221
    %v3229 = vrot.slane %v3228, 4
    %v3230 = vadd.f32 %v3228, %v3229
    %v3231 = vrot.slane %v3230, 2
    %v3232 = vadd.f32 %v3230, %v3231
    %v3233 = vrot.slane %v3232, 1
    %v3234 = vadd.f32 %v3232, %v3233
    %3236 = vrot.lane.b32.xlu0 %v3227, 96
    %v3237 = vpop.permute.xlu0 %3236
    %v3239 = vadd.f32 %v3227, %v3237
    %3241 = vrot.lane.b32.xlu0 %v3234, 96
    %v3242 = vpop.permute.xlu0 %3241
    %v3244 = vadd.f32 %v3234, %v3242
    %3245 = vrot.lane.b32.xlu0 %v3227, 64
    %v3246 = vpop.permute.xlu0 %3245
    %v3248 = vadd.f32 %v3239, %v3246
    %3249 = vrot.lane.b32.xlu0 %v3234, 64
    %v3250 = vpop.permute.xlu0 %3249
    %v3252 = vadd.f32 %v3244, %v3250
    %3253 = vrot.lane.b32.xlu0 %v3227, 32
    %v3254 = vpop.permute.xlu0 %3253
    %v3256 = vadd.f32 %v3248, %v3254
    %3257 = vrot.lane.b32.xlu0 %v3234, 32
    %v3258 = vpop.permute.xlu0 %3257
    %v3260 = vadd.f32 %v3252, %v3258
    %v3261 = vmul.f32 %v3256, %v2825
    %v3262 = vmul.f32 %v3260, %v2825
    %v3263 = vmul.f32 %v3261, %v3261
    %v3264 = vsub.f32 %v3262, %v3263
    %v3265 = vmax.f32 %v3264, 0.0
    %v3266 = vld [vmem:[%s47] sm:$0x1]
    %v3267 = vadd.f32 %v3265, 1e-05
    %v3268 = vrsqrt.pop %v3267
    %v3269 = vmul.f32 %v3266, %v3268
    %v3270 = vld [vmem:[%s49] sm:$0x1]
    %v3271 = vmul.f32 %v3261, %v3269
    %v3272 = vsub.f32 %v3270, %v3271
    %v3274 = vlaneseq
    %v3275 = vshrl.u32 %v3274, 7
    %v3276 = vsub.s32 0, %v3275
    %v3277 = vrot.slane %v3269, %v3276
    %3278 = vrot.lane.b32.xlu0 %v3277, 32
    %v3279 = vpop.permute.xlu0 %3278
    %3281 = vrot.lane.b32.xlu0 %v3277, 64
    %v3282 = vpop.permute.xlu0 %3281
    %3284 = vrot.lane.b32.xlu0 %v3277, 96
    %v3285 = vpop.permute.xlu0 %3284
    %v3287 = vsel %vm1214, %v3269, %v3279
    %v3288 = vsel %vm806, %v3287, %v3282
    %v3289 = vsel %vm2854, %v3288, %v3285
    %v3291 = vlaneseq
    %v3292 = vshrl.u32 %v3291, 7
    %v3293 = vsub.s32 0, %v3292
    %v3294 = vrot.slane %v3272, %v3293
    %3295 = vrot.lane.b32.xlu0 %v3294, 32
    %v3296 = vpop.permute.xlu0 %3295
    %3298 = vrot.lane.b32.xlu0 %v3294, 64
    %v3299 = vpop.permute.xlu0 %3298
    %3301 = vrot.lane.b32.xlu0 %v3294, 96
    %v3302 = vpop.permute.xlu0 %3301
    %v3304 = vsel %vm1214, %v3272, %v3296
    %v3305 = vsel %vm806, %v3304, %v3299
    %v3306 = vsel %vm2854, %v3305, %v3302
    %v3307 = vlaneseq
    %v3308 = vshrl.u32 %v3307, 7
    %v3309 = vsub.s32 0, %v3308
    %v3310 = vrot.slane %v3289, %v3309
    %v3311 = vmul.f32 %v3221, %v3310
    %v3312 = vlaneseq
    %v3313 = vshrl.u32 %v3312, 7
    %v3314 = vsub.s32 0, %v3313
    %v3315 = vrot.slane %v3306, %v3314
    %v3316 = vadd.f32 %v3311, %v3315
    %v3317 = vmax.f32 %v3316, 0.0
    %v3318 = vld [vmem:[#allocation29] sm:$0xf]
    %vm3319 = vcmask 64512
    %v3321 = vsel %vm3319, %v3318, 0
    %3323 = vmatprep.subr.mxu0 0.0
    %3324 = vmatpush1.msra.mxu0 %v3317
    %3325 = vmatprep.subr.mxu0 0.0
    %3326 = vmatpush1.msra.mxu0 0.0
    %3327 = vmatprep.subr.mxu0 0.0
    %3328 = vmatpush1.msra.mxu0 0.0
    %3329 = vmatprep.subr.mxu0 0.0
    %3330 = vmatpush1.msra.mxu0 0.0
    %3331 = vmatprep.subr.mxu0 0.0
    %3332 = vmatpush1.msra.mxu0 0.0
    %3333 = vmatprep.subr.mxu0 0.0
    %3334 = vmatpush1.msra.mxu0 0.0
    %3335 = vmatprep.subr.mxu0 0.0
    %3336 = vmatpush1.msra.mxu0 0.0
    %3337 = vmatprep.subr.mxu0 0.0
    %3338 = vmatpush1.msra.mxu0 0.0
    %3339 = vmatprep.subr.mxu0 0.0
    %3340 = vmatpush1.msra.mxu0 0.0
    %3341 = vmatprep.subr.mxu0 0.0
    %3342 = vmatpush1.msra.mxu0 0.0
    %3343 = vmatprep.subr.mxu0 0.0
    %3344 = vmatpush1.msra.mxu0 0.0
    %3345 = vmatprep.subr.mxu0 0.0
    %3346 = vmatpush1.msra.mxu0 0.0
    %3347 = vmatprep.subr.mxu0 0.0
    %3348 = vmatpush1.msra.mxu0 0.0
    %3349 = vmatprep.subr.mxu0 0.0
    %3350 = vmatpush1.msra.mxu0 0.0
    %3351 = vmatprep.subr.mxu0 0.0
    %3352 = vmatpush1.msra.mxu0 0.0
    %3353 = vmatprep.subr.mxu0 0.0
    %3354 = vmatpush1.msra.mxu0 0.0
    %3355 = vmatprep.subr.mxu0 0.0
    %3356 = vmatpush1.msra.mxu0 0.0
    %3357 = vmatprep.subr.mxu0 0.0
    %3358 = vmatpush1.msra.mxu0 0.0
    %3359 = vmatprep.subr.mxu0 0.0
    %3360 = vmatpush1.msra.mxu0 0.0
    %3361 = vmatprep.subr.mxu0 0.0
    %3362 = vmatpush1.msra.mxu0 0.0
    %3363 = vmatprep.subr.mxu0 0.0
    %3364 = vmatpush1.msra.mxu0 0.0
    %3365 = vmatprep.subr.mxu0 0.0
    %3366 = vmatpush1.msra.mxu0 0.0
    %3367 = vmatprep.subr.mxu0 0.0
    %3368 = vmatpush1.msra.mxu0 0.0
    %3369 = vmatprep.subr.mxu0 0.0
    %3370 = vmatpush1.msra.mxu0 0.0
    %3371 = vmatprep.subr.mxu0 0.0
    %3372 = vmatpush1.msra.mxu0 0.0
    %3373 = vmatprep.subr.mxu0 0.0
    %3374 = vmatpush1.msra.mxu0 0.0
    %3375 = vmatprep.subr.mxu0 0.0
    %3376 = vmatpush1.msra.mxu0 0.0
    %3377 = vmatprep.subr.mxu0 0.0
    %3378 = vmatpush1.msra.mxu0 0.0
    %3379 = vmatprep.subr.mxu0 0.0
    %3380 = vmatpush1.msra.mxu0 0.0
    %3381 = vmatprep.subr.mxu0 0.0
    %3382 = vmatpush1.msra.mxu0 0.0
    %3383 = vmatprep.subr.mxu0 0.0
    %3384 = vmatpush1.msra.mxu0 0.0
    %3385 = vmatprep.subr.mxu0 0.0
    %3386 = vmatpush1.msra.mxu0 0.0
    %3387 = vmatprep.mubr.f32.mxu0 0.0
    %3388 = vmatmul.mubr.f32.gmra.mrb[0].mxu0 %v3321
    %v3389 = vpop.f32.mrb[0].mxu0
    %v3390 = vadd.f32 0.0, %v3389
    %v3391 = vpop.f32.mrb[0].mxu0
    %3392 = vdwg.mxu0
    %v3393 = vld [vmem:[%s53] sm:$0xf]
    %v3395 = vsel %vm3319, %v3393, 0
    %3397 = vmatprep.subr.mxu0 0.0
    %3398 = vmatpush1.msra.mxu0 %v3317
    %3399 = vmatprep.subr.mxu0 0.0
    %3400 = vmatpush1.msra.mxu0 0.0
    %3401 = vmatprep.subr.mxu0 0.0
    %3402 = vmatpush1.msra.mxu0 0.0
    %3403 = vmatprep.subr.mxu0 0.0
    %3404 = vmatpush1.msra.mxu0 0.0
    %3405 = vmatprep.subr.mxu0 0.0
    %3406 = vmatpush1.msra.mxu0 0.0
    %3407 = vmatprep.subr.mxu0 0.0
    %3408 = vmatpush1.msra.mxu0 0.0
    %3409 = vmatprep.subr.mxu0 0.0
    %3410 = vmatpush1.msra.mxu0 0.0
    %3411 = vmatprep.subr.mxu0 0.0
    %3412 = vmatpush1.msra.mxu0 0.0
    %3413 = vmatprep.subr.mxu0 0.0
    %3414 = vmatpush1.msra.mxu0 0.0
    %3415 = vmatprep.subr.mxu0 0.0
    %3416 = vmatpush1.msra.mxu0 0.0
    %3417 = vmatprep.subr.mxu0 0.0
    %3418 = vmatpush1.msra.mxu0 0.0
    %3419 = vmatprep.subr.mxu0 0.0
    %3420 = vmatpush1.msra.mxu0 0.0
    %3421 = vmatprep.subr.mxu0 0.0
    %3422 = vmatpush1.msra.mxu0 0.0
    %3423 = vmatprep.subr.mxu0 0.0
    %3424 = vmatpush1.msra.mxu0 0.0
    %3425 = vmatprep.subr.mxu0 0.0
    %3426 = vmatpush1.msra.mxu0 0.0
    %3427 = vmatprep.subr.mxu0 0.0
    %3428 = vmatpush1.msra.mxu0 0.0
    %3429 = vmatprep.subr.mxu0 0.0
    %3430 = vmatpush1.msra.mxu0 0.0
    %3431 = vmatprep.subr.mxu0 0.0
    %3432 = vmatpush1.msra.mxu0 0.0
    %3433 = vmatprep.subr.mxu0 0.0
    %3434 = vmatpush1.msra.mxu0 0.0
    %3435 = vmatprep.subr.mxu0 0.0
    %3436 = vmatpush1.msra.mxu0 0.0
    %3437 = vmatprep.subr.mxu0 0.0
    %3438 = vmatpush1.msra.mxu0 0.0
    %3439 = vmatprep.subr.mxu0 0.0
    %3440 = vmatpush1.msra.mxu0 0.0
    %3441 = vmatprep.subr.mxu0 0.0
    %3442 = vmatpush1.msra.mxu0 0.0
    %3443 = vmatprep.subr.mxu0 0.0
    %3444 = vmatpush1.msra.mxu0 0.0
    %3445 = vmatprep.subr.mxu0 0.0
    %3446 = vmatpush1.msra.mxu0 0.0
    %3447 = vmatprep.subr.mxu0 0.0
    %3448 = vmatpush1.msra.mxu0 0.0
    %3449 = vmatprep.subr.mxu0 0.0
    %3450 = vmatpush1.msra.mxu0 0.0
    %3451 = vmatprep.subr.mxu0 0.0
    %3452 = vmatpush1.msra.mxu0 0.0
    %3453 = vmatprep.subr.mxu0 0.0
    %3454 = vmatpush1.msra.mxu0 0.0
    %3455 = vmatprep.subr.mxu0 0.0
    %3456 = vmatpush1.msra.mxu0 0.0
    %3457 = vmatprep.subr.mxu0 0.0
    %3458 = vmatpush1.msra.mxu0 0.0
    %3459 = vmatprep.subr.mxu0 0.0
    %3460 = vmatpush1.msra.mxu0 0.0
    %3461 = vmatprep.mubr.f32.mxu0 0.0
    %3462 = vmatmul.mubr.f32.gmra.mrb[0].mxu0 %v3395
    %v3463 = vpop.f32.mrb[0].mxu0
    %v3464 = vadd.f32 0.0, %v3463
    %v3465 = vpop.f32.mrb[0].mxu0
    %3466 = vdwg.mxu0
    %v3467 = vmax.f32 %v3390, %v3464
    %3468 = vst [vmem:[#allocation2] sm:$0x3] %v3467
    %3469 = vst [vmem:[#allocation2 + $0x6] sm:$0xc] %v3467
    %v3470 = vld [vmem:[#allocation2] sm:$0xff]
    %v3471 = vld [vmem:[#allocation2 + $0x8] sm:$0x1]
    %v3472 = vpack.c.bf16 %v3471, %v3470
    %v3473 = vld [vmem:[#allocation31] sm:$0xf]
    %v3474 = vld [vmem:[#allocation31 + $0x4] sm:$0xf]
    %v3475 = vld [vmem:[#allocation31 + $0x8] sm:$0xf]
    %v3476 = vld [vmem:[#allocation31 + $0xc] sm:$0xf]
    %v3477 = vld [vmem:[#allocation31 + $0x10] sm:$0xf]
    %v3478 = vld [vmem:[#allocation31 + $0x14] sm:$0xf]
    %v3479 = vld [vmem:[#allocation31 + $0x18] sm:$0xf]
    %v3480 = vld [vmem:[#allocation31 + $0x1c] sm:$0xf]
    %v3481 = vld [vmem:[#allocation31 + $0x20] sm:$0xf]
    %v3482 = vld [vmem:[#allocation31 + $0x24] sm:$0xf]
    %v3483 = vld [vmem:[#allocation31 + $0x28] sm:$0xf]
    %v3484 = vld [vmem:[#allocation31 + $0x2c] sm:$0xf]
    %v3485 = vld [vmem:[#allocation31 + $0x30] sm:$0xf]
    %v3486 = vld [vmem:[#allocation31 + $0x34] sm:$0xf]
    %v3487 = vld [vmem:[#allocation31 + $0x38] sm:$0xf]
    %v3488 = vld [vmem:[#allocation31 + $0x3c] sm:$0xf]
    %v3489 = vld [vmem:[#allocation2 + $0x1] sm:$0xff]
    %v3490 = vld [vmem:[#allocation2 + $0x9] sm:$0x1]
    %v3491 = vpack.c.bf16 %v3490, %v3489
    %s3492 = scalar_lea.vmem [#allocation31], 64
    %v3493 = vld [vmem:[%s3492] sm:$0xf]
    %v3494 = vld [vmem:[%s3492 + $0x4] sm:$0xf]
    %v3495 = vld [vmem:[%s3492 + $0x8] sm:$0xf]
    %v3496 = vld [vmem:[%s3492 + $0xc] sm:$0xf]
    %v3497 = vld [vmem:[%s3492 + $0x10] sm:$0xf]
    %v3498 = vld [vmem:[%s3492 + $0x14] sm:$0xf]
    %v3499 = vld [vmem:[%s3492 + $0x18] sm:$0xf]
    %v3500 = vld [vmem:[%s3492 + $0x1c] sm:$0xf]
    %v3501 = vld [vmem:[%s3492 + $0x20] sm:$0xf]
    %v3502 = vld [vmem:[%s3492 + $0x24] sm:$0xf]
    %v3503 = vld [vmem:[%s3492 + $0x28] sm:$0xf]
    %v3504 = vld [vmem:[%s3492 + $0x2c] sm:$0xf]
    %v3505 = vld [vmem:[%s3492 + $0x30] sm:$0xf]
    %v3506 = vld [vmem:[%s3492 + $0x34] sm:$0xf]
    %v3507 = vld [vmem:[%s3492 + $0x38] sm:$0xf]
    %v3508 = vld [vmem:[%s3492 + $0x3c] sm:$0xf]
    %v3525 = vunpack.c.l.b16 %v3493
    %v3526 = vunpack.c.l.b16 %v3494
    %v3527 = vunpack.c.l.b16 %v3495
    %v3528 = vunpack.c.l.b16 %v3496
    %v3529 = vunpack.c.l.b16 %v3497
    %v3530 = vunpack.c.l.b16 %v3498
    %v3531 = vunpack.c.l.b16 %v3499
    %v3532 = vunpack.c.l.b16 %v3500
    %v3533 = vunpack.c.l.b16 %v3501
    %v3534 = vunpack.c.l.b16 %v3502
    %v3535 = vunpack.c.l.b16 %v3503
    %v3536 = vunpack.c.l.b16 %v3504
    %v3537 = vunpack.c.l.b16 %v3505
    %v3538 = vunpack.c.l.b16 %v3506
    %v3539 = vunpack.c.l.b16 %v3507
    %v3540 = vunpack.c.l.b16 %v3508
    %v3541 = vpack.c.b16 %v3526, %v3525
    %v3542 = vpack.c.b16 %v3528, %v3527
    %v3543 = vpack.c.b16 %v3530, %v3529
    %v3544 = vpack.c.b16 %v3532, %v3531
    %v3545 = vpack.c.b16 %v3534, %v3533
    %v3546 = vpack.c.b16 %v3536, %v3535
    %v3547 = vpack.c.b16 %v3538, %v3537
    %v3548 = vpack.c.b16 %v3540, %v3539
    %3557 = vmatprep.subr.bf16.mxu0 0
    %3558 = vmatpush1.bf16.msra.mxu0 %v3541
    %3559 = vmatprep.subr.bf16.mxu0 0
    %3560 = vmatpush1.bf16.msra.mxu0 %v3542
    %3561 = vmatprep.subr.bf16.mxu0 0
    %3562 = vmatpush1.bf16.msra.mxu0 %v3543
    %3563 = vmatprep.subr.bf16.mxu0 0
    %3564 = vmatpush1.bf16.msra.mxu0 %v3544
    %3565 = vmatprep.subr.bf16.mxu0 0
    %3566 = vmatpush1.bf16.msra.mxu0 %v3545
    %3567 = vmatprep.subr.bf16.mxu0 0
    %3568 = vmatpush1.bf16.msra.mxu0 %v3546
    %3569 = vmatprep.subr.bf16.mxu0 0
    %3570 = vmatpush1.bf16.msra.mxu0 %v3547
    %3571 = vmatprep.subr.bf16.mxu0 0
    %3572 = vmatpush1.bf16.msra.mxu0 %v3548
    %3573 = vmatprep.subr.bf16.mxu0 0
    %3574 = vmatpush1.bf16.msra.mxu0 0
    %3575 = vmatprep.subr.bf16.mxu0 0
    %3576 = vmatpush1.bf16.msra.mxu0 0
    %3577 = vmatprep.subr.bf16.mxu0 0
    %3578 = vmatpush1.bf16.msra.mxu0 0
    %3579 = vmatprep.subr.bf16.mxu0 0
    %3580 = vmatpush1.bf16.msra.mxu0 0
    %3581 = vmatprep.subr.bf16.mxu0 0
    %3582 = vmatpush1.bf16.msra.mxu0 0
    %3583 = vmatprep.subr.bf16.mxu0 0
    %3584 = vmatpush1.bf16.msra.mxu0 0
    %3585 = vmatprep.subr.bf16.mxu0 0
    %3586 = vmatpush1.bf16.msra.mxu0 0
    %3587 = vmatprep.subr.bf16.mxu0 0
    %3588 = vmatpush1.bf16.msra.mxu0 0
    %3589 = vmatprep.mubr.bf16.mxu0 0
    %3590 = vmatmul.mubr.bf16.gmra.mrb[0].mxu0 %v3491
    %v3591 = vpop.f32.mrb[0].mxu0
    %v3592 = vadd.f32 0.0, %v3591
    %v3593 = vpop.f32.mrb[0].mxu0
    %v3594 = vpop.f32.mrb[0].mxu0
    %v3595 = vadd.f32 0.0, %v3594
    %v3596 = vpop.f32.mrb[0].mxu0
    %3597 = vdwg.mxu0
    %v3614 = vunpack.c.l.b16 %v3473
    %v3615 = vunpack.c.l.b16 %v3474
    %v3616 = vunpack.c.l.b16 %v3475
    %v3617 = vunpack.c.l.b16 %v3476
    %v3618 = vunpack.c.l.b16 %v3477
    %v3619 = vunpack.c.l.b16 %v3478
    %v3620 = vunpack.c.l.b16 %v3479
    %v3621 = vunpack.c.l.b16 %v3480
    %v3622 = vunpack.c.l.b16 %v3481
    %v3623 = vunpack.c.l.b16 %v3482
    %v3624 = vunpack.c.l.b16 %v3483
    %v3625 = vunpack.c.l.b16 %v3484
    %v3626 = vunpack.c.l.b16 %v3485
    %v3627 = vunpack.c.l.b16 %v3486
    %v3628 = vunpack.c.l.b16 %v3487
    %v3629 = vunpack.c.l.b16 %v3488
    %v3630 = vpack.c.b16 %v3615, %v3614
    %v3631 = vpack.c.b16 %v3617, %v3616
    %v3632 = vpack.c.b16 %v3619, %v3618
    %v3633 = vpack.c.b16 %v3621, %v3620
    %v3634 = vpack.c.b16 %v3623, %v3622
    %v3635 = vpack.c.b16 %v3625, %v3624
    %v3636 = vpack.c.b16 %v3627, %v3626
    %v3637 = vpack.c.b16 %v3629, %v3628
    %3646 = vmatprep.subr.bf16.mxu0 0
    %3647 = vmatpush1.bf16.msra.mxu0 %v3630
    %3648 = vmatprep.subr.bf16.mxu0 0
    %3649 = vmatpush1.bf16.msra.mxu0 %v3631
    %3650 = vmatprep.subr.bf16.mxu0 0
    %3651 = vmatpush1.bf16.msra.mxu0 %v3632
    %3652 = vmatprep.subr.bf16.mxu0 0
    %3653 = vmatpush1.bf16.msra.mxu0 %v3633
    %3654 = vmatprep.subr.bf16.mxu0 0
    %3655 = vmatpush1.bf16.msra.mxu0 %v3634
    %3656 = vmatprep.subr.bf16.mxu0 0
    %3657 = vmatpush1.bf16.msra.mxu0 %v3635
    %3658 = vmatprep.subr.bf16.mxu0 0
    %3659 = vmatpush1.bf16.msra.mxu0 %v3636
    %3660 = vmatprep.subr.bf16.mxu0 0
    %3661 = vmatpush1.bf16.msra.mxu0 %v3637
    %3662 = vmatprep.subr.bf16.mxu0 0
    %3663 = vmatpush1.bf16.msra.mxu0 0
    %3664 = vmatprep.subr.bf16.mxu0 0
    %3665 = vmatpush1.bf16.msra.mxu0 0
    %3666 = vmatprep.subr.bf16.mxu0 0
    %3667 = vmatpush1.bf16.msra.mxu0 0
    %3668 = vmatprep.subr.bf16.mxu0 0
    %3669 = vmatpush1.bf16.msra.mxu0 0
    %3670 = vmatprep.subr.bf16.mxu0 0
    %3671 = vmatpush1.bf16.msra.mxu0 0
    %3672 = vmatprep.subr.bf16.mxu0 0
    %3673 = vmatpush1.bf16.msra.mxu0 0
    %3674 = vmatprep.subr.bf16.mxu0 0
    %3675 = vmatpush1.bf16.msra.mxu0 0
    %3676 = vmatprep.subr.bf16.mxu0 0
    %3677 = vmatpush1.bf16.msra.mxu0 0
    %3678 = vmatprep.mubr.bf16.mxu0 0
    %3679 = vmatmul.mubr.bf16.gmra.mrb[0].mxu0 %v3472
    %v3680 = vpop.f32.mrb[0].mxu0
    %v3681 = vadd.f32 %v3592, %v3680
    %v3682 = vpop.f32.mrb[0].mxu0
    %v3683 = vpop.f32.mrb[0].mxu0
    %v3684 = vadd.f32 %v3595, %v3683
    %v3685 = vpop.f32.mrb[0].mxu0
    %3686 = vdwg.mxu0
    %v3688 = vrot.slane %v3684, 7
    %vm3690 = vcmask 1040384
    %v3691 = vsel %vm3690, %v3681, %v3688
    %v3692 = vld [vmem:[#allocation32] sm:$0x1]
    %v3694 = vlaneseq
    %v3695 = vshrl.u32 %v3694, 7
    %v3696 = vsub.s32 0, %v3695
    %v3697 = vrot.slane %v3692, %v3696
    %v3699 = vadd.f32 %v3691, %v3697
    %v3700 = vmax.f32 %v3699, 0.0
    %v3701 = vld [vmem:[#allocation34] sm:$0xff]
    %v3702 = vld [vmem:[#allocation34 + $0x8] sm:$0xff]
    %v3703 = vld [vmem:[#allocation34 + $0x10] sm:$0xff]
    %v3704 = vld [vmem:[#allocation34 + $0x18] sm:$0xff]
    %v3705 = vld [vmem:[#allocation34 + $0x20] sm:$0xff]
    %v3706 = vld [vmem:[#allocation34 + $0x28] sm:$0xff]
    %v3707 = vld [vmem:[#allocation34 + $0x30] sm:$0xff]
    %v3708 = vld [vmem:[#allocation34 + $0x38] sm:$0xff]
    %v3709 = vld [vmem:[#allocation34 + $0x40] sm:$0xff]
    %v3710 = vld [vmem:[#allocation34 + $0x48] sm:$0xff]
    %v3711 = vld [vmem:[#allocation34 + $0x50] sm:$0xff]
    %v3712 = vld [vmem:[#allocation34 + $0x58] sm:$0xff]
    %v3713 = vld [vmem:[#allocation35] sm:$0x1]
    %v3715 = vlaneseq
    %v3716 = vshrl.u32 %v3715, 7
    %v3717 = vsub.s32 0, %v3716
    %v3718 = vrot.slane %v3713, %v3717
    %v3721 = vsel %vm2854, %v3700, 0
    %3723 = vmatprep.subr.mxu0 0.0
    %3724 = vmatpush1.msra.mxu0 %v3701
    %3725 = vmatprep.subr.mxu0 0.0
    %3726 = vmatpush1.msra.mxu0 %v3702
    %3727 = vmatprep.subr.mxu0 0.0
    %3728 = vmatpush1.msra.mxu0 %v3703
    %3729 = vmatprep.subr.mxu0 0.0
    %3730 = vmatpush1.msra.mxu0 %v3704
    %3731 = vmatprep.subr.mxu0 0.0
    %3732 = vmatpush1.msra.mxu0 %v3705
    %3733 = vmatprep.subr.mxu0 0.0
    %3734 = vmatpush1.msra.mxu0 %v3706
    %3735 = vmatprep.subr.mxu0 0.0
    %3736 = vmatpush1.msra.mxu0 %v3707
    %3737 = vmatprep.subr.mxu0 0.0
    %3738 = vmatpush1.msra.mxu0 %v3708
    %3739 = vmatprep.subr.mxu0 0.0
    %3740 = vmatpush1.msra.mxu0 %v3709
    %3741 = vmatprep.subr.mxu0 0.0
    %3742 = vmatpush1.msra.mxu0 %v3710
    %3743 = vmatprep.subr.mxu0 0.0
    %3744 = vmatpush1.msra.mxu0 %v3711
    %3745 = vmatprep.subr.mxu0 0.0
    %3746 = vmatpush1.msra.mxu0 %v3712
    %3747 = vmatprep.subr.mxu0 0.0
    %3748 = vmatpush1.msra.mxu0 0.0
    %3749 = vmatprep.subr.mxu0 0.0
    %3750 = vmatpush1.msra.mxu0 0.0
    %3751 = vmatprep.subr.mxu0 0.0
    %3752 = vmatpush1.msra.mxu0 0.0
    %3753 = vmatprep.subr.mxu0 0.0
    %3754 = vmatpush1.msra.mxu0 0.0
    %3755 = vmatprep.subr.mxu0 0.0
    %3756 = vmatpush1.msra.mxu0 0.0
    %3757 = vmatprep.subr.mxu0 0.0
    %3758 = vmatpush1.msra.mxu0 0.0
    %3759 = vmatprep.subr.mxu0 0.0
    %3760 = vmatpush1.msra.mxu0 0.0
    %3761 = vmatprep.subr.mxu0 0.0
    %3762 = vmatpush1.msra.mxu0 0.0
    %3763 = vmatprep.subr.mxu0 0.0
    %3764 = vmatpush1.msra.mxu0 0.0
    %3765 = vmatprep.subr.mxu0 0.0
    %3766 = vmatpush1.msra.mxu0 0.0
    %3767 = vmatprep.subr.mxu0 0.0
    %3768 = vmatpush1.msra.mxu0 0.0
    %3769 = vmatprep.subr.mxu0 0.0
    %3770 = vmatpush1.msra.mxu0 0.0
    %3771 = vmatprep.subr.mxu0 0.0
    %3772 = vmatpush1.msra.mxu0 0.0
    %3773 = vmatprep.subr.mxu0 0.0
    %3774 = vmatpush1.msra.mxu0 0.0
    %3775 = vmatprep.subr.mxu0 0.0
    %3776 = vmatpush1.msra.mxu0 0.0
    %3777 = vmatprep.subr.mxu0 0.0
    %3778 = vmatpush1.msra.mxu0 0.0
    %3779 = vmatprep.subr.mxu0 0.0
    %3780 = vmatpush1.msra.mxu0 0.0
    %3781 = vmatprep.subr.mxu0 0.0
    %3782 = vmatpush1.msra.mxu0 0.0
    %3783 = vmatprep.subr.mxu0 0.0
    %3784 = vmatpush1.msra.mxu0 0.0
    %3785 = vmatprep.subr.mxu0 0.0
    %3786 = vmatpush1.msra.mxu0 0.0
    %3787 = vmatprep.mubr.f32.mxu0 0.0
    %3788 = vmatmul.mubr.f32.gmra.mrb[0].mxu0 %v3721
    %v3789 = vpop.f32.mrb[0].mxu0
    %v3790 = vadd.f32 %v3718, %v3789
    %v3791 = vpop.f32.mrb[0].mxu0
    %3792 = vdwg.mxu0
    %3793 = vst [vmem:[%s63] sm:$0x3] %v3790
    // Predicated region
    $region214: #{_forward_jit.1} parent=1 // pred_check
      _
    $region215: #{_forward_jit.1} parent=1 // pred_check_branch
      %3795 = sbr.rel (0) target = $region217
    $region216: #{_forward_jit.1} parent=1 // pred_region
      _
    $region217: #{_forward_jit.1} parent=1 // pred_fallthru
      _
    // Predicated region
    $region218: #{_forward_jit.1} parent=1 // pred_check
      _
    $region219: #{_forward_jit.1} parent=1 // pred_check_branch
      %3797 = sbr.rel (0) target = $region221
    $region220: #{_forward_jit.1} parent=1 // pred_region
      _
    $region221: #{_forward_jit.1} parent=1 // pred_fallthru
      _
    %3798 = vsyncpa [#allocation4], 1
    %3799 = vsyncpa [#allocation6], 1
    %3800 = vsyncpa [#allocation9], 1
    %3801 = vsyncpa [#allocation12], 1
    %3802 = vsyncpa [#allocation15], 1
    %3803 = vsyncpa [#allocation18], 1
    %3804 = vsyncpa [#allocation21], 1
    %3805 = vsyncpa [#allocation24], 1
    %3806 = vsyncpa [#allocation27], 1
    %3807 = vsyncpa [#allocation30], 1
    %3808 = vsyncpa [#allocation33], 1
    %3809 = vsyncpa [#allocation36], 1

</llo_original>
